<compile_context>
chip_gen: v7x
topology: tpu7x:2x2x1
jax: 0.10.0
libtpu: 0.0.40
codegen_flags: <defaults>
</compile_context>

<pallas_src>
import functools

import jax
import jax.numpy as jnp
from jax import lax
from jax.experimental import pallas as pl
from jax.experimental.pallas import tpu as pltpu

GRAY_R, GRAY_G, GRAY_B = 0.2989, 0.587, 0.114  # matches tensor_to_cv2_gray

C_IN = 3       # model input channels
C_MID = 3      # unet stand-in output channels
C_INP_IN = 4   # inpainter stand-in input channels (3 image + 1 mask)
C_OUT = 3      # inpainter stand-in output channels
K = 3          # conv kernel size


def _round_up(v, m):
    return (v + m - 1) // m * m


# ----------------------------------------------------------------------------
# Fused kernel: one grid step = B images packed along the lane axis.
# ----------------------------------------------------------------------------
def _fused_forward_kernel(w1_ref, b1_ref, w2_ref, b2_ref, thr_ref,
                          x_ref, o_ref, scr_ref, *, H, W, B):
    """x_ref:   (1, C_IN, H+2, B*(W+2)) pre-padded, lane-packed input.
       o_ref:   (1, C_OUT, H, B*W)      lane-dense packed output.
       scr_ref: (C_INP_IN, >=H+2, >=B*(W+2)) conv2 staging; per-image zero
                halos rewritten every step (no persistent state)."""
    Wp2 = W + 2
    L = B * Wp2          # packed padded lane width
    Lo = L - 2           # packed conv-output lane width

    # ---- conv1 (unet stand-in): 3x3, 3->3, padding=1 ------------------------
    # Halos are already zero in the pre-padded input, so no staging copy.
    u = [jnp.zeros((H, Lo), jnp.float32) + b1_ref[co] for co in range(C_MID)]
    for ci in range(C_IN):
        for kw in range(K):                       # hoisted lane-direction shift
            slab = x_ref[0, ci, :, kw:kw + Lo]    # (H+2, Lo), one offset load
            for kh in range(K):
                tap = slab[kh:kh + H, :]          # sublane slice of the value
                for co in range(C_MID):
                    w = w1_ref[((co * C_IN + ci) * K + kh) * K + kw]
                    u[co] = u[co] + w * tap

    # ---- gray / difference / relu(diff - learnable_threshold) ---------------
    xin = [x_ref[0, c, 1:1 + H, 1:1 + Lo] for c in range(C_IN)]
    gray_x = GRAY_R * xin[0] + GRAY_G * xin[1] + GRAY_B * xin[2]
    gray_u = GRAY_R * u[0] + GRAY_G * u[1] + GRAY_B * u[2]
    mask = jnp.maximum(gray_x - gray_u - thr_ref[0], 0.0)        # (H, Lo)

    # ---- stage conv2 inputs: unet output + spatially transposed mask --------
    for co in range(C_MID):
        scr_ref[co, 1:1 + H, 1:1 + Lo] = u[co]

    # PyTorch quirk: the inpainter receives the mask spatially transposed.
    # Exact per-image transpose on the MXU (multiplies by 0/1 only); eye is
    # built once per step, outside the per-image loop.
    ri = lax.broadcasted_iota(jnp.int32, (H, H), 0)
    cj = lax.broadcasted_iota(jnp.int32, (H, H), 1)
    eye = (ri == cj).astype(jnp.float32)
    for b in range(B):
        m_b = mask[:, b * Wp2:b * Wp2 + W]                       # (H, W), H == W
        m_b_t = jnp.einsum("ik,jk->ij", eye, m_b,
                           preferred_element_type=jnp.float32,
                           precision=lax.Precision.HIGHEST)      # == m_b.T, exact
        scr_ref[C_MID, 1:1 + H, b * Wp2 + 1:b * Wp2 + 1 + W] = m_b_t

    # Re-zero only the halo rows/columns the conv2 taps actually read
    # (tiny stores -- no full-scratch zero, no one-time-init dependence).
    zrow = jnp.zeros((1, L), jnp.float32)
    zcol = jnp.zeros((H, 1), jnp.float32)
    zgap = jnp.zeros((H, 2), jnp.float32)
    for p in range(C_INP_IN):
        scr_ref[p, 0:1, 0:L] = zrow                       # top halo row
        scr_ref[p, H + 1:H + 2, 0:L] = zrow               # bottom halo row
        scr_ref[p, 1:1 + H, 0:1] = zcol                   # left halo, image 0
        scr_ref[p, 1:1 + H, L - 1:L] = zcol               # right halo, image B-1
        for b in range(B - 1):                            # halos between images
            scr_ref[p, 1:1 + H, b * Wp2 + W + 1:(b + 1) * Wp2 + 1] = zgap

    # ---- conv2 (inpainter stand-in): 3x3, 4->3, padding=1, then tanh --------
    y = [jnp.zeros((H, Lo), jnp.float32) + b2_ref[co] for co in range(C_OUT)]
    for ci in range(C_INP_IN):
        for kw in range(K):                       # hoisted lane-direction shift
            slab = scr_ref[ci, 0:H + 2, kw:kw + Lo]
            for kh in range(K):
                tap = slab[kh:kh + H, :]
                for co in range(C_OUT):
                    w = w2_ref[((co * C_INP_IN + ci) * K + kh) * K + kw]
                    y[co] = y[co] + w * tap

    for co in range(C_OUT):
        yv = jnp.tanh(y[co])
        for b in range(B):                        # drop inter-image gap columns
            o_ref[0, co, :, b * W:(b + 1) * W] = yv[:, b * Wp2:b * Wp2 + W]


# ----------------------------------------------------------------------------
# Glue: nearest-neighbour resize (F.interpolate default mode).
# ----------------------------------------------------------------------------
def nearest_resize_nchw(x, out_h, out_w):
    N, C, H, W = x.shape
    if (H, W) == (out_h, out_w):
        return x
    if out_h % H == 0 and out_w % W == 0:
        sh, sw = out_h // H, out_w // W
        y = jnp.broadcast_to(x[:, :, :, None, :, None], (N, C, H, sh, W, sw))
        return y.reshape(N, C, out_h, out_w)
    rows = (jnp.arange(out_h) * H // out_h).astype(jnp.int32)
    cols = (jnp.arange(out_w) * W // out_w).astype(jnp.int32)
    return x[:, :, rows[:, None], cols[None, :]]


# ----------------------------------------------------------------------------
# Combined_Model.forward
# ----------------------------------------------------------------------------
def combined_model_forward(x, params, *, image_size, lane_pack=None):
    N, C, H, W = x.shape
    assert C == C_IN
    # The (N,1,W,H) mask is concatenated with the (N,3,H,W) image, so the
    # original PyTorch model only works for square inputs.
    assert H == W, "Combined_Model's mask permute quirk requires square inputs"

    if lane_pack is None:
        lane_pack = max(1, 128 // (W + 2))      # aim for ~one full vreg of lanes
    B = max(1, min(lane_pack, N))               # images per grid step
    G = -(-N // B)                              # groups (grid size)
    Npad = G * B
    Wp2 = W + 2
    L = B * Wp2

    w1 = params["unet_w"].astype(jnp.float32).reshape(-1)     # (3*3*3*3,)
    b1 = params["unet_b"].astype(jnp.float32)                  # (3,)
    w2 = params["inp_w"].astype(jnp.float32).reshape(-1)       # (3*4*3*3,)
    b2 = params["inp_b"].astype(jnp.float32)                    # (3,)
    thr = jnp.reshape(params["threshold"], (1,)).astype(jnp.float32)

    # Pre-pad (batch to a multiple of B, plus the 1-pixel spatial halo) and
    # pack B images side-by-side along the lane axis, each with its own halo.
    xp = x
    if Npad != N:
        xp = jnp.pad(xp, ((0, Npad - N), (0, 0), (0, 0), (0, 0)))
    xp = jnp.pad(xp, ((0, 0), (0, 0), (1, 1), (1, 1)))          # (Npad,3,H+2,W+2)
    xp = xp.reshape(G, B, C_IN, H + 2, Wp2)
    xp = jnp.transpose(xp, (0, 2, 3, 1, 4)).reshape(G, C_IN, H + 2, L)

    # Explicit (8,128)-aligned scratch shape + explicit VMEM budget.
    scr_shape = (C_INP_IN, _round_up(H + 2, 8), _round_up(L, 128))
    in_tile = C_IN * _round_up(H + 2, 8) * _round_up(L, 128) * 4
    out_tile = C_OUT * _round_up(H, 8) * _round_up(B * W, 128) * 4
    scr_bytes = scr_shape[0] * scr_shape[1] * scr_shape[2] * 4
    vmem_limit = int(min(100 * 2**20,
                         max(8 * 2**20, 4 * (2 * in_tile + 2 * out_tile + scr_bytes))))

    smem = pl.BlockSpec(memory_space=pltpu.MemorySpace.SMEM)
    kernel = functools.partial(_fused_forward_kernel, H=H, W=W, B=B)
    out_pk = pl.pallas_call(
        kernel,
        out_shape=jax.ShapeDtypeStruct((G, C_OUT, H, B * W), jnp.float32),
        grid=(G,),
        in_specs=[smem, smem, smem, smem, smem,
                  pl.BlockSpec((1, C_IN, H + 2, L), lambda g: (g, 0, 0, 0))],
        out_specs=pl.BlockSpec((1, C_OUT, H, B * W), lambda g: (g, 0, 0, 0)),
        scratch_shapes=[pltpu.VMEM(scr_shape, jnp.float32)],
        compiler_params=pltpu.CompilerParams(
            dimension_semantics=("parallel",),
            vmem_limit_bytes=vmem_limit),
    )(w1, b1, w2, b2, thr, xp)

    # Unpack (G, 3, H, B*W) -> (N, 3, H, W)
    out = out_pk.reshape(G, C_OUT, H, B, W)
    out = jnp.transpose(out, (0, 3, 1, 2, 4)).reshape(Npad, C_OUT, H, W)[:N]

    # F.interpolate(inpainted_output, (image_size, image_size))
    return nearest_resize_nchw(out, image_size, image_size)


# ----------------------------------------------------------------------------
# Pure-JAX reference (for correctness check only).
# ----------------------------------------------------------------------------
def _reference_forward(x, params, image_size):
    dn = ("NCHW", "OIHW", "NCHW")
    hp = lax.Precision.HIGHEST
    u = lax.conv_general_dilated(x, params["unet_w"], (1, 1), ((1, 1), (1, 1)),
                                 dimension_numbers=dn, precision=hp)
    u = u + params["unet_b"][None, :, None, None]
    gray = lambda t: GRAY_R * t[:, 0] + GRAY_G * t[:, 1] + GRAY_B * t[:, 2]
    mask = jnp.maximum(gray(x) - gray(u) - params["threshold"], 0.0)  # (N,H,W)
    mask_t = jnp.transpose(mask, (0, 2, 1))[:, None]                  # (N,1,W,H)
    z = jnp.concatenate([u, mask_t], axis=1)
    y = lax.conv_general_dilated(z, params["inp_w"], (1, 1), ((1, 1), (1, 1)),
                                 dimension_numbers=dn, precision=hp)
    y = jnp.tanh(y + params["inp_b"][None, :, None, None])
    return nearest_resize_nchw(y, image_size, image_size)


def init_params(key):
    k1, k2, k3, k4 = jax.random.split(key, 4)
    return {
        # conv weights stored in PyTorch (Cout, Cin, KH, KW) layout
        "unet_w": 0.1 * jax.random.normal(k1, (C_MID, C_IN, K, K), jnp.float32),
        "unet_b": 0.01 * jax.random.normal(k2, (C_MID,), jnp.float32),
        "inp_w": 0.1 * jax.random.normal(k3, (C_OUT, C_INP_IN, K, K), jnp.float32),
        "inp_b": 0.01 * jax.random.normal(k4, (C_OUT,), jnp.float32),
        # nn.Parameter(torch.tensor(0.5))
        "threshold": jnp.float32(0.5),
    }


if __name__ == "__main__":
    IMAGE_SIZE = 16  # options.image_size
    key = jax.random.PRNGKey(0)
    kx, kp = jax.random.split(key)
    x = jax.random.uniform(kx, (2, 3, IMAGE_SIZE, IMAGE_SIZE), jnp.float32)
    params = init_params(kp)

    fwd = jax.jit(functools.partial(combined_model_forward, image_size=IMAGE_SIZE))
    out = jax.block_until_ready(fwd(x, params))

    assert out.shape == (2, 3, IMAGE_SIZE, IMAGE_SIZE), out.shape
    assert out.dtype == jnp.float32
    assert bool(jnp.all(jnp.isfinite(out)))

    ref = _reference_forward(x, params, IMAGE_SIZE)
    max_err = float(jnp.max(jnp.abs(out - ref)))
    assert max_err < 1e-3, f"max abs error vs reference: {max_err}"

    print("KERNEL_OK")
</pallas_src>

<mosaic_0001>
module attributes {stable_mosaic.version = 11 : i64} {
  func.func @_fused_forward_kernel(%arg0: i32, %arg1: memref<81xf32, #tpu.memory_space<smem>>, %arg2: memref<3xf32, #tpu.memory_space<smem>>, %arg3: memref<108xf32, #tpu.memory_space<smem>>, %arg4: memref<3xf32, #tpu.memory_space<smem>>, %arg5: memref<1xf32, #tpu.memory_space<smem>>, %arg6: memref<1x3x18x36xf32, #tpu.memory_space<vmem>>, %arg7: memref<1x3x16x32xf32, #tpu.memory_space<vmem>>, %arg8: memref<4x24x128xf32, #tpu.memory_space<vmem>>) attributes {dimension_semantics = [#tpu.dimension_semantics<parallel>], iteration_bounds = array<i64: 1>, scalar_prefetch = 0 : i64, scratch_operands = 1 : i64, tpu.core_type = #tpu.core_type<tc>, window_params = [{transform_indices = @transform_0, window_bounds = array<i64: 81>}, {transform_indices = @transform_1, window_bounds = array<i64: 3>}, {transform_indices = @transform_2, window_bounds = array<i64: 108>}, {transform_indices = @transform_3, window_bounds = array<i64: 3>}, {transform_indices = @transform_4, window_bounds = array<i64: 1>}, {transform_indices = @transform_5, window_bounds = array<i64: 1, 3, 18, 36>}, {transform_indices = @transform_6, window_bounds = array<i64: 1, 3, 16, 32>}]} {
    %cst = arith.constant 0.000000e+00 : f32
    %0 = vector.broadcast %cst : f32 to vector<16x34xf32>
    %c0 = arith.constant 0 : index
    %1 = memref.load %arg2[%c0] : memref<3xf32, #tpu.memory_space<smem>>
    %2 = vector.broadcast %1 : f32 to vector<16x34xf32>
    %3 = arith.addf %0, %2 : vector<16x34xf32>
    %cst_0 = arith.constant 0.000000e+00 : f32
    %4 = vector.broadcast %cst_0 : f32 to vector<16x34xf32>
    %c1 = arith.constant 1 : index
    %5 = memref.load %arg2[%c1] : memref<3xf32, #tpu.memory_space<smem>>
    %6 = vector.broadcast %5 : f32 to vector<16x34xf32>
    %7 = arith.addf %4, %6 : vector<16x34xf32>
    %cst_1 = arith.constant 0.000000e+00 : f32
    %8 = vector.broadcast %cst_1 : f32 to vector<16x34xf32>
    %c2 = arith.constant 2 : index
    %9 = memref.load %arg2[%c2] : memref<3xf32, #tpu.memory_space<smem>>
    %10 = vector.broadcast %9 : f32 to vector<16x34xf32>
    %11 = arith.addf %8, %10 : vector<16x34xf32>
    %c0_2 = arith.constant 0 : index
    %c0_3 = arith.constant 0 : index
    %c0_4 = arith.constant 0 : index
    %c0_5 = arith.constant 0 : index
    %12 = vector.load %arg6[%c0_2, %c0_3, %c0_4, %c0_5] : memref<1x3x18x36xf32, #tpu.memory_space<vmem>>, vector<1x1x18x34xf32>
    %13 = vector.shape_cast %12 : vector<1x1x18x34xf32> to vector<18x34xf32>
    %14 = vector.extract_strided_slice %13 {offsets = [0, 0], sizes = [16, 34], strides = [1, 1]} : vector<18x34xf32> to vector<16x34xf32>
    %c0_6 = arith.constant 0 : index
    %15 = memref.load %arg1[%c0_6] : memref<81xf32, #tpu.memory_space<smem>>
    %16 = vector.broadcast %15 : f32 to vector<16x34xf32>
    %17 = arith.mulf %16, %14 : vector<16x34xf32>
    %18 = arith.addf %3, %17 : vector<16x34xf32>
    %c27 = arith.constant 27 : index
    %19 = memref.load %arg1[%c27] : memref<81xf32, #tpu.memory_space<smem>>
    %20 = vector.broadcast %19 : f32 to vector<16x34xf32>
    %21 = arith.mulf %20, %14 : vector<16x34xf32>
    %22 = arith.addf %7, %21 : vector<16x34xf32>
    %c54 = arith.constant 54 : index
    %23 = memref.load %arg1[%c54] : memref<81xf32, #tpu.memory_space<smem>>
    %24 = vector.broadcast %23 : f32 to vector<16x34xf32>
    %25 = arith.mulf %24, %14 : vector<16x34xf32>
    %26 = arith.addf %11, %25 : vector<16x34xf32>
    %27 = vector.extract_strided_slice %13 {offsets = [1, 0], sizes = [16, 34], strides = [1, 1]} : vector<18x34xf32> to vector<16x34xf32>
    %c3 = arith.constant 3 : index
    %28 = memref.load %arg1[%c3] : memref<81xf32, #tpu.memory_space<smem>>
    %29 = vector.broadcast %28 : f32 to vector<16x34xf32>
    %30 = arith.mulf %29, %27 : vector<16x34xf32>
    %31 = arith.addf %18, %30 : vector<16x34xf32>
    %c30 = arith.constant 30 : index
    %32 = memref.load %arg1[%c30] : memref<81xf32, #tpu.memory_space<smem>>
    %33 = vector.broadcast %32 : f32 to vector<16x34xf32>
    %34 = arith.mulf %33, %27 : vector<16x34xf32>
    %35 = arith.addf %22, %34 : vector<16x34xf32>
    %c57 = arith.constant 57 : index
    %36 = memref.load %arg1[%c57] : memref<81xf32, #tpu.memory_space<smem>>
    %37 = vector.broadcast %36 : f32 to vector<16x34xf32>
    %38 = arith.mulf %37, %27 : vector<16x34xf32>
    %39 = arith.addf %26, %38 : vector<16x34xf32>
    %40 = vector.extract_strided_slice %13 {offsets = [2, 0], sizes = [16, 34], strides = [1, 1]} : vector<18x34xf32> to vector<16x34xf32>
    %c6 = arith.constant 6 : index
    %41 = memref.load %arg1[%c6] : memref<81xf32, #tpu.memory_space<smem>>
    %42 = vector.broadcast %41 : f32 to vector<16x34xf32>
    %43 = arith.mulf %42, %40 : vector<16x34xf32>
    %44 = arith.addf %31, %43 : vector<16x34xf32>
    %c33 = arith.constant 33 : index
    %45 = memref.load %arg1[%c33] : memref<81xf32, #tpu.memory_space<smem>>
    %46 = vector.broadcast %45 : f32 to vector<16x34xf32>
    %47 = arith.mulf %46, %40 : vector<16x34xf32>
    %48 = arith.addf %35, %47 : vector<16x34xf32>
    %c60 = arith.constant 60 : index
    %49 = memref.load %arg1[%c60] : memref<81xf32, #tpu.memory_space<smem>>
    %50 = vector.broadcast %49 : f32 to vector<16x34xf32>
    %51 = arith.mulf %50, %40 : vector<16x34xf32>
    %52 = arith.addf %39, %51 : vector<16x34xf32>
    %c0_7 = arith.constant 0 : index
    %c0_8 = arith.constant 0 : index
    %c0_9 = arith.constant 0 : index
    %c1_10 = arith.constant 1 : index
    %53 = vector.load %arg6[%c0_7, %c0_8, %c0_9, %c1_10] : memref<1x3x18x36xf32, #tpu.memory_space<vmem>>, vector<1x1x18x34xf32>
    %54 = vector.shape_cast %53 : vector<1x1x18x34xf32> to vector<18x34xf32>
    %55 = vector.extract_strided_slice %54 {offsets = [0, 0], sizes = [16, 34], strides = [1, 1]} : vector<18x34xf32> to vector<16x34xf32>
    %c1_11 = arith.constant 1 : index
    %56 = memref.load %arg1[%c1_11] : memref<81xf32, #tpu.memory_space<smem>>
    %57 = vector.broadcast %56 : f32 to vector<16x34xf32>
    %58 = arith.mulf %57, %55 : vector<16x34xf32>
    %59 = arith.addf %44, %58 : vector<16x34xf32>
    %c28 = arith.constant 28 : index
    %60 = memref.load %arg1[%c28] : memref<81xf32, #tpu.memory_space<smem>>
    %61 = vector.broadcast %60 : f32 to vector<16x34xf32>
    %62 = arith.mulf %61, %55 : vector<16x34xf32>
    %63 = arith.addf %48, %62 : vector<16x34xf32>
    %c55 = arith.constant 55 : index
    %64 = memref.load %arg1[%c55] : memref<81xf32, #tpu.memory_space<smem>>
    %65 = vector.broadcast %64 : f32 to vector<16x34xf32>
    %66 = arith.mulf %65, %55 : vector<16x34xf32>
    %67 = arith.addf %52, %66 : vector<16x34xf32>
    %68 = vector.extract_strided_slice %54 {offsets = [1, 0], sizes = [16, 34], strides = [1, 1]} : vector<18x34xf32> to vector<16x34xf32>
    %c4 = arith.constant 4 : index
    %69 = memref.load %arg1[%c4] : memref<81xf32, #tpu.memory_space<smem>>
    %70 = vector.broadcast %69 : f32 to vector<16x34xf32>
    %71 = arith.mulf %70, %68 : vector<16x34xf32>
    %72 = arith.addf %59, %71 : vector<16x34xf32>
    %c31 = arith.constant 31 : index
    %73 = memref.load %arg1[%c31] : memref<81xf32, #tpu.memory_space<smem>>
    %74 = vector.broadcast %73 : f32 to vector<16x34xf32>
    %75 = arith.mulf %74, %68 : vector<16x34xf32>
    %76 = arith.addf %63, %75 : vector<16x34xf32>
    %c58 = arith.constant 58 : index
    %77 = memref.load %arg1[%c58] : memref<81xf32, #tpu.memory_space<smem>>
    %78 = vector.broadcast %77 : f32 to vector<16x34xf32>
    %79 = arith.mulf %78, %68 : vector<16x34xf32>
    %80 = arith.addf %67, %79 : vector<16x34xf32>
    %81 = vector.extract_strided_slice %54 {offsets = [2, 0], sizes = [16, 34], strides = [1, 1]} : vector<18x34xf32> to vector<16x34xf32>
    %c7 = arith.constant 7 : index
    %82 = memref.load %arg1[%c7] : memref<81xf32, #tpu.memory_space<smem>>
    %83 = vector.broadcast %82 : f32 to vector<16x34xf32>
    %84 = arith.mulf %83, %81 : vector<16x34xf32>
    %85 = arith.addf %72, %84 : vector<16x34xf32>
    %c34 = arith.constant 34 : index
    %86 = memref.load %arg1[%c34] : memref<81xf32, #tpu.memory_space<smem>>
    %87 = vector.broadcast %86 : f32 to vector<16x34xf32>
    %88 = arith.mulf %87, %81 : vector<16x34xf32>
    %89 = arith.addf %76, %88 : vector<16x34xf32>
    %c61 = arith.constant 61 : index
    %90 = memref.load %arg1[%c61] : memref<81xf32, #tpu.memory_space<smem>>
    %91 = vector.broadcast %90 : f32 to vector<16x34xf32>
    %92 = arith.mulf %91, %81 : vector<16x34xf32>
    %93 = arith.addf %80, %92 : vector<16x34xf32>
    %c0_12 = arith.constant 0 : index
    %c0_13 = arith.constant 0 : index
    %c0_14 = arith.constant 0 : index
    %c2_15 = arith.constant 2 : index
    %94 = vector.load %arg6[%c0_12, %c0_13, %c0_14, %c2_15] : memref<1x3x18x36xf32, #tpu.memory_space<vmem>>, vector<1x1x18x34xf32>
    %95 = vector.shape_cast %94 : vector<1x1x18x34xf32> to vector<18x34xf32>
    %96 = vector.extract_strided_slice %95 {offsets = [0, 0], sizes = [16, 34], strides = [1, 1]} : vector<18x34xf32> to vector<16x34xf32>
    %c2_16 = arith.constant 2 : index
    %97 = memref.load %arg1[%c2_16] : memref<81xf32, #tpu.memory_space<smem>>
    %98 = vector.broadcast %97 : f32 to vector<16x34xf32>
    %99 = arith.mulf %98, %96 : vector<16x34xf32>
    %100 = arith.addf %85, %99 : vector<16x34xf32>
    %c29 = arith.constant 29 : index
    %101 = memref.load %arg1[%c29] : memref<81xf32, #tpu.memory_space<smem>>
    %102 = vector.broadcast %101 : f32 to vector<16x34xf32>
    %103 = arith.mulf %102, %96 : vector<16x34xf32>
    %104 = arith.addf %89, %103 : vector<16x34xf32>
    %c56 = arith.constant 56 : index
    %105 = memref.load %arg1[%c56] : memref<81xf32, #tpu.memory_space<smem>>
    %106 = vector.broadcast %105 : f32 to vector<16x34xf32>
    %107 = arith.mulf %106, %96 : vector<16x34xf32>
    %108 = arith.addf %93, %107 : vector<16x34xf32>
    %109 = vector.extract_strided_slice %95 {offsets = [1, 0], sizes = [16, 34], strides = [1, 1]} : vector<18x34xf32> to vector<16x34xf32>
    %c5 = arith.constant 5 : index
    %110 = memref.load %arg1[%c5] : memref<81xf32, #tpu.memory_space<smem>>
    %111 = vector.broadcast %110 : f32 to vector<16x34xf32>
    %112 = arith.mulf %111, %109 : vector<16x34xf32>
    %113 = arith.addf %100, %112 : vector<16x34xf32>
    %c32 = arith.constant 32 : index
    %114 = memref.load %arg1[%c32] : memref<81xf32, #tpu.memory_space<smem>>
    %115 = vector.broadcast %114 : f32 to vector<16x34xf32>
    %116 = arith.mulf %115, %109 : vector<16x34xf32>
    %117 = arith.addf %104, %116 : vector<16x34xf32>
    %c59 = arith.constant 59 : index
    %118 = memref.load %arg1[%c59] : memref<81xf32, #tpu.memory_space<smem>>
    %119 = vector.broadcast %118 : f32 to vector<16x34xf32>
    %120 = arith.mulf %119, %109 : vector<16x34xf32>
    %121 = arith.addf %108, %120 : vector<16x34xf32>
    %122 = vector.extract_strided_slice %95 {offsets = [2, 0], sizes = [16, 34], strides = [1, 1]} : vector<18x34xf32> to vector<16x34xf32>
    %c8 = arith.constant 8 : index
    %123 = memref.load %arg1[%c8] : memref<81xf32, #tpu.memory_space<smem>>
    %124 = vector.broadcast %123 : f32 to vector<16x34xf32>
    %125 = arith.mulf %124, %122 : vector<16x34xf32>
    %126 = arith.addf %113, %125 : vector<16x34xf32>
    %c35 = arith.constant 35 : index
    %127 = memref.load %arg1[%c35] : memref<81xf32, #tpu.memory_space<smem>>
    %128 = vector.broadcast %127 : f32 to vector<16x34xf32>
    %129 = arith.mulf %128, %122 : vector<16x34xf32>
    %130 = arith.addf %117, %129 : vector<16x34xf32>
    %c62 = arith.constant 62 : index
    %131 = memref.load %arg1[%c62] : memref<81xf32, #tpu.memory_space<smem>>
    %132 = vector.broadcast %131 : f32 to vector<16x34xf32>
    %133 = arith.mulf %132, %122 : vector<16x34xf32>
    %134 = arith.addf %121, %133 : vector<16x34xf32>
    %c0_17 = arith.constant 0 : index
    %c1_18 = arith.constant 1 : index
    %c0_19 = arith.constant 0 : index
    %c0_20 = arith.constant 0 : index
    %135 = vector.load %arg6[%c0_17, %c1_18, %c0_19, %c0_20] : memref<1x3x18x36xf32, #tpu.memory_space<vmem>>, vector<1x1x18x34xf32>
    %136 = vector.shape_cast %135 : vector<1x1x18x34xf32> to vector<18x34xf32>
    %137 = vector.extract_strided_slice %136 {offsets = [0, 0], sizes = [16, 34], strides = [1, 1]} : vector<18x34xf32> to vector<16x34xf32>
    %c9 = arith.constant 9 : index
    %138 = memref.load %arg1[%c9] : memref<81xf32, #tpu.memory_space<smem>>
    %139 = vector.broadcast %138 : f32 to vector<16x34xf32>
    %140 = arith.mulf %139, %137 : vector<16x34xf32>
    %141 = arith.addf %126, %140 : vector<16x34xf32>
    %c36 = arith.constant 36 : index
    %142 = memref.load %arg1[%c36] : memref<81xf32, #tpu.memory_space<smem>>
    %143 = vector.broadcast %142 : f32 to vector<16x34xf32>
    %144 = arith.mulf %143, %137 : vector<16x34xf32>
    %145 = arith.addf %130, %144 : vector<16x34xf32>
    %c63 = arith.constant 63 : index
    %146 = memref.load %arg1[%c63] : memref<81xf32, #tpu.memory_space<smem>>
    %147 = vector.broadcast %146 : f32 to vector<16x34xf32>
    %148 = arith.mulf %147, %137 : vector<16x34xf32>
    %149 = arith.addf %134, %148 : vector<16x34xf32>
    %150 = vector.extract_strided_slice %136 {offsets = [1, 0], sizes = [16, 34], strides = [1, 1]} : vector<18x34xf32> to vector<16x34xf32>
    %c12 = arith.constant 12 : index
    %151 = memref.load %arg1[%c12] : memref<81xf32, #tpu.memory_space<smem>>
    %152 = vector.broadcast %151 : f32 to vector<16x34xf32>
    %153 = arith.mulf %152, %150 : vector<16x34xf32>
    %154 = arith.addf %141, %153 : vector<16x34xf32>
    %c39 = arith.constant 39 : index
    %155 = memref.load %arg1[%c39] : memref<81xf32, #tpu.memory_space<smem>>
    %156 = vector.broadcast %155 : f32 to vector<16x34xf32>
    %157 = arith.mulf %156, %150 : vector<16x34xf32>
    %158 = arith.addf %145, %157 : vector<16x34xf32>
    %c66 = arith.constant 66 : index
    %159 = memref.load %arg1[%c66] : memref<81xf32, #tpu.memory_space<smem>>
    %160 = vector.broadcast %159 : f32 to vector<16x34xf32>
    %161 = arith.mulf %160, %150 : vector<16x34xf32>
    %162 = arith.addf %149, %161 : vector<16x34xf32>
    %163 = vector.extract_strided_slice %136 {offsets = [2, 0], sizes = [16, 34], strides = [1, 1]} : vector<18x34xf32> to vector<16x34xf32>
    %c15 = arith.constant 15 : index
    %164 = memref.load %arg1[%c15] : memref<81xf32, #tpu.memory_space<smem>>
    %165 = vector.broadcast %164 : f32 to vector<16x34xf32>
    %166 = arith.mulf %165, %163 : vector<16x34xf32>
    %167 = arith.addf %154, %166 : vector<16x34xf32>
    %c42 = arith.constant 42 : index
    %168 = memref.load %arg1[%c42] : memref<81xf32, #tpu.memory_space<smem>>
    %169 = vector.broadcast %168 : f32 to vector<16x34xf32>
    %170 = arith.mulf %169, %163 : vector<16x34xf32>
    %171 = arith.addf %158, %170 : vector<16x34xf32>
    %c69 = arith.constant 69 : index
    %172 = memref.load %arg1[%c69] : memref<81xf32, #tpu.memory_space<smem>>
    %173 = vector.broadcast %172 : f32 to vector<16x34xf32>
    %174 = arith.mulf %173, %163 : vector<16x34xf32>
    %175 = arith.addf %162, %174 : vector<16x34xf32>
    %c0_21 = arith.constant 0 : index
    %c1_22 = arith.constant 1 : index
    %c0_23 = arith.constant 0 : index
    %c1_24 = arith.constant 1 : index
    %176 = vector.load %arg6[%c0_21, %c1_22, %c0_23, %c1_24] : memref<1x3x18x36xf32, #tpu.memory_space<vmem>>, vector<1x1x18x34xf32>
    %177 = vector.shape_cast %176 : vector<1x1x18x34xf32> to vector<18x34xf32>
    %178 = vector.extract_strided_slice %177 {offsets = [0, 0], sizes = [16, 34], strides = [1, 1]} : vector<18x34xf32> to vector<16x34xf32>
    %c10 = arith.constant 10 : index
    %179 = memref.load %arg1[%c10] : memref<81xf32, #tpu.memory_space<smem>>
    %180 = vector.broadcast %179 : f32 to vector<16x34xf32>
    %181 = arith.mulf %180, %178 : vector<16x34xf32>
    %182 = arith.addf %167, %181 : vector<16x34xf32>
    %c37 = arith.constant 37 : index
    %183 = memref.load %arg1[%c37] : memref<81xf32, #tpu.memory_space<smem>>
    %184 = vector.broadcast %183 : f32 to vector<16x34xf32>
    %185 = arith.mulf %184, %178 : vector<16x34xf32>
    %186 = arith.addf %171, %185 : vector<16x34xf32>
    %c64 = arith.constant 64 : index
    %187 = memref.load %arg1[%c64] : memref<81xf32, #tpu.memory_space<smem>>
    %188 = vector.broadcast %187 : f32 to vector<16x34xf32>
    %189 = arith.mulf %188, %178 : vector<16x34xf32>
    %190 = arith.addf %175, %189 : vector<16x34xf32>
    %191 = vector.extract_strided_slice %177 {offsets = [1, 0], sizes = [16, 34], strides = [1, 1]} : vector<18x34xf32> to vector<16x34xf32>
    %c13 = arith.constant 13 : index
    %192 = memref.load %arg1[%c13] : memref<81xf32, #tpu.memory_space<smem>>
    %193 = vector.broadcast %192 : f32 to vector<16x34xf32>
    %194 = arith.mulf %193, %191 : vector<16x34xf32>
    %195 = arith.addf %182, %194 : vector<16x34xf32>
    %c40 = arith.constant 40 : index
    %196 = memref.load %arg1[%c40] : memref<81xf32, #tpu.memory_space<smem>>
    %197 = vector.broadcast %196 : f32 to vector<16x34xf32>
    %198 = arith.mulf %197, %191 : vector<16x34xf32>
    %199 = arith.addf %186, %198 : vector<16x34xf32>
    %c67 = arith.constant 67 : index
    %200 = memref.load %arg1[%c67] : memref<81xf32, #tpu.memory_space<smem>>
    %201 = vector.broadcast %200 : f32 to vector<16x34xf32>
    %202 = arith.mulf %201, %191 : vector<16x34xf32>
    %203 = arith.addf %190, %202 : vector<16x34xf32>
    %204 = vector.extract_strided_slice %177 {offsets = [2, 0], sizes = [16, 34], strides = [1, 1]} : vector<18x34xf32> to vector<16x34xf32>
    %c16 = arith.constant 16 : index
    %205 = memref.load %arg1[%c16] : memref<81xf32, #tpu.memory_space<smem>>
    %206 = vector.broadcast %205 : f32 to vector<16x34xf32>
    %207 = arith.mulf %206, %204 : vector<16x34xf32>
    %208 = arith.addf %195, %207 : vector<16x34xf32>
    %c43 = arith.constant 43 : index
    %209 = memref.load %arg1[%c43] : memref<81xf32, #tpu.memory_space<smem>>
    %210 = vector.broadcast %209 : f32 to vector<16x34xf32>
    %211 = arith.mulf %210, %204 : vector<16x34xf32>
    %212 = arith.addf %199, %211 : vector<16x34xf32>
    %c70 = arith.constant 70 : index
    %213 = memref.load %arg1[%c70] : memref<81xf32, #tpu.memory_space<smem>>
    %214 = vector.broadcast %213 : f32 to vector<16x34xf32>
    %215 = arith.mulf %214, %204 : vector<16x34xf32>
    %216 = arith.addf %203, %215 : vector<16x34xf32>
    %c0_25 = arith.constant 0 : index
    %c1_26 = arith.constant 1 : index
    %c0_27 = arith.constant 0 : index
    %c2_28 = arith.constant 2 : index
    %217 = vector.load %arg6[%c0_25, %c1_26, %c0_27, %c2_28] : memref<1x3x18x36xf32, #tpu.memory_space<vmem>>, vector<1x1x18x34xf32>
    %218 = vector.shape_cast %217 : vector<1x1x18x34xf32> to vector<18x34xf32>
    %219 = vector.extract_strided_slice %218 {offsets = [0, 0], sizes = [16, 34], strides = [1, 1]} : vector<18x34xf32> to vector<16x34xf32>
    %c11 = arith.constant 11 : index
    %220 = memref.load %arg1[%c11] : memref<81xf32, #tpu.memory_space<smem>>
    %221 = vector.broadcast %220 : f32 to vector<16x34xf32>
    %222 = arith.mulf %221, %219 : vector<16x34xf32>
    %223 = arith.addf %208, %222 : vector<16x34xf32>
    %c38 = arith.constant 38 : index
    %224 = memref.load %arg1[%c38] : memref<81xf32, #tpu.memory_space<smem>>
    %225 = vector.broadcast %224 : f32 to vector<16x34xf32>
    %226 = arith.mulf %225, %219 : vector<16x34xf32>
    %227 = arith.addf %212, %226 : vector<16x34xf32>
    %c65 = arith.constant 65 : index
    %228 = memref.load %arg1[%c65] : memref<81xf32, #tpu.memory_space<smem>>
    %229 = vector.broadcast %228 : f32 to vector<16x34xf32>
    %230 = arith.mulf %229, %219 : vector<16x34xf32>
    %231 = arith.addf %216, %230 : vector<16x34xf32>
    %232 = vector.extract_strided_slice %218 {offsets = [1, 0], sizes = [16, 34], strides = [1, 1]} : vector<18x34xf32> to vector<16x34xf32>
    %c14 = arith.constant 14 : index
    %233 = memref.load %arg1[%c14] : memref<81xf32, #tpu.memory_space<smem>>
    %234 = vector.broadcast %233 : f32 to vector<16x34xf32>
    %235 = arith.mulf %234, %232 : vector<16x34xf32>
    %236 = arith.addf %223, %235 : vector<16x34xf32>
    %c41 = arith.constant 41 : index
    %237 = memref.load %arg1[%c41] : memref<81xf32, #tpu.memory_space<smem>>
    %238 = vector.broadcast %237 : f32 to vector<16x34xf32>
    %239 = arith.mulf %238, %232 : vector<16x34xf32>
    %240 = arith.addf %227, %239 : vector<16x34xf32>
    %c68 = arith.constant 68 : index
    %241 = memref.load %arg1[%c68] : memref<81xf32, #tpu.memory_space<smem>>
    %242 = vector.broadcast %241 : f32 to vector<16x34xf32>
    %243 = arith.mulf %242, %232 : vector<16x34xf32>
    %244 = arith.addf %231, %243 : vector<16x34xf32>
    %245 = vector.extract_strided_slice %218 {offsets = [2, 0], sizes = [16, 34], strides = [1, 1]} : vector<18x34xf32> to vector<16x34xf32>
    %c17 = arith.constant 17 : index
    %246 = memref.load %arg1[%c17] : memref<81xf32, #tpu.memory_space<smem>>
    %247 = vector.broadcast %246 : f32 to vector<16x34xf32>
    %248 = arith.mulf %247, %245 : vector<16x34xf32>
    %249 = arith.addf %236, %248 : vector<16x34xf32>
    %c44 = arith.constant 44 : index
    %250 = memref.load %arg1[%c44] : memref<81xf32, #tpu.memory_space<smem>>
    %251 = vector.broadcast %250 : f32 to vector<16x34xf32>
    %252 = arith.mulf %251, %245 : vector<16x34xf32>
    %253 = arith.addf %240, %252 : vector<16x34xf32>
    %c71 = arith.constant 71 : index
    %254 = memref.load %arg1[%c71] : memref<81xf32, #tpu.memory_space<smem>>
    %255 = vector.broadcast %254 : f32 to vector<16x34xf32>
    %256 = arith.mulf %255, %245 : vector<16x34xf32>
    %257 = arith.addf %244, %256 : vector<16x34xf32>
    %c0_29 = arith.constant 0 : index
    %c2_30 = arith.constant 2 : index
    %c0_31 = arith.constant 0 : index
    %c0_32 = arith.constant 0 : index
    %258 = vector.load %arg6[%c0_29, %c2_30, %c0_31, %c0_32] : memref<1x3x18x36xf32, #tpu.memory_space<vmem>>, vector<1x1x18x34xf32>
    %259 = vector.shape_cast %258 : vector<1x1x18x34xf32> to vector<18x34xf32>
    %260 = vector.extract_strided_slice %259 {offsets = [0, 0], sizes = [16, 34], strides = [1, 1]} : vector<18x34xf32> to vector<16x34xf32>
    %c18 = arith.constant 18 : index
    %261 = memref.load %arg1[%c18] : memref<81xf32, #tpu.memory_space<smem>>
    %262 = vector.broadcast %261 : f32 to vector<16x34xf32>
    %263 = arith.mulf %262, %260 : vector<16x34xf32>
    %264 = arith.addf %249, %263 : vector<16x34xf32>
    %c45 = arith.constant 45 : index
    %265 = memref.load %arg1[%c45] : memref<81xf32, #tpu.memory_space<smem>>
    %266 = vector.broadcast %265 : f32 to vector<16x34xf32>
    %267 = arith.mulf %266, %260 : vector<16x34xf32>
    %268 = arith.addf %253, %267 : vector<16x34xf32>
    %c72 = arith.constant 72 : index
    %269 = memref.load %arg1[%c72] : memref<81xf32, #tpu.memory_space<smem>>
    %270 = vector.broadcast %269 : f32 to vector<16x34xf32>
    %271 = arith.mulf %270, %260 : vector<16x34xf32>
    %272 = arith.addf %257, %271 : vector<16x34xf32>
    %273 = vector.extract_strided_slice %259 {offsets = [1, 0], sizes = [16, 34], strides = [1, 1]} : vector<18x34xf32> to vector<16x34xf32>
    %c21 = arith.constant 21 : index
    %274 = memref.load %arg1[%c21] : memref<81xf32, #tpu.memory_space<smem>>
    %275 = vector.broadcast %274 : f32 to vector<16x34xf32>
    %276 = arith.mulf %275, %273 : vector<16x34xf32>
    %277 = arith.addf %264, %276 : vector<16x34xf32>
    %c48 = arith.constant 48 : index
    %278 = memref.load %arg1[%c48] : memref<81xf32, #tpu.memory_space<smem>>
    %279 = vector.broadcast %278 : f32 to vector<16x34xf32>
    %280 = arith.mulf %279, %273 : vector<16x34xf32>
    %281 = arith.addf %268, %280 : vector<16x34xf32>
    %c75 = arith.constant 75 : index
    %282 = memref.load %arg1[%c75] : memref<81xf32, #tpu.memory_space<smem>>
    %283 = vector.broadcast %282 : f32 to vector<16x34xf32>
    %284 = arith.mulf %283, %273 : vector<16x34xf32>
    %285 = arith.addf %272, %284 : vector<16x34xf32>
    %286 = vector.extract_strided_slice %259 {offsets = [2, 0], sizes = [16, 34], strides = [1, 1]} : vector<18x34xf32> to vector<16x34xf32>
    %c24 = arith.constant 24 : index
    %287 = memref.load %arg1[%c24] : memref<81xf32, #tpu.memory_space<smem>>
    %288 = vector.broadcast %287 : f32 to vector<16x34xf32>
    %289 = arith.mulf %288, %286 : vector<16x34xf32>
    %290 = arith.addf %277, %289 : vector<16x34xf32>
    %c51 = arith.constant 51 : index
    %291 = memref.load %arg1[%c51] : memref<81xf32, #tpu.memory_space<smem>>
    %292 = vector.broadcast %291 : f32 to vector<16x34xf32>
    %293 = arith.mulf %292, %286 : vector<16x34xf32>
    %294 = arith.addf %281, %293 : vector<16x34xf32>
    %c78 = arith.constant 78 : index
    %295 = memref.load %arg1[%c78] : memref<81xf32, #tpu.memory_space<smem>>
    %296 = vector.broadcast %295 : f32 to vector<16x34xf32>
    %297 = arith.mulf %296, %286 : vector<16x34xf32>
    %298 = arith.addf %285, %297 : vector<16x34xf32>
    %c0_33 = arith.constant 0 : index
    %c2_34 = arith.constant 2 : index
    %c0_35 = arith.constant 0 : index
    %c1_36 = arith.constant 1 : index
    %299 = vector.load %arg6[%c0_33, %c2_34, %c0_35, %c1_36] : memref<1x3x18x36xf32, #tpu.memory_space<vmem>>, vector<1x1x18x34xf32>
    %300 = vector.shape_cast %299 : vector<1x1x18x34xf32> to vector<18x34xf32>
    %301 = vector.extract_strided_slice %300 {offsets = [0, 0], sizes = [16, 34], strides = [1, 1]} : vector<18x34xf32> to vector<16x34xf32>
    %c19 = arith.constant 19 : index
    %302 = memref.load %arg1[%c19] : memref<81xf32, #tpu.memory_space<smem>>
    %303 = vector.broadcast %302 : f32 to vector<16x34xf32>
    %304 = arith.mulf %303, %301 : vector<16x34xf32>
    %305 = arith.addf %290, %304 : vector<16x34xf32>
    %c46 = arith.constant 46 : index
    %306 = memref.load %arg1[%c46] : memref<81xf32, #tpu.memory_space<smem>>
    %307 = vector.broadcast %306 : f32 to vector<16x34xf32>
    %308 = arith.mulf %307, %301 : vector<16x34xf32>
    %309 = arith.addf %294, %308 : vector<16x34xf32>
    %c73 = arith.constant 73 : index
    %310 = memref.load %arg1[%c73] : memref<81xf32, #tpu.memory_space<smem>>
    %311 = vector.broadcast %310 : f32 to vector<16x34xf32>
    %312 = arith.mulf %311, %301 : vector<16x34xf32>
    %313 = arith.addf %298, %312 : vector<16x34xf32>
    %314 = vector.extract_strided_slice %300 {offsets = [1, 0], sizes = [16, 34], strides = [1, 1]} : vector<18x34xf32> to vector<16x34xf32>
    %c22 = arith.constant 22 : index
    %315 = memref.load %arg1[%c22] : memref<81xf32, #tpu.memory_space<smem>>
    %316 = vector.broadcast %315 : f32 to vector<16x34xf32>
    %317 = arith.mulf %316, %314 : vector<16x34xf32>
    %318 = arith.addf %305, %317 : vector<16x34xf32>
    %c49 = arith.constant 49 : index
    %319 = memref.load %arg1[%c49] : memref<81xf32, #tpu.memory_space<smem>>
    %320 = vector.broadcast %319 : f32 to vector<16x34xf32>
    %321 = arith.mulf %320, %314 : vector<16x34xf32>
    %322 = arith.addf %309, %321 : vector<16x34xf32>
    %c76 = arith.constant 76 : index
    %323 = memref.load %arg1[%c76] : memref<81xf32, #tpu.memory_space<smem>>
    %324 = vector.broadcast %323 : f32 to vector<16x34xf32>
    %325 = arith.mulf %324, %314 : vector<16x34xf32>
    %326 = arith.addf %313, %325 : vector<16x34xf32>
    %327 = vector.extract_strided_slice %300 {offsets = [2, 0], sizes = [16, 34], strides = [1, 1]} : vector<18x34xf32> to vector<16x34xf32>
    %c25 = arith.constant 25 : index
    %328 = memref.load %arg1[%c25] : memref<81xf32, #tpu.memory_space<smem>>
    %329 = vector.broadcast %328 : f32 to vector<16x34xf32>
    %330 = arith.mulf %329, %327 : vector<16x34xf32>
    %331 = arith.addf %318, %330 : vector<16x34xf32>
    %c52 = arith.constant 52 : index
    %332 = memref.load %arg1[%c52] : memref<81xf32, #tpu.memory_space<smem>>
    %333 = vector.broadcast %332 : f32 to vector<16x34xf32>
    %334 = arith.mulf %333, %327 : vector<16x34xf32>
    %335 = arith.addf %322, %334 : vector<16x34xf32>
    %c79 = arith.constant 79 : index
    %336 = memref.load %arg1[%c79] : memref<81xf32, #tpu.memory_space<smem>>
    %337 = vector.broadcast %336 : f32 to vector<16x34xf32>
    %338 = arith.mulf %337, %327 : vector<16x34xf32>
    %339 = arith.addf %326, %338 : vector<16x34xf32>
    %c0_37 = arith.constant 0 : index
    %c2_38 = arith.constant 2 : index
    %c0_39 = arith.constant 0 : index
    %c2_40 = arith.constant 2 : index
    %340 = vector.load %arg6[%c0_37, %c2_38, %c0_39, %c2_40] : memref<1x3x18x36xf32, #tpu.memory_space<vmem>>, vector<1x1x18x34xf32>
    %341 = vector.shape_cast %340 : vector<1x1x18x34xf32> to vector<18x34xf32>
    %342 = vector.extract_strided_slice %341 {offsets = [0, 0], sizes = [16, 34], strides = [1, 1]} : vector<18x34xf32> to vector<16x34xf32>
    %c20 = arith.constant 20 : index
    %343 = memref.load %arg1[%c20] : memref<81xf32, #tpu.memory_space<smem>>
    %344 = vector.broadcast %343 : f32 to vector<16x34xf32>
    %345 = arith.mulf %344, %342 : vector<16x34xf32>
    %346 = arith.addf %331, %345 : vector<16x34xf32>
    %c47 = arith.constant 47 : index
    %347 = memref.load %arg1[%c47] : memref<81xf32, #tpu.memory_space<smem>>
    %348 = vector.broadcast %347 : f32 to vector<16x34xf32>
    %349 = arith.mulf %348, %342 : vector<16x34xf32>
    %350 = arith.addf %335, %349 : vector<16x34xf32>
    %c74 = arith.constant 74 : index
    %351 = memref.load %arg1[%c74] : memref<81xf32, #tpu.memory_space<smem>>
    %352 = vector.broadcast %351 : f32 to vector<16x34xf32>
    %353 = arith.mulf %352, %342 : vector<16x34xf32>
    %354 = arith.addf %339, %353 : vector<16x34xf32>
    %355 = vector.extract_strided_slice %341 {offsets = [1, 0], sizes = [16, 34], strides = [1, 1]} : vector<18x34xf32> to vector<16x34xf32>
    %c23 = arith.constant 23 : index
    %356 = memref.load %arg1[%c23] : memref<81xf32, #tpu.memory_space<smem>>
    %357 = vector.broadcast %356 : f32 to vector<16x34xf32>
    %358 = arith.mulf %357, %355 : vector<16x34xf32>
    %359 = arith.addf %346, %358 : vector<16x34xf32>
    %c50 = arith.constant 50 : index
    %360 = memref.load %arg1[%c50] : memref<81xf32, #tpu.memory_space<smem>>
    %361 = vector.broadcast %360 : f32 to vector<16x34xf32>
    %362 = arith.mulf %361, %355 : vector<16x34xf32>
    %363 = arith.addf %350, %362 : vector<16x34xf32>
    %c77 = arith.constant 77 : index
    %364 = memref.load %arg1[%c77] : memref<81xf32, #tpu.memory_space<smem>>
    %365 = vector.broadcast %364 : f32 to vector<16x34xf32>
    %366 = arith.mulf %365, %355 : vector<16x34xf32>
    %367 = arith.addf %354, %366 : vector<16x34xf32>
    %368 = vector.extract_strided_slice %341 {offsets = [2, 0], sizes = [16, 34], strides = [1, 1]} : vector<18x34xf32> to vector<16x34xf32>
    %c26 = arith.constant 26 : index
    %369 = memref.load %arg1[%c26] : memref<81xf32, #tpu.memory_space<smem>>
    %370 = vector.broadcast %369 : f32 to vector<16x34xf32>
    %371 = arith.mulf %370, %368 : vector<16x34xf32>
    %372 = arith.addf %359, %371 : vector<16x34xf32>
    %c53 = arith.constant 53 : index
    %373 = memref.load %arg1[%c53] : memref<81xf32, #tpu.memory_space<smem>>
    %374 = vector.broadcast %373 : f32 to vector<16x34xf32>
    %375 = arith.mulf %374, %368 : vector<16x34xf32>
    %376 = arith.addf %363, %375 : vector<16x34xf32>
    %c80 = arith.constant 80 : index
    %377 = memref.load %arg1[%c80] : memref<81xf32, #tpu.memory_space<smem>>
    %378 = vector.broadcast %377 : f32 to vector<16x34xf32>
    %379 = arith.mulf %378, %368 : vector<16x34xf32>
    %380 = arith.addf %367, %379 : vector<16x34xf32>
    %c0_41 = arith.constant 0 : index
    %c0_42 = arith.constant 0 : index
    %c1_43 = arith.constant 1 : index
    %c1_44 = arith.constant 1 : index
    %381 = vector.load %arg6[%c0_41, %c0_42, %c1_43, %c1_44] : memref<1x3x18x36xf32, #tpu.memory_space<vmem>>, vector<1x1x16x34xf32>
    %382 = vector.shape_cast %381 : vector<1x1x16x34xf32> to vector<16x34xf32>
    %c0_45 = arith.constant 0 : index
    %c1_46 = arith.constant 1 : index
    %c1_47 = arith.constant 1 : index
    %c1_48 = arith.constant 1 : index
    %383 = vector.load %arg6[%c0_45, %c1_46, %c1_47, %c1_48] : memref<1x3x18x36xf32, #tpu.memory_space<vmem>>, vector<1x1x16x34xf32>
    %384 = vector.shape_cast %383 : vector<1x1x16x34xf32> to vector<16x34xf32>
    %c0_49 = arith.constant 0 : index
    %c2_50 = arith.constant 2 : index
    %c1_51 = arith.constant 1 : index
    %c1_52 = arith.constant 1 : index
    %385 = vector.load %arg6[%c0_49, %c2_50, %c1_51, %c1_52] : memref<1x3x18x36xf32, #tpu.memory_space<vmem>>, vector<1x1x16x34xf32>
    %386 = vector.shape_cast %385 : vector<1x1x16x34xf32> to vector<16x34xf32>
    %cst_53 = arith.constant 2.989000e-01 : f32
    %387 = vector.broadcast %cst_53 : f32 to vector<16x34xf32>
    %388 = arith.mulf %387, %382 : vector<16x34xf32>
    %cst_54 = arith.constant 5.870000e-01 : f32
    %389 = vector.broadcast %cst_54 : f32 to vector<16x34xf32>
    %390 = arith.mulf %389, %384 : vector<16x34xf32>
    %391 = arith.addf %388, %390 : vector<16x34xf32>
    %cst_55 = arith.constant 1.140000e-01 : f32
    %392 = vector.broadcast %cst_55 : f32 to vector<16x34xf32>
    %393 = arith.mulf %392, %386 : vector<16x34xf32>
    %394 = arith.addf %391, %393 : vector<16x34xf32>
    %cst_56 = arith.constant 2.989000e-01 : f32
    %395 = vector.broadcast %cst_56 : f32 to vector<16x34xf32>
    %396 = arith.mulf %395, %372 : vector<16x34xf32>
    %cst_57 = arith.constant 5.870000e-01 : f32
    %397 = vector.broadcast %cst_57 : f32 to vector<16x34xf32>
    %398 = arith.mulf %397, %376 : vector<16x34xf32>
    %399 = arith.addf %396, %398 : vector<16x34xf32>
    %cst_58 = arith.constant 1.140000e-01 : f32
    %400 = vector.broadcast %cst_58 : f32 to vector<16x34xf32>
    %401 = arith.mulf %400, %380 : vector<16x34xf32>
    %402 = arith.addf %399, %401 : vector<16x34xf32>
    %403 = arith.subf %394, %402 : vector<16x34xf32>
    %c0_59 = arith.constant 0 : index
    %404 = memref.load %arg5[%c0_59] : memref<1xf32, #tpu.memory_space<smem>>
    %405 = vector.broadcast %404 : f32 to vector<16x34xf32>
    %406 = arith.subf %403, %405 : vector<16x34xf32>
    %cst_60 = arith.constant 0.000000e+00 : f32
    %407 = vector.broadcast %cst_60 : f32 to vector<16x34xf32>
    %408 = arith.maximumf %406, %407 : vector<16x34xf32>
    %c0_61 = arith.constant 0 : index
    %c1_62 = arith.constant 1 : index
    %c1_63 = arith.constant 1 : index
    %409 = vector.load %arg8[%c0_61, %c1_62, %c1_63] : memref<4x24x128xf32, #tpu.memory_space<vmem>>, vector<1x16x34xf32>
    %410 = vector.shape_cast %409 : vector<1x16x34xf32> to vector<16x34xf32>
    %411 = vector.shape_cast %372 : vector<16x34xf32> to vector<1x16x34xf32>
    tpu.vector_store %arg8[%c0_61, %c1_62, %c1_63], %411 {strides = array<i32>} : memref<4x24x128xf32, #tpu.memory_space<vmem>>, vector<1x16x34xf32>,
    %c1_64 = arith.constant 1 : index
    %c1_65 = arith.constant 1 : index
    %c1_66 = arith.constant 1 : index
    %412 = vector.load %arg8[%c1_64, %c1_65, %c1_66] : memref<4x24x128xf32, #tpu.memory_space<vmem>>, vector<1x16x34xf32>
    %413 = vector.shape_cast %412 : vector<1x16x34xf32> to vector<16x34xf32>
    %414 = vector.shape_cast %376 : vector<16x34xf32> to vector<1x16x34xf32>
    tpu.vector_store %arg8[%c1_64, %c1_65, %c1_66], %414 {strides = array<i32>} : memref<4x24x128xf32, #tpu.memory_space<vmem>>, vector<1x16x34xf32>,
    %c2_67 = arith.constant 2 : index
    %c1_68 = arith.constant 1 : index
    %c1_69 = arith.constant 1 : index
    %415 = vector.load %arg8[%c2_67, %c1_68, %c1_69] : memref<4x24x128xf32, #tpu.memory_space<vmem>>, vector<1x16x34xf32>
    %416 = vector.shape_cast %415 : vector<1x16x34xf32> to vector<16x34xf32>
    %417 = vector.shape_cast %380 : vector<16x34xf32> to vector<1x16x34xf32>
    tpu.vector_store %arg8[%c2_67, %c1_68, %c1_69], %417 {strides = array<i32>} : memref<4x24x128xf32, #tpu.memory_space<vmem>>, vector<1x16x34xf32>,
    %418 = tpu.iota {dimensions = array<i32: 0>} : vector<16x16xi32>
    %419 = tpu.iota {dimensions = array<i32: 1>} : vector<16x16xi32>
    %420 = arith.cmpi eq, %418, %419 : vector<16x16xi32>
    %421 = arith.extui %420 : vector<16x16xi1> to vector<16x16xi32>
    %422 = arith.sitofp %421 : vector<16x16xi32> to vector<16x16xf32>
    %423 = vector.extract_strided_slice %408 {offsets = [0, 0], sizes = [16, 16], strides = [1, 1]} : vector<16x34xf32> to vector<16x16xf32>
    "tpu.trace_start"() <{level = 10 : i32, message = "ik,jk->ij"}> : () -> ()
    %cst_70 = arith.constant dense<0.000000e+00> : vector<16x16xf32>
    %424 = tpu.matmul %422, %423, %cst_70 {dimension_numbers = #tpu.dot_dimension_numbers<[1], [1], [0], [0], [0, 0, 1, 0], [], []>, precision = #tpu.contract_precision<fp32>} : vector<16x16xf32>, vector<16x16xf32>, vector<16x16xf32> -> vector<16x16xf32>
    "tpu.trace_stop"() : () -> ()
    %c3_71 = arith.constant 3 : index
    %c1_72 = arith.constant 1 : index
    %c1_73 = arith.constant 1 : index
    %425 = vector.load %arg8[%c3_71, %c1_72, %c1_73] : memref<4x24x128xf32, #tpu.memory_space<vmem>>, vector<1x16x16xf32>
    %426 = vector.shape_cast %425 : vector<1x16x16xf32> to vector<16x16xf32>
    %427 = vector.shape_cast %424 : vector<16x16xf32> to vector<1x16x16xf32>
    tpu.vector_store %arg8[%c3_71, %c1_72, %c1_73], %427 {strides = array<i32>} : memref<4x24x128xf32, #tpu.memory_space<vmem>>, vector<1x16x16xf32>,
    %428 = vector.extract_strided_slice %408 {offsets = [0, 18], sizes = [16, 16], strides = [1, 1]} : vector<16x34xf32> to vector<16x16xf32>
    "tpu.trace_start"() <{level = 10 : i32, message = "ik,jk->ij"}> : () -> ()
    %cst_74 = arith.constant dense<0.000000e+00> : vector<16x16xf32>
    %429 = tpu.matmul %422, %428, %cst_74 {dimension_numbers = #tpu.dot_dimension_numbers<[1], [1], [0], [0], [0, 0, 1, 0], [], []>, precision = #tpu.contract_precision<fp32>} : vector<16x16xf32>, vector<16x16xf32>, vector<16x16xf32> -> vector<16x16xf32>
    "tpu.trace_stop"() : () -> ()
    %c3_75 = arith.constant 3 : index
    %c1_76 = arith.constant 1 : index
    %c19_77 = arith.constant 19 : index
    %430 = vector.load %arg8[%c3_75, %c1_76, %c19_77] : memref<4x24x128xf32, #tpu.memory_space<vmem>>, vector<1x16x16xf32>
    %431 = vector.shape_cast %430 : vector<1x16x16xf32> to vector<16x16xf32>
    %432 = vector.shape_cast %429 : vector<16x16xf32> to vector<1x16x16xf32>
    tpu.vector_store %arg8[%c3_75, %c1_76, %c19_77], %432 {strides = array<i32>} : memref<4x24x128xf32, #tpu.memory_space<vmem>>, vector<1x16x16xf32>,
    %cst_78 = arith.constant 0.000000e+00 : f32
    %433 = vector.broadcast %cst_78 : f32 to vector<1x36xf32>
    %cst_79 = arith.constant 0.000000e+00 : f32
    %434 = vector.broadcast %cst_79 : f32 to vector<16x1xf32>
    %cst_80 = arith.constant 0.000000e+00 : f32
    %435 = vector.broadcast %cst_80 : f32 to vector<16x2xf32>
    %c0_81 = arith.constant 0 : index
    %c0_82 = arith.constant 0 : index
    %c0_83 = arith.constant 0 : index
    %436 = vector.load %arg8[%c0_81, %c0_82, %c0_83] : memref<4x24x128xf32, #tpu.memory_space<vmem>>, vector<1x1x36xf32>
    %437 = vector.shape_cast %436 : vector<1x1x36xf32> to vector<1x36xf32>
    %438 = vector.shape_cast %433 : vector<1x36xf32> to vector<1x1x36xf32>
    tpu.vector_store %arg8[%c0_81, %c0_82, %c0_83], %438 {strides = array<i32>} : memref<4x24x128xf32, #tpu.memory_space<vmem>>, vector<1x1x36xf32>,
    %c0_84 = arith.constant 0 : index
    %c17_85 = arith.constant 17 : index
    %c0_86 = arith.constant 0 : index
    %439 = vector.load %arg8[%c0_84, %c17_85, %c0_86] : memref<4x24x128xf32, #tpu.memory_space<vmem>>, vector<1x1x36xf32>
    %440 = vector.shape_cast %439 : vector<1x1x36xf32> to vector<1x36xf32>
    %441 = vector.shape_cast %433 : vector<1x36xf32> to vector<1x1x36xf32>
    tpu.vector_store %arg8[%c0_84, %c17_85, %c0_86], %441 {strides = array<i32>} : memref<4x24x128xf32, #tpu.memory_space<vmem>>, vector<1x1x36xf32>,
    %c0_87 = arith.constant 0 : index
    %c1_88 = arith.constant 1 : index
    %c0_89 = arith.constant 0 : index
    %442 = vector.load %arg8[%c0_87, %c1_88, %c0_89] : memref<4x24x128xf32, #tpu.memory_space<vmem>>, vector<1x16x1xf32>
    %443 = vector.shape_cast %442 : vector<1x16x1xf32> to vector<16x1xf32>
    %444 = vector.shape_cast %434 : vector<16x1xf32> to vector<1x16x1xf32>
    tpu.vector_store %arg8[%c0_87, %c1_88, %c0_89], %444 {strides = array<i32>} : memref<4x24x128xf32, #tpu.memory_space<vmem>>, vector<1x16x1xf32>,
    %c0_90 = arith.constant 0 : index
    %c1_91 = arith.constant 1 : index
    %c35_92 = arith.constant 35 : index
    %445 = vector.load %arg8[%c0_90, %c1_91, %c35_92] : memref<4x24x128xf32, #tpu.memory_space<vmem>>, vector<1x16x1xf32>
    %446 = vector.shape_cast %445 : vector<1x16x1xf32> to vector<16x1xf32>
    %447 = vector.shape_cast %434 : vector<16x1xf32> to vector<1x16x1xf32>
    tpu.vector_store %arg8[%c0_90, %c1_91, %c35_92], %447 {strides = array<i32>} : memref<4x24x128xf32, #tpu.memory_space<vmem>>, vector<1x16x1xf32>,
    %c0_93 = arith.constant 0 : index
    %c1_94 = arith.constant 1 : index
    %c17_95 = arith.constant 17 : index
    %448 = vector.load %arg8[%c0_93, %c1_94, %c17_95] : memref<4x24x128xf32, #tpu.memory_space<vmem>>, vector<1x16x2xf32>
    %449 = vector.shape_cast %448 : vector<1x16x2xf32> to vector<16x2xf32>
    %450 = vector.shape_cast %435 : vector<16x2xf32> to vector<1x16x2xf32>
    tpu.vector_store %arg8[%c0_93, %c1_94, %c17_95], %450 {strides = array<i32>} : memref<4x24x128xf32, #tpu.memory_space<vmem>>, vector<1x16x2xf32>,
    %c1_96 = arith.constant 1 : index
    %c0_97 = arith.constant 0 : index
    %c0_98 = arith.constant 0 : index
    %451 = vector.load %arg8[%c1_96, %c0_97, %c0_98] : memref<4x24x128xf32, #tpu.memory_space<vmem>>, vector<1x1x36xf32>
    %452 = vector.shape_cast %451 : vector<1x1x36xf32> to vector<1x36xf32>
    %453 = vector.shape_cast %433 : vector<1x36xf32> to vector<1x1x36xf32>
    tpu.vector_store %arg8[%c1_96, %c0_97, %c0_98], %453 {strides = array<i32>} : memref<4x24x128xf32, #tpu.memory_space<vmem>>, vector<1x1x36xf32>,
    %c1_99 = arith.constant 1 : index
    %c17_100 = arith.constant 17 : index
    %c0_101 = arith.constant 0 : index
    %454 = vector.load %arg8[%c1_99, %c17_100, %c0_101] : memref<4x24x128xf32, #tpu.memory_space<vmem>>, vector<1x1x36xf32>
    %455 = vector.shape_cast %454 : vector<1x1x36xf32> to vector<1x36xf32>
    %456 = vector.shape_cast %433 : vector<1x36xf32> to vector<1x1x36xf32>
    tpu.vector_store %arg8[%c1_99, %c17_100, %c0_101], %456 {strides = array<i32>} : memref<4x24x128xf32, #tpu.memory_space<vmem>>, vector<1x1x36xf32>,
    %c1_102 = arith.constant 1 : index
    %c1_103 = arith.constant 1 : index
    %c0_104 = arith.constant 0 : index
    %457 = vector.load %arg8[%c1_102, %c1_103, %c0_104] : memref<4x24x128xf32, #tpu.memory_space<vmem>>, vector<1x16x1xf32>
    %458 = vector.shape_cast %457 : vector<1x16x1xf32> to vector<16x1xf32>
    %459 = vector.shape_cast %434 : vector<16x1xf32> to vector<1x16x1xf32>
    tpu.vector_store %arg8[%c1_102, %c1_103, %c0_104], %459 {strides = array<i32>} : memref<4x24x128xf32, #tpu.memory_space<vmem>>, vector<1x16x1xf32>,
    %c1_105 = arith.constant 1 : index
    %c1_106 = arith.constant 1 : index
    %c35_107 = arith.constant 35 : index
    %460 = vector.load %arg8[%c1_105, %c1_106, %c35_107] : memref<4x24x128xf32, #tpu.memory_space<vmem>>, vector<1x16x1xf32>
    %461 = vector.shape_cast %460 : vector<1x16x1xf32> to vector<16x1xf32>
    %462 = vector.shape_cast %434 : vector<16x1xf32> to vector<1x16x1xf32>
    tpu.vector_store %arg8[%c1_105, %c1_106, %c35_107], %462 {strides = array<i32>} : memref<4x24x128xf32, #tpu.memory_space<vmem>>, vector<1x16x1xf32>,
    %c1_108 = arith.constant 1 : index
    %c1_109 = arith.constant 1 : index
    %c17_110 = arith.constant 17 : index
    %463 = vector.load %arg8[%c1_108, %c1_109, %c17_110] : memref<4x24x128xf32, #tpu.memory_space<vmem>>, vector<1x16x2xf32>
    %464 = vector.shape_cast %463 : vector<1x16x2xf32> to vector<16x2xf32>
    %465 = vector.shape_cast %435 : vector<16x2xf32> to vector<1x16x2xf32>
    tpu.vector_store %arg8[%c1_108, %c1_109, %c17_110], %465 {strides = array<i32>} : memref<4x24x128xf32, #tpu.memory_space<vmem>>, vector<1x16x2xf32>,
    %c2_111 = arith.constant 2 : index
    %c0_112 = arith.constant 0 : index
    %c0_113 = arith.constant 0 : index
    %466 = vector.load %arg8[%c2_111, %c0_112, %c0_113] : memref<4x24x128xf32, #tpu.memory_space<vmem>>, vector<1x1x36xf32>
    %467 = vector.shape_cast %466 : vector<1x1x36xf32> to vector<1x36xf32>
    %468 = vector.shape_cast %433 : vector<1x36xf32> to vector<1x1x36xf32>
    tpu.vector_store %arg8[%c2_111, %c0_112, %c0_113], %468 {strides = array<i32>} : memref<4x24x128xf32, #tpu.memory_space<vmem>>, vector<1x1x36xf32>,
    %c2_114 = arith.constant 2 : index
    %c17_115 = arith.constant 17 : index
    %c0_116 = arith.constant 0 : index
    %469 = vector.load %arg8[%c2_114, %c17_115, %c0_116] : memref<4x24x128xf32, #tpu.memory_space<vmem>>, vector<1x1x36xf32>
    %470 = vector.shape_cast %469 : vector<1x1x36xf32> to vector<1x36xf32>
    %471 = vector.shape_cast %433 : vector<1x36xf32> to vector<1x1x36xf32>
    tpu.vector_store %arg8[%c2_114, %c17_115, %c0_116], %471 {strides = array<i32>} : memref<4x24x128xf32, #tpu.memory_space<vmem>>, vector<1x1x36xf32>,
    %c2_117 = arith.constant 2 : index
    %c1_118 = arith.constant 1 : index
    %c0_119 = arith.constant 0 : index
    %472 = vector.load %arg8[%c2_117, %c1_118, %c0_119] : memref<4x24x128xf32, #tpu.memory_space<vmem>>, vector<1x16x1xf32>
    %473 = vector.shape_cast %472 : vector<1x16x1xf32> to vector<16x1xf32>
    %474 = vector.shape_cast %434 : vector<16x1xf32> to vector<1x16x1xf32>
    tpu.vector_store %arg8[%c2_117, %c1_118, %c0_119], %474 {strides = array<i32>} : memref<4x24x128xf32, #tpu.memory_space<vmem>>, vector<1x16x1xf32>,
    %c2_120 = arith.constant 2 : index
    %c1_121 = arith.constant 1 : index
    %c35_122 = arith.constant 35 : index
    %475 = vector.load %arg8[%c2_120, %c1_121, %c35_122] : memref<4x24x128xf32, #tpu.memory_space<vmem>>, vector<1x16x1xf32>
    %476 = vector.shape_cast %475 : vector<1x16x1xf32> to vector<16x1xf32>
    %477 = vector.shape_cast %434 : vector<16x1xf32> to vector<1x16x1xf32>
    tpu.vector_store %arg8[%c2_120, %c1_121, %c35_122], %477 {strides = array<i32>} : memref<4x24x128xf32, #tpu.memory_space<vmem>>, vector<1x16x1xf32>,
    %c2_123 = arith.constant 2 : index
    %c1_124 = arith.constant 1 : index
    %c17_125 = arith.constant 17 : index
    %478 = vector.load %arg8[%c2_123, %c1_124, %c17_125] : memref<4x24x128xf32, #tpu.memory_space<vmem>>, vector<1x16x2xf32>
    %479 = vector.shape_cast %478 : vector<1x16x2xf32> to vector<16x2xf32>
    %480 = vector.shape_cast %435 : vector<16x2xf32> to vector<1x16x2xf32>
    tpu.vector_store %arg8[%c2_123, %c1_124, %c17_125], %480 {strides = array<i32>} : memref<4x24x128xf32, #tpu.memory_space<vmem>>, vector<1x16x2xf32>,
    %c3_126 = arith.constant 3 : index
    %c0_127 = arith.constant 0 : index
    %c0_128 = arith.constant 0 : index
    %481 = vector.load %arg8[%c3_126, %c0_127, %c0_128] : memref<4x24x128xf32, #tpu.memory_space<vmem>>, vector<1x1x36xf32>
    %482 = vector.shape_cast %481 : vector<1x1x36xf32> to vector<1x36xf32>
    %483 = vector.shape_cast %433 : vector<1x36xf32> to vector<1x1x36xf32>
    tpu.vector_store %arg8[%c3_126, %c0_127, %c0_128], %483 {strides = array<i32>} : memref<4x24x128xf32, #tpu.memory_space<vmem>>, vector<1x1x36xf32>,
    %c3_129 = arith.constant 3 : index
    %c17_130 = arith.constant 17 : index
    %c0_131 = arith.constant 0 : index
    %484 = vector.load %arg8[%c3_129, %c17_130, %c0_131] : memref<4x24x128xf32, #tpu.memory_space<vmem>>, vector<1x1x36xf32>
    %485 = vector.shape_cast %484 : vector<1x1x36xf32> to vector<1x36xf32>
    %486 = vector.shape_cast %433 : vector<1x36xf32> to vector<1x1x36xf32>
    tpu.vector_store %arg8[%c3_129, %c17_130, %c0_131], %486 {strides = array<i32>} : memref<4x24x128xf32, #tpu.memory_space<vmem>>, vector<1x1x36xf32>,
    %c3_132 = arith.constant 3 : index
    %c1_133 = arith.constant 1 : index
    %c0_134 = arith.constant 0 : index
    %487 = vector.load %arg8[%c3_132, %c1_133, %c0_134] : memref<4x24x128xf32, #tpu.memory_space<vmem>>, vector<1x16x1xf32>
    %488 = vector.shape_cast %487 : vector<1x16x1xf32> to vector<16x1xf32>
    %489 = vector.shape_cast %434 : vector<16x1xf32> to vector<1x16x1xf32>
    tpu.vector_store %arg8[%c3_132, %c1_133, %c0_134], %489 {strides = array<i32>} : memref<4x24x128xf32, #tpu.memory_space<vmem>>, vector<1x16x1xf32>,
    %c3_135 = arith.constant 3 : index
    %c1_136 = arith.constant 1 : index
    %c35_137 = arith.constant 35 : index
    %490 = vector.load %arg8[%c3_135, %c1_136, %c35_137] : memref<4x24x128xf32, #tpu.memory_space<vmem>>, vector<1x16x1xf32>
    %491 = vector.shape_cast %490 : vector<1x16x1xf32> to vector<16x1xf32>
    %492 = vector.shape_cast %434 : vector<16x1xf32> to vector<1x16x1xf32>
    tpu.vector_store %arg8[%c3_135, %c1_136, %c35_137], %492 {strides = array<i32>} : memref<4x24x128xf32, #tpu.memory_space<vmem>>, vector<1x16x1xf32>,
    %c3_138 = arith.constant 3 : index
    %c1_139 = arith.constant 1 : index
    %c17_140 = arith.constant 17 : index
    %493 = vector.load %arg8[%c3_138, %c1_139, %c17_140] : memref<4x24x128xf32, #tpu.memory_space<vmem>>, vector<1x16x2xf32>
    %494 = vector.shape_cast %493 : vector<1x16x2xf32> to vector<16x2xf32>
    %495 = vector.shape_cast %435 : vector<16x2xf32> to vector<1x16x2xf32>
    tpu.vector_store %arg8[%c3_138, %c1_139, %c17_140], %495 {strides = array<i32>} : memref<4x24x128xf32, #tpu.memory_space<vmem>>, vector<1x16x2xf32>,
    %cst_141 = arith.constant 0.000000e+00 : f32
    %496 = vector.broadcast %cst_141 : f32 to vector<16x34xf32>
    %c0_142 = arith.constant 0 : index
    %497 = memref.load %arg4[%c0_142] : memref<3xf32, #tpu.memory_space<smem>>
    %498 = vector.broadcast %497 : f32 to vector<16x34xf32>
    %499 = arith.addf %496, %498 : vector<16x34xf32>
    %cst_143 = arith.constant 0.000000e+00 : f32
    %500 = vector.broadcast %cst_143 : f32 to vector<16x34xf32>
    %c1_144 = arith.constant 1 : index
    %501 = memref.load %arg4[%c1_144] : memref<3xf32, #tpu.memory_space<smem>>
    %502 = vector.broadcast %501 : f32 to vector<16x34xf32>
    %503 = arith.addf %500, %502 : vector<16x34xf32>
    %cst_145 = arith.constant 0.000000e+00 : f32
    %504 = vector.broadcast %cst_145 : f32 to vector<16x34xf32>
    %c2_146 = arith.constant 2 : index
    %505 = memref.load %arg4[%c2_146] : memref<3xf32, #tpu.memory_space<smem>>
    %506 = vector.broadcast %505 : f32 to vector<16x34xf32>
    %507 = arith.addf %504, %506 : vector<16x34xf32>
    %c0_147 = arith.constant 0 : index
    %c0_148 = arith.constant 0 : index
    %c0_149 = arith.constant 0 : index
    %508 = vector.load %arg8[%c0_147, %c0_148, %c0_149] : memref<4x24x128xf32, #tpu.memory_space<vmem>>, vector<1x18x34xf32>
    %509 = vector.shape_cast %508 : vector<1x18x34xf32> to vector<18x34xf32>
    %510 = vector.extract_strided_slice %509 {offsets = [0, 0], sizes = [16, 34], strides = [1, 1]} : vector<18x34xf32> to vector<16x34xf32>
    %c0_150 = arith.constant 0 : index
    %511 = memref.load %arg3[%c0_150] : memref<108xf32, #tpu.memory_space<smem>>
    %512 = vector.broadcast %511 : f32 to vector<16x34xf32>
    %513 = arith.mulf %512, %510 : vector<16x34xf32>
    %514 = arith.addf %499, %513 : vector<16x34xf32>
    %c36_151 = arith.constant 36 : index
    %515 = memref.load %arg3[%c36_151] : memref<108xf32, #tpu.memory_space<smem>>
    %516 = vector.broadcast %515 : f32 to vector<16x34xf32>
    %517 = arith.mulf %516, %510 : vector<16x34xf32>
    %518 = arith.addf %503, %517 : vector<16x34xf32>
    %c72_152 = arith.constant 72 : index
    %519 = memref.load %arg3[%c72_152] : memref<108xf32, #tpu.memory_space<smem>>
    %520 = vector.broadcast %519 : f32 to vector<16x34xf32>
    %521 = arith.mulf %520, %510 : vector<16x34xf32>
    %522 = arith.addf %507, %521 : vector<16x34xf32>
    %523 = vector.extract_strided_slice %509 {offsets = [1, 0], sizes = [16, 34], strides = [1, 1]} : vector<18x34xf32> to vector<16x34xf32>
    %c3_153 = arith.constant 3 : index
    %524 = memref.load %arg3[%c3_153] : memref<108xf32, #tpu.memory_space<smem>>
    %525 = vector.broadcast %524 : f32 to vector<16x34xf32>
    %526 = arith.mulf %525, %523 : vector<16x34xf32>
    %527 = arith.addf %514, %526 : vector<16x34xf32>
    %c39_154 = arith.constant 39 : index
    %528 = memref.load %arg3[%c39_154] : memref<108xf32, #tpu.memory_space<smem>>
    %529 = vector.broadcast %528 : f32 to vector<16x34xf32>
    %530 = arith.mulf %529, %523 : vector<16x34xf32>
    %531 = arith.addf %518, %530 : vector<16x34xf32>
    %c75_155 = arith.constant 75 : index
    %532 = memref.load %arg3[%c75_155] : memref<108xf32, #tpu.memory_space<smem>>
    %533 = vector.broadcast %532 : f32 to vector<16x34xf32>
    %534 = arith.mulf %533, %523 : vector<16x34xf32>
    %535 = arith.addf %522, %534 : vector<16x34xf32>
    %536 = vector.extract_strided_slice %509 {offsets = [2, 0], sizes = [16, 34], strides = [1, 1]} : vector<18x34xf32> to vector<16x34xf32>
    %c6_156 = arith.constant 6 : index
    %537 = memref.load %arg3[%c6_156] : memref<108xf32, #tpu.memory_space<smem>>
    %538 = vector.broadcast %537 : f32 to vector<16x34xf32>
    %539 = arith.mulf %538, %536 : vector<16x34xf32>
    %540 = arith.addf %527, %539 : vector<16x34xf32>
    %c42_157 = arith.constant 42 : index
    %541 = memref.load %arg3[%c42_157] : memref<108xf32, #tpu.memory_space<smem>>
    %542 = vector.broadcast %541 : f32 to vector<16x34xf32>
    %543 = arith.mulf %542, %536 : vector<16x34xf32>
    %544 = arith.addf %531, %543 : vector<16x34xf32>
    %c78_158 = arith.constant 78 : index
    %545 = memref.load %arg3[%c78_158] : memref<108xf32, #tpu.memory_space<smem>>
    %546 = vector.broadcast %545 : f32 to vector<16x34xf32>
    %547 = arith.mulf %546, %536 : vector<16x34xf32>
    %548 = arith.addf %535, %547 : vector<16x34xf32>
    %c0_159 = arith.constant 0 : index
    %c0_160 = arith.constant 0 : index
    %c1_161 = arith.constant 1 : index
    %549 = vector.load %arg8[%c0_159, %c0_160, %c1_161] : memref<4x24x128xf32, #tpu.memory_space<vmem>>, vector<1x18x34xf32>
    %550 = vector.shape_cast %549 : vector<1x18x34xf32> to vector<18x34xf32>
    %551 = vector.extract_strided_slice %550 {offsets = [0, 0], sizes = [16, 34], strides = [1, 1]} : vector<18x34xf32> to vector<16x34xf32>
    %c1_162 = arith.constant 1 : index
    %552 = memref.load %arg3[%c1_162] : memref<108xf32, #tpu.memory_space<smem>>
    %553 = vector.broadcast %552 : f32 to vector<16x34xf32>
    %554 = arith.mulf %553, %551 : vector<16x34xf32>
    %555 = arith.addf %540, %554 : vector<16x34xf32>
    %c37_163 = arith.constant 37 : index
    %556 = memref.load %arg3[%c37_163] : memref<108xf32, #tpu.memory_space<smem>>
    %557 = vector.broadcast %556 : f32 to vector<16x34xf32>
    %558 = arith.mulf %557, %551 : vector<16x34xf32>
    %559 = arith.addf %544, %558 : vector<16x34xf32>
    %c73_164 = arith.constant 73 : index
    %560 = memref.load %arg3[%c73_164] : memref<108xf32, #tpu.memory_space<smem>>
    %561 = vector.broadcast %560 : f32 to vector<16x34xf32>
    %562 = arith.mulf %561, %551 : vector<16x34xf32>
    %563 = arith.addf %548, %562 : vector<16x34xf32>
    %564 = vector.extract_strided_slice %550 {offsets = [1, 0], sizes = [16, 34], strides = [1, 1]} : vector<18x34xf32> to vector<16x34xf32>
    %c4_165 = arith.constant 4 : index
    %565 = memref.load %arg3[%c4_165] : memref<108xf32, #tpu.memory_space<smem>>
    %566 = vector.broadcast %565 : f32 to vector<16x34xf32>
    %567 = arith.mulf %566, %564 : vector<16x34xf32>
    %568 = arith.addf %555, %567 : vector<16x34xf32>
    %c40_166 = arith.constant 40 : index
    %569 = memref.load %arg3[%c40_166] : memref<108xf32, #tpu.memory_space<smem>>
    %570 = vector.broadcast %569 : f32 to vector<16x34xf32>
    %571 = arith.mulf %570, %564 : vector<16x34xf32>
    %572 = arith.addf %559, %571 : vector<16x34xf32>
    %c76_167 = arith.constant 76 : index
    %573 = memref.load %arg3[%c76_167] : memref<108xf32, #tpu.memory_space<smem>>
    %574 = vector.broadcast %573 : f32 to vector<16x34xf32>
    %575 = arith.mulf %574, %564 : vector<16x34xf32>
    %576 = arith.addf %563, %575 : vector<16x34xf32>
    %577 = vector.extract_strided_slice %550 {offsets = [2, 0], sizes = [16, 34], strides = [1, 1]} : vector<18x34xf32> to vector<16x34xf32>
    %c7_168 = arith.constant 7 : index
    %578 = memref.load %arg3[%c7_168] : memref<108xf32, #tpu.memory_space<smem>>
    %579 = vector.broadcast %578 : f32 to vector<16x34xf32>
    %580 = arith.mulf %579, %577 : vector<16x34xf32>
    %581 = arith.addf %568, %580 : vector<16x34xf32>
    %c43_169 = arith.constant 43 : index
    %582 = memref.load %arg3[%c43_169] : memref<108xf32, #tpu.memory_space<smem>>
    %583 = vector.broadcast %582 : f32 to vector<16x34xf32>
    %584 = arith.mulf %583, %577 : vector<16x34xf32>
    %585 = arith.addf %572, %584 : vector<16x34xf32>
    %c79_170 = arith.constant 79 : index
    %586 = memref.load %arg3[%c79_170] : memref<108xf32, #tpu.memory_space<smem>>
    %587 = vector.broadcast %586 : f32 to vector<16x34xf32>
    %588 = arith.mulf %587, %577 : vector<16x34xf32>
    %589 = arith.addf %576, %588 : vector<16x34xf32>
    %c0_171 = arith.constant 0 : index
    %c0_172 = arith.constant 0 : index
    %c2_173 = arith.constant 2 : index
    %590 = vector.load %arg8[%c0_171, %c0_172, %c2_173] : memref<4x24x128xf32, #tpu.memory_space<vmem>>, vector<1x18x34xf32>
    %591 = vector.shape_cast %590 : vector<1x18x34xf32> to vector<18x34xf32>
    %592 = vector.extract_strided_slice %591 {offsets = [0, 0], sizes = [16, 34], strides = [1, 1]} : vector<18x34xf32> to vector<16x34xf32>
    %c2_174 = arith.constant 2 : index
    %593 = memref.load %arg3[%c2_174] : memref<108xf32, #tpu.memory_space<smem>>
    %594 = vector.broadcast %593 : f32 to vector<16x34xf32>
    %595 = arith.mulf %594, %592 : vector<16x34xf32>
    %596 = arith.addf %581, %595 : vector<16x34xf32>
    %c38_175 = arith.constant 38 : index
    %597 = memref.load %arg3[%c38_175] : memref<108xf32, #tpu.memory_space<smem>>
    %598 = vector.broadcast %597 : f32 to vector<16x34xf32>
    %599 = arith.mulf %598, %592 : vector<16x34xf32>
    %600 = arith.addf %585, %599 : vector<16x34xf32>
    %c74_176 = arith.constant 74 : index
    %601 = memref.load %arg3[%c74_176] : memref<108xf32, #tpu.memory_space<smem>>
    %602 = vector.broadcast %601 : f32 to vector<16x34xf32>
    %603 = arith.mulf %602, %592 : vector<16x34xf32>
    %604 = arith.addf %589, %603 : vector<16x34xf32>
    %605 = vector.extract_strided_slice %591 {offsets = [1, 0], sizes = [16, 34], strides = [1, 1]} : vector<18x34xf32> to vector<16x34xf32>
    %c5_177 = arith.constant 5 : index
    %606 = memref.load %arg3[%c5_177] : memref<108xf32, #tpu.memory_space<smem>>
    %607 = vector.broadcast %606 : f32 to vector<16x34xf32>
    %608 = arith.mulf %607, %605 : vector<16x34xf32>
    %609 = arith.addf %596, %608 : vector<16x34xf32>
    %c41_178 = arith.constant 41 : index
    %610 = memref.load %arg3[%c41_178] : memref<108xf32, #tpu.memory_space<smem>>
    %611 = vector.broadcast %610 : f32 to vector<16x34xf32>
    %612 = arith.mulf %611, %605 : vector<16x34xf32>
    %613 = arith.addf %600, %612 : vector<16x34xf32>
    %c77_179 = arith.constant 77 : index
    %614 = memref.load %arg3[%c77_179] : memref<108xf32, #tpu.memory_space<smem>>
    %615 = vector.broadcast %614 : f32 to vector<16x34xf32>
    %616 = arith.mulf %615, %605 : vector<16x34xf32>
    %617 = arith.addf %604, %616 : vector<16x34xf32>
    %618 = vector.extract_strided_slice %591 {offsets = [2, 0], sizes = [16, 34], strides = [1, 1]} : vector<18x34xf32> to vector<16x34xf32>
    %c8_180 = arith.constant 8 : index
    %619 = memref.load %arg3[%c8_180] : memref<108xf32, #tpu.memory_space<smem>>
    %620 = vector.broadcast %619 : f32 to vector<16x34xf32>
    %621 = arith.mulf %620, %618 : vector<16x34xf32>
    %622 = arith.addf %609, %621 : vector<16x34xf32>
    %c44_181 = arith.constant 44 : index
    %623 = memref.load %arg3[%c44_181] : memref<108xf32, #tpu.memory_space<smem>>
    %624 = vector.broadcast %623 : f32 to vector<16x34xf32>
    %625 = arith.mulf %624, %618 : vector<16x34xf32>
    %626 = arith.addf %613, %625 : vector<16x34xf32>
    %c80_182 = arith.constant 80 : index
    %627 = memref.load %arg3[%c80_182] : memref<108xf32, #tpu.memory_space<smem>>
    %628 = vector.broadcast %627 : f32 to vector<16x34xf32>
    %629 = arith.mulf %628, %618 : vector<16x34xf32>
    %630 = arith.addf %617, %629 : vector<16x34xf32>
    %c1_183 = arith.constant 1 : index
    %c0_184 = arith.constant 0 : index
    %c0_185 = arith.constant 0 : index
    %631 = vector.load %arg8[%c1_183, %c0_184, %c0_185] : memref<4x24x128xf32, #tpu.memory_space<vmem>>, vector<1x18x34xf32>
    %632 = vector.shape_cast %631 : vector<1x18x34xf32> to vector<18x34xf32>
    %633 = vector.extract_strided_slice %632 {offsets = [0, 0], sizes = [16, 34], strides = [1, 1]} : vector<18x34xf32> to vector<16x34xf32>
    %c9_186 = arith.constant 9 : index
    %634 = memref.load %arg3[%c9_186] : memref<108xf32, #tpu.memory_space<smem>>
    %635 = vector.broadcast %634 : f32 to vector<16x34xf32>
    %636 = arith.mulf %635, %633 : vector<16x34xf32>
    %637 = arith.addf %622, %636 : vector<16x34xf32>
    %c45_187 = arith.constant 45 : index
    %638 = memref.load %arg3[%c45_187] : memref<108xf32, #tpu.memory_space<smem>>
    %639 = vector.broadcast %638 : f32 to vector<16x34xf32>
    %640 = arith.mulf %639, %633 : vector<16x34xf32>
    %641 = arith.addf %626, %640 : vector<16x34xf32>
    %c81 = arith.constant 81 : index
    %642 = memref.load %arg3[%c81] : memref<108xf32, #tpu.memory_space<smem>>
    %643 = vector.broadcast %642 : f32 to vector<16x34xf32>
    %644 = arith.mulf %643, %633 : vector<16x34xf32>
    %645 = arith.addf %630, %644 : vector<16x34xf32>
    %646 = vector.extract_strided_slice %632 {offsets = [1, 0], sizes = [16, 34], strides = [1, 1]} : vector<18x34xf32> to vector<16x34xf32>
    %c12_188 = arith.constant 12 : index
    %647 = memref.load %arg3[%c12_188] : memref<108xf32, #tpu.memory_space<smem>>
    %648 = vector.broadcast %647 : f32 to vector<16x34xf32>
    %649 = arith.mulf %648, %646 : vector<16x34xf32>
    %650 = arith.addf %637, %649 : vector<16x34xf32>
    %c48_189 = arith.constant 48 : index
    %651 = memref.load %arg3[%c48_189] : memref<108xf32, #tpu.memory_space<smem>>
    %652 = vector.broadcast %651 : f32 to vector<16x34xf32>
    %653 = arith.mulf %652, %646 : vector<16x34xf32>
    %654 = arith.addf %641, %653 : vector<16x34xf32>
    %c84 = arith.constant 84 : index
    %655 = memref.load %arg3[%c84] : memref<108xf32, #tpu.memory_space<smem>>
    %656 = vector.broadcast %655 : f32 to vector<16x34xf32>
    %657 = arith.mulf %656, %646 : vector<16x34xf32>
    %658 = arith.addf %645, %657 : vector<16x34xf32>
    %659 = vector.extract_strided_slice %632 {offsets = [2, 0], sizes = [16, 34], strides = [1, 1]} : vector<18x34xf32> to vector<16x34xf32>
    %c15_190 = arith.constant 15 : index
    %660 = memref.load %arg3[%c15_190] : memref<108xf32, #tpu.memory_space<smem>>
    %661 = vector.broadcast %660 : f32 to vector<16x34xf32>
    %662 = arith.mulf %661, %659 : vector<16x34xf32>
    %663 = arith.addf %650, %662 : vector<16x34xf32>
    %c51_191 = arith.constant 51 : index
    %664 = memref.load %arg3[%c51_191] : memref<108xf32, #tpu.memory_space<smem>>
    %665 = vector.broadcast %664 : f32 to vector<16x34xf32>
    %666 = arith.mulf %665, %659 : vector<16x34xf32>
    %667 = arith.addf %654, %666 : vector<16x34xf32>
    %c87 = arith.constant 87 : index
    %668 = memref.load %arg3[%c87] : memref<108xf32, #tpu.memory_space<smem>>
    %669 = vector.broadcast %668 : f32 to vector<16x34xf32>
    %670 = arith.mulf %669, %659 : vector<16x34xf32>
    %671 = arith.addf %658, %670 : vector<16x34xf32>
    %c1_192 = arith.constant 1 : index
    %c0_193 = arith.constant 0 : index
    %c1_194 = arith.constant 1 : index
    %672 = vector.load %arg8[%c1_192, %c0_193, %c1_194] : memref<4x24x128xf32, #tpu.memory_space<vmem>>, vector<1x18x34xf32>
    %673 = vector.shape_cast %672 : vector<1x18x34xf32> to vector<18x34xf32>
    %674 = vector.extract_strided_slice %673 {offsets = [0, 0], sizes = [16, 34], strides = [1, 1]} : vector<18x34xf32> to vector<16x34xf32>
    %c10_195 = arith.constant 10 : index
    %675 = memref.load %arg3[%c10_195] : memref<108xf32, #tpu.memory_space<smem>>
    %676 = vector.broadcast %675 : f32 to vector<16x34xf32>
    %677 = arith.mulf %676, %674 : vector<16x34xf32>
    %678 = arith.addf %663, %677 : vector<16x34xf32>
    %c46_196 = arith.constant 46 : index
    %679 = memref.load %arg3[%c46_196] : memref<108xf32, #tpu.memory_space<smem>>
    %680 = vector.broadcast %679 : f32 to vector<16x34xf32>
    %681 = arith.mulf %680, %674 : vector<16x34xf32>
    %682 = arith.addf %667, %681 : vector<16x34xf32>
    %c82 = arith.constant 82 : index
    %683 = memref.load %arg3[%c82] : memref<108xf32, #tpu.memory_space<smem>>
    %684 = vector.broadcast %683 : f32 to vector<16x34xf32>
    %685 = arith.mulf %684, %674 : vector<16x34xf32>
    %686 = arith.addf %671, %685 : vector<16x34xf32>
    %687 = vector.extract_strided_slice %673 {offsets = [1, 0], sizes = [16, 34], strides = [1, 1]} : vector<18x34xf32> to vector<16x34xf32>
    %c13_197 = arith.constant 13 : index
    %688 = memref.load %arg3[%c13_197] : memref<108xf32, #tpu.memory_space<smem>>
    %689 = vector.broadcast %688 : f32 to vector<16x34xf32>
    %690 = arith.mulf %689, %687 : vector<16x34xf32>
    %691 = arith.addf %678, %690 : vector<16x34xf32>
    %c49_198 = arith.constant 49 : index
    %692 = memref.load %arg3[%c49_198] : memref<108xf32, #tpu.memory_space<smem>>
    %693 = vector.broadcast %692 : f32 to vector<16x34xf32>
    %694 = arith.mulf %693, %687 : vector<16x34xf32>
    %695 = arith.addf %682, %694 : vector<16x34xf32>
    %c85 = arith.constant 85 : index
    %696 = memref.load %arg3[%c85] : memref<108xf32, #tpu.memory_space<smem>>
    %697 = vector.broadcast %696 : f32 to vector<16x34xf32>
    %698 = arith.mulf %697, %687 : vector<16x34xf32>
    %699 = arith.addf %686, %698 : vector<16x34xf32>
    %700 = vector.extract_strided_slice %673 {offsets = [2, 0], sizes = [16, 34], strides = [1, 1]} : vector<18x34xf32> to vector<16x34xf32>
    %c16_199 = arith.constant 16 : index
    %701 = memref.load %arg3[%c16_199] : memref<108xf32, #tpu.memory_space<smem>>
    %702 = vector.broadcast %701 : f32 to vector<16x34xf32>
    %703 = arith.mulf %702, %700 : vector<16x34xf32>
    %704 = arith.addf %691, %703 : vector<16x34xf32>
    %c52_200 = arith.constant 52 : index
    %705 = memref.load %arg3[%c52_200] : memref<108xf32, #tpu.memory_space<smem>>
    %706 = vector.broadcast %705 : f32 to vector<16x34xf32>
    %707 = arith.mulf %706, %700 : vector<16x34xf32>
    %708 = arith.addf %695, %707 : vector<16x34xf32>
    %c88 = arith.constant 88 : index
    %709 = memref.load %arg3[%c88] : memref<108xf32, #tpu.memory_space<smem>>
    %710 = vector.broadcast %709 : f32 to vector<16x34xf32>
    %711 = arith.mulf %710, %700 : vector<16x34xf32>
    %712 = arith.addf %699, %711 : vector<16x34xf32>
    %c1_201 = arith.constant 1 : index
    %c0_202 = arith.constant 0 : index
    %c2_203 = arith.constant 2 : index
    %713 = vector.load %arg8[%c1_201, %c0_202, %c2_203] : memref<4x24x128xf32, #tpu.memory_space<vmem>>, vector<1x18x34xf32>
    %714 = vector.shape_cast %713 : vector<1x18x34xf32> to vector<18x34xf32>
    %715 = vector.extract_strided_slice %714 {offsets = [0, 0], sizes = [16, 34], strides = [1, 1]} : vector<18x34xf32> to vector<16x34xf32>
    %c11_204 = arith.constant 11 : index
    %716 = memref.load %arg3[%c11_204] : memref<108xf32, #tpu.memory_space<smem>>
    %717 = vector.broadcast %716 : f32 to vector<16x34xf32>
    %718 = arith.mulf %717, %715 : vector<16x34xf32>
    %719 = arith.addf %704, %718 : vector<16x34xf32>
    %c47_205 = arith.constant 47 : index
    %720 = memref.load %arg3[%c47_205] : memref<108xf32, #tpu.memory_space<smem>>
    %721 = vector.broadcast %720 : f32 to vector<16x34xf32>
    %722 = arith.mulf %721, %715 : vector<16x34xf32>
    %723 = arith.addf %708, %722 : vector<16x34xf32>
    %c83 = arith.constant 83 : index
    %724 = memref.load %arg3[%c83] : memref<108xf32, #tpu.memory_space<smem>>
    %725 = vector.broadcast %724 : f32 to vector<16x34xf32>
    %726 = arith.mulf %725, %715 : vector<16x34xf32>
    %727 = arith.addf %712, %726 : vector<16x34xf32>
    %728 = vector.extract_strided_slice %714 {offsets = [1, 0], sizes = [16, 34], strides = [1, 1]} : vector<18x34xf32> to vector<16x34xf32>
    %c14_206 = arith.constant 14 : index
    %729 = memref.load %arg3[%c14_206] : memref<108xf32, #tpu.memory_space<smem>>
    %730 = vector.broadcast %729 : f32 to vector<16x34xf32>
    %731 = arith.mulf %730, %728 : vector<16x34xf32>
    %732 = arith.addf %719, %731 : vector<16x34xf32>
    %c50_207 = arith.constant 50 : index
    %733 = memref.load %arg3[%c50_207] : memref<108xf32, #tpu.memory_space<smem>>
    %734 = vector.broadcast %733 : f32 to vector<16x34xf32>
    %735 = arith.mulf %734, %728 : vector<16x34xf32>
    %736 = arith.addf %723, %735 : vector<16x34xf32>
    %c86 = arith.constant 86 : index
    %737 = memref.load %arg3[%c86] : memref<108xf32, #tpu.memory_space<smem>>
    %738 = vector.broadcast %737 : f32 to vector<16x34xf32>
    %739 = arith.mulf %738, %728 : vector<16x34xf32>
    %740 = arith.addf %727, %739 : vector<16x34xf32>
    %741 = vector.extract_strided_slice %714 {offsets = [2, 0], sizes = [16, 34], strides = [1, 1]} : vector<18x34xf32> to vector<16x34xf32>
    %c17_208 = arith.constant 17 : index
    %742 = memref.load %arg3[%c17_208] : memref<108xf32, #tpu.memory_space<smem>>
    %743 = vector.broadcast %742 : f32 to vector<16x34xf32>
    %744 = arith.mulf %743, %741 : vector<16x34xf32>
    %745 = arith.addf %732, %744 : vector<16x34xf32>
    %c53_209 = arith.constant 53 : index
    %746 = memref.load %arg3[%c53_209] : memref<108xf32, #tpu.memory_space<smem>>
    %747 = vector.broadcast %746 : f32 to vector<16x34xf32>
    %748 = arith.mulf %747, %741 : vector<16x34xf32>
    %749 = arith.addf %736, %748 : vector<16x34xf32>
    %c89 = arith.constant 89 : index
    %750 = memref.load %arg3[%c89] : memref<108xf32, #tpu.memory_space<smem>>
    %751 = vector.broadcast %750 : f32 to vector<16x34xf32>
    %752 = arith.mulf %751, %741 : vector<16x34xf32>
    %753 = arith.addf %740, %752 : vector<16x34xf32>
    %c2_210 = arith.constant 2 : index
    %c0_211 = arith.constant 0 : index
    %c0_212 = arith.constant 0 : index
    %754 = vector.load %arg8[%c2_210, %c0_211, %c0_212] : memref<4x24x128xf32, #tpu.memory_space<vmem>>, vector<1x18x34xf32>
    %755 = vector.shape_cast %754 : vector<1x18x34xf32> to vector<18x34xf32>
    %756 = vector.extract_strided_slice %755 {offsets = [0, 0], sizes = [16, 34], strides = [1, 1]} : vector<18x34xf32> to vector<16x34xf32>
    %c18_213 = arith.constant 18 : index
    %757 = memref.load %arg3[%c18_213] : memref<108xf32, #tpu.memory_space<smem>>
    %758 = vector.broadcast %757 : f32 to vector<16x34xf32>
    %759 = arith.mulf %758, %756 : vector<16x34xf32>
    %760 = arith.addf %745, %759 : vector<16x34xf32>
    %c54_214 = arith.constant 54 : index
    %761 = memref.load %arg3[%c54_214] : memref<108xf32, #tpu.memory_space<smem>>
    %762 = vector.broadcast %761 : f32 to vector<16x34xf32>
    %763 = arith.mulf %762, %756 : vector<16x34xf32>
    %764 = arith.addf %749, %763 : vector<16x34xf32>
    %c90 = arith.constant 90 : index
    %765 = memref.load %arg3[%c90] : memref<108xf32, #tpu.memory_space<smem>>
    %766 = vector.broadcast %765 : f32 to vector<16x34xf32>
    %767 = arith.mulf %766, %756 : vector<16x34xf32>
    %768 = arith.addf %753, %767 : vector<16x34xf32>
    %769 = vector.extract_strided_slice %755 {offsets = [1, 0], sizes = [16, 34], strides = [1, 1]} : vector<18x34xf32> to vector<16x34xf32>
    %c21_215 = arith.constant 21 : index
    %770 = memref.load %arg3[%c21_215] : memref<108xf32, #tpu.memory_space<smem>>
    %771 = vector.broadcast %770 : f32 to vector<16x34xf32>
    %772 = arith.mulf %771, %769 : vector<16x34xf32>
    %773 = arith.addf %760, %772 : vector<16x34xf32>
    %c57_216 = arith.constant 57 : index
    %774 = memref.load %arg3[%c57_216] : memref<108xf32, #tpu.memory_space<smem>>
    %775 = vector.broadcast %774 : f32 to vector<16x34xf32>
    %776 = arith.mulf %775, %769 : vector<16x34xf32>
    %777 = arith.addf %764, %776 : vector<16x34xf32>
    %c93 = arith.constant 93 : index
    %778 = memref.load %arg3[%c93] : memref<108xf32, #tpu.memory_space<smem>>
    %779 = vector.broadcast %778 : f32 to vector<16x34xf32>
    %780 = arith.mulf %779, %769 : vector<16x34xf32>
    %781 = arith.addf %768, %780 : vector<16x34xf32>
    %782 = vector.extract_strided_slice %755 {offsets = [2, 0], sizes = [16, 34], strides = [1, 1]} : vector<18x34xf32> to vector<16x34xf32>
    %c24_217 = arith.constant 24 : index
    %783 = memref.load %arg3[%c24_217] : memref<108xf32, #tpu.memory_space<smem>>
    %784 = vector.broadcast %783 : f32 to vector<16x34xf32>
    %785 = arith.mulf %784, %782 : vector<16x34xf32>
    %786 = arith.addf %773, %785 : vector<16x34xf32>
    %c60_218 = arith.constant 60 : index
    %787 = memref.load %arg3[%c60_218] : memref<108xf32, #tpu.memory_space<smem>>
    %788 = vector.broadcast %787 : f32 to vector<16x34xf32>
    %789 = arith.mulf %788, %782 : vector<16x34xf32>
    %790 = arith.addf %777, %789 : vector<16x34xf32>
    %c96 = arith.constant 96 : index
    %791 = memref.load %arg3[%c96] : memref<108xf32, #tpu.memory_space<smem>>
    %792 = vector.broadcast %791 : f32 to vector<16x34xf32>
    %793 = arith.mulf %792, %782 : vector<16x34xf32>
    %794 = arith.addf %781, %793 : vector<16x34xf32>
    %c2_219 = arith.constant 2 : index
    %c0_220 = arith.constant 0 : index
    %c1_221 = arith.constant 1 : index
    %795 = vector.load %arg8[%c2_219, %c0_220, %c1_221] : memref<4x24x128xf32, #tpu.memory_space<vmem>>, vector<1x18x34xf32>
    %796 = vector.shape_cast %795 : vector<1x18x34xf32> to vector<18x34xf32>
    %797 = vector.extract_strided_slice %796 {offsets = [0, 0], sizes = [16, 34], strides = [1, 1]} : vector<18x34xf32> to vector<16x34xf32>
    %c19_222 = arith.constant 19 : index
    %798 = memref.load %arg3[%c19_222] : memref<108xf32, #tpu.memory_space<smem>>
    %799 = vector.broadcast %798 : f32 to vector<16x34xf32>
    %800 = arith.mulf %799, %797 : vector<16x34xf32>
    %801 = arith.addf %786, %800 : vector<16x34xf32>
    %c55_223 = arith.constant 55 : index
    %802 = memref.load %arg3[%c55_223] : memref<108xf32, #tpu.memory_space<smem>>
    %803 = vector.broadcast %802 : f32 to vector<16x34xf32>
    %804 = arith.mulf %803, %797 : vector<16x34xf32>
    %805 = arith.addf %790, %804 : vector<16x34xf32>
    %c91 = arith.constant 91 : index
    %806 = memref.load %arg3[%c91] : memref<108xf32, #tpu.memory_space<smem>>
    %807 = vector.broadcast %806 : f32 to vector<16x34xf32>
    %808 = arith.mulf %807, %797 : vector<16x34xf32>
    %809 = arith.addf %794, %808 : vector<16x34xf32>
    %810 = vector.extract_strided_slice %796 {offsets = [1, 0], sizes = [16, 34], strides = [1, 1]} : vector<18x34xf32> to vector<16x34xf32>
    %c22_224 = arith.constant 22 : index
    %811 = memref.load %arg3[%c22_224] : memref<108xf32, #tpu.memory_space<smem>>
    %812 = vector.broadcast %811 : f32 to vector<16x34xf32>
    %813 = arith.mulf %812, %810 : vector<16x34xf32>
    %814 = arith.addf %801, %813 : vector<16x34xf32>
    %c58_225 = arith.constant 58 : index
    %815 = memref.load %arg3[%c58_225] : memref<108xf32, #tpu.memory_space<smem>>
    %816 = vector.broadcast %815 : f32 to vector<16x34xf32>
    %817 = arith.mulf %816, %810 : vector<16x34xf32>
    %818 = arith.addf %805, %817 : vector<16x34xf32>
    %c94 = arith.constant 94 : index
    %819 = memref.load %arg3[%c94] : memref<108xf32, #tpu.memory_space<smem>>
    %820 = vector.broadcast %819 : f32 to vector<16x34xf32>
    %821 = arith.mulf %820, %810 : vector<16x34xf32>
    %822 = arith.addf %809, %821 : vector<16x34xf32>
    %823 = vector.extract_strided_slice %796 {offsets = [2, 0], sizes = [16, 34], strides = [1, 1]} : vector<18x34xf32> to vector<16x34xf32>
    %c25_226 = arith.constant 25 : index
    %824 = memref.load %arg3[%c25_226] : memref<108xf32, #tpu.memory_space<smem>>
    %825 = vector.broadcast %824 : f32 to vector<16x34xf32>
    %826 = arith.mulf %825, %823 : vector<16x34xf32>
    %827 = arith.addf %814, %826 : vector<16x34xf32>
    %c61_227 = arith.constant 61 : index
    %828 = memref.load %arg3[%c61_227] : memref<108xf32, #tpu.memory_space<smem>>
    %829 = vector.broadcast %828 : f32 to vector<16x34xf32>
    %830 = arith.mulf %829, %823 : vector<16x34xf32>
    %831 = arith.addf %818, %830 : vector<16x34xf32>
    %c97 = arith.constant 97 : index
    %832 = memref.load %arg3[%c97] : memref<108xf32, #tpu.memory_space<smem>>
    %833 = vector.broadcast %832 : f32 to vector<16x34xf32>
    %834 = arith.mulf %833, %823 : vector<16x34xf32>
    %835 = arith.addf %822, %834 : vector<16x34xf32>
    %c2_228 = arith.constant 2 : index
    %c0_229 = arith.constant 0 : index
    %c2_230 = arith.constant 2 : index
    %836 = vector.load %arg8[%c2_228, %c0_229, %c2_230] : memref<4x24x128xf32, #tpu.memory_space<vmem>>, vector<1x18x34xf32>
    %837 = vector.shape_cast %836 : vector<1x18x34xf32> to vector<18x34xf32>
    %838 = vector.extract_strided_slice %837 {offsets = [0, 0], sizes = [16, 34], strides = [1, 1]} : vector<18x34xf32> to vector<16x34xf32>
    %c20_231 = arith.constant 20 : index
    %839 = memref.load %arg3[%c20_231] : memref<108xf32, #tpu.memory_space<smem>>
    %840 = vector.broadcast %839 : f32 to vector<16x34xf32>
    %841 = arith.mulf %840, %838 : vector<16x34xf32>
    %842 = arith.addf %827, %841 : vector<16x34xf32>
    %c56_232 = arith.constant 56 : index
    %843 = memref.load %arg3[%c56_232] : memref<108xf32, #tpu.memory_space<smem>>
    %844 = vector.broadcast %843 : f32 to vector<16x34xf32>
    %845 = arith.mulf %844, %838 : vector<16x34xf32>
    %846 = arith.addf %831, %845 : vector<16x34xf32>
    %c92 = arith.constant 92 : index
    %847 = memref.load %arg3[%c92] : memref<108xf32, #tpu.memory_space<smem>>
    %848 = vector.broadcast %847 : f32 to vector<16x34xf32>
    %849 = arith.mulf %848, %838 : vector<16x34xf32>
    %850 = arith.addf %835, %849 : vector<16x34xf32>
    %851 = vector.extract_strided_slice %837 {offsets = [1, 0], sizes = [16, 34], strides = [1, 1]} : vector<18x34xf32> to vector<16x34xf32>
    %c23_233 = arith.constant 23 : index
    %852 = memref.load %arg3[%c23_233] : memref<108xf32, #tpu.memory_space<smem>>
    %853 = vector.broadcast %852 : f32 to vector<16x34xf32>
    %854 = arith.mulf %853, %851 : vector<16x34xf32>
    %855 = arith.addf %842, %854 : vector<16x34xf32>
    %c59_234 = arith.constant 59 : index
    %856 = memref.load %arg3[%c59_234] : memref<108xf32, #tpu.memory_space<smem>>
    %857 = vector.broadcast %856 : f32 to vector<16x34xf32>
    %858 = arith.mulf %857, %851 : vector<16x34xf32>
    %859 = arith.addf %846, %858 : vector<16x34xf32>
    %c95 = arith.constant 95 : index
    %860 = memref.load %arg3[%c95] : memref<108xf32, #tpu.memory_space<smem>>
    %861 = vector.broadcast %860 : f32 to vector<16x34xf32>
    %862 = arith.mulf %861, %851 : vector<16x34xf32>
    %863 = arith.addf %850, %862 : vector<16x34xf32>
    %864 = vector.extract_strided_slice %837 {offsets = [2, 0], sizes = [16, 34], strides = [1, 1]} : vector<18x34xf32> to vector<16x34xf32>
    %c26_235 = arith.constant 26 : index
    %865 = memref.load %arg3[%c26_235] : memref<108xf32, #tpu.memory_space<smem>>
    %866 = vector.broadcast %865 : f32 to vector<16x34xf32>
    %867 = arith.mulf %866, %864 : vector<16x34xf32>
    %868 = arith.addf %855, %867 : vector<16x34xf32>
    %c62_236 = arith.constant 62 : index
    %869 = memref.load %arg3[%c62_236] : memref<108xf32, #tpu.memory_space<smem>>
    %870 = vector.broadcast %869 : f32 to vector<16x34xf32>
    %871 = arith.mulf %870, %864 : vector<16x34xf32>
    %872 = arith.addf %859, %871 : vector<16x34xf32>
    %c98 = arith.constant 98 : index
    %873 = memref.load %arg3[%c98] : memref<108xf32, #tpu.memory_space<smem>>
    %874 = vector.broadcast %873 : f32 to vector<16x34xf32>
    %875 = arith.mulf %874, %864 : vector<16x34xf32>
    %876 = arith.addf %863, %875 : vector<16x34xf32>
    %c3_237 = arith.constant 3 : index
    %c0_238 = arith.constant 0 : index
    %c0_239 = arith.constant 0 : index
    %877 = vector.load %arg8[%c3_237, %c0_238, %c0_239] : memref<4x24x128xf32, #tpu.memory_space<vmem>>, vector<1x18x34xf32>
    %878 = vector.shape_cast %877 : vector<1x18x34xf32> to vector<18x34xf32>
    %879 = vector.extract_strided_slice %878 {offsets = [0, 0], sizes = [16, 34], strides = [1, 1]} : vector<18x34xf32> to vector<16x34xf32>
    %c27_240 = arith.constant 27 : index
    %880 = memref.load %arg3[%c27_240] : memref<108xf32, #tpu.memory_space<smem>>
    %881 = vector.broadcast %880 : f32 to vector<16x34xf32>
    %882 = arith.mulf %881, %879 : vector<16x34xf32>
    %883 = arith.addf %868, %882 : vector<16x34xf32>
    %c63_241 = arith.constant 63 : index
    %884 = memref.load %arg3[%c63_241] : memref<108xf32, #tpu.memory_space<smem>>
    %885 = vector.broadcast %884 : f32 to vector<16x34xf32>
    %886 = arith.mulf %885, %879 : vector<16x34xf32>
    %887 = arith.addf %872, %886 : vector<16x34xf32>
    %c99 = arith.constant 99 : index
    %888 = memref.load %arg3[%c99] : memref<108xf32, #tpu.memory_space<smem>>
    %889 = vector.broadcast %888 : f32 to vector<16x34xf32>
    %890 = arith.mulf %889, %879 : vector<16x34xf32>
    %891 = arith.addf %876, %890 : vector<16x34xf32>
    %892 = vector.extract_strided_slice %878 {offsets = [1, 0], sizes = [16, 34], strides = [1, 1]} : vector<18x34xf32> to vector<16x34xf32>
    %c30_242 = arith.constant 30 : index
    %893 = memref.load %arg3[%c30_242] : memref<108xf32, #tpu.memory_space<smem>>
    %894 = vector.broadcast %893 : f32 to vector<16x34xf32>
    %895 = arith.mulf %894, %892 : vector<16x34xf32>
    %896 = arith.addf %883, %895 : vector<16x34xf32>
    %c66_243 = arith.constant 66 : index
    %897 = memref.load %arg3[%c66_243] : memref<108xf32, #tpu.memory_space<smem>>
    %898 = vector.broadcast %897 : f32 to vector<16x34xf32>
    %899 = arith.mulf %898, %892 : vector<16x34xf32>
    %900 = arith.addf %887, %899 : vector<16x34xf32>
    %c102 = arith.constant 102 : index
    %901 = memref.load %arg3[%c102] : memref<108xf32, #tpu.memory_space<smem>>
    %902 = vector.broadcast %901 : f32 to vector<16x34xf32>
    %903 = arith.mulf %902, %892 : vector<16x34xf32>
    %904 = arith.addf %891, %903 : vector<16x34xf32>
    %905 = vector.extract_strided_slice %878 {offsets = [2, 0], sizes = [16, 34], strides = [1, 1]} : vector<18x34xf32> to vector<16x34xf32>
    %c33_244 = arith.constant 33 : index
    %906 = memref.load %arg3[%c33_244] : memref<108xf32, #tpu.memory_space<smem>>
    %907 = vector.broadcast %906 : f32 to vector<16x34xf32>
    %908 = arith.mulf %907, %905 : vector<16x34xf32>
    %909 = arith.addf %896, %908 : vector<16x34xf32>
    %c69_245 = arith.constant 69 : index
    %910 = memref.load %arg3[%c69_245] : memref<108xf32, #tpu.memory_space<smem>>
    %911 = vector.broadcast %910 : f32 to vector<16x34xf32>
    %912 = arith.mulf %911, %905 : vector<16x34xf32>
    %913 = arith.addf %900, %912 : vector<16x34xf32>
    %c105 = arith.constant 105 : index
    %914 = memref.load %arg3[%c105] : memref<108xf32, #tpu.memory_space<smem>>
    %915 = vector.broadcast %914 : f32 to vector<16x34xf32>
    %916 = arith.mulf %915, %905 : vector<16x34xf32>
    %917 = arith.addf %904, %916 : vector<16x34xf32>
    %c3_246 = arith.constant 3 : index
    %c0_247 = arith.constant 0 : index
    %c1_248 = arith.constant 1 : index
    %918 = vector.load %arg8[%c3_246, %c0_247, %c1_248] : memref<4x24x128xf32, #tpu.memory_space<vmem>>, vector<1x18x34xf32>
    %919 = vector.shape_cast %918 : vector<1x18x34xf32> to vector<18x34xf32>
    %920 = vector.extract_strided_slice %919 {offsets = [0, 0], sizes = [16, 34], strides = [1, 1]} : vector<18x34xf32> to vector<16x34xf32>
    %c28_249 = arith.constant 28 : index
    %921 = memref.load %arg3[%c28_249] : memref<108xf32, #tpu.memory_space<smem>>
    %922 = vector.broadcast %921 : f32 to vector<16x34xf32>
    %923 = arith.mulf %922, %920 : vector<16x34xf32>
    %924 = arith.addf %909, %923 : vector<16x34xf32>
    %c64_250 = arith.constant 64 : index
    %925 = memref.load %arg3[%c64_250] : memref<108xf32, #tpu.memory_space<smem>>
    %926 = vector.broadcast %925 : f32 to vector<16x34xf32>
    %927 = arith.mulf %926, %920 : vector<16x34xf32>
    %928 = arith.addf %913, %927 : vector<16x34xf32>
    %c100 = arith.constant 100 : index
    %929 = memref.load %arg3[%c100] : memref<108xf32, #tpu.memory_space<smem>>
    %930 = vector.broadcast %929 : f32 to vector<16x34xf32>
    %931 = arith.mulf %930, %920 : vector<16x34xf32>
    %932 = arith.addf %917, %931 : vector<16x34xf32>
    %933 = vector.extract_strided_slice %919 {offsets = [1, 0], sizes = [16, 34], strides = [1, 1]} : vector<18x34xf32> to vector<16x34xf32>
    %c31_251 = arith.constant 31 : index
    %934 = memref.load %arg3[%c31_251] : memref<108xf32, #tpu.memory_space<smem>>
    %935 = vector.broadcast %934 : f32 to vector<16x34xf32>
    %936 = arith.mulf %935, %933 : vector<16x34xf32>
    %937 = arith.addf %924, %936 : vector<16x34xf32>
    %c67_252 = arith.constant 67 : index
    %938 = memref.load %arg3[%c67_252] : memref<108xf32, #tpu.memory_space<smem>>
    %939 = vector.broadcast %938 : f32 to vector<16x34xf32>
    %940 = arith.mulf %939, %933 : vector<16x34xf32>
    %941 = arith.addf %928, %940 : vector<16x34xf32>
    %c103 = arith.constant 103 : index
    %942 = memref.load %arg3[%c103] : memref<108xf32, #tpu.memory_space<smem>>
    %943 = vector.broadcast %942 : f32 to vector<16x34xf32>
    %944 = arith.mulf %943, %933 : vector<16x34xf32>
    %945 = arith.addf %932, %944 : vector<16x34xf32>
    %946 = vector.extract_strided_slice %919 {offsets = [2, 0], sizes = [16, 34], strides = [1, 1]} : vector<18x34xf32> to vector<16x34xf32>
    %c34_253 = arith.constant 34 : index
    %947 = memref.load %arg3[%c34_253] : memref<108xf32, #tpu.memory_space<smem>>
    %948 = vector.broadcast %947 : f32 to vector<16x34xf32>
    %949 = arith.mulf %948, %946 : vector<16x34xf32>
    %950 = arith.addf %937, %949 : vector<16x34xf32>
    %c70_254 = arith.constant 70 : index
    %951 = memref.load %arg3[%c70_254] : memref<108xf32, #tpu.memory_space<smem>>
    %952 = vector.broadcast %951 : f32 to vector<16x34xf32>
    %953 = arith.mulf %952, %946 : vector<16x34xf32>
    %954 = arith.addf %941, %953 : vector<16x34xf32>
    %c106 = arith.constant 106 : index
    %955 = memref.load %arg3[%c106] : memref<108xf32, #tpu.memory_space<smem>>
    %956 = vector.broadcast %955 : f32 to vector<16x34xf32>
    %957 = arith.mulf %956, %946 : vector<16x34xf32>
    %958 = arith.addf %945, %957 : vector<16x34xf32>
    %c3_255 = arith.constant 3 : index
    %c0_256 = arith.constant 0 : index
    %c2_257 = arith.constant 2 : index
    %959 = vector.load %arg8[%c3_255, %c0_256, %c2_257] : memref<4x24x128xf32, #tpu.memory_space<vmem>>, vector<1x18x34xf32>
    %960 = vector.shape_cast %959 : vector<1x18x34xf32> to vector<18x34xf32>
    %961 = vector.extract_strided_slice %960 {offsets = [0, 0], sizes = [16, 34], strides = [1, 1]} : vector<18x34xf32> to vector<16x34xf32>
    %c29_258 = arith.constant 29 : index
    %962 = memref.load %arg3[%c29_258] : memref<108xf32, #tpu.memory_space<smem>>
    %963 = vector.broadcast %962 : f32 to vector<16x34xf32>
    %964 = arith.mulf %963, %961 : vector<16x34xf32>
    %965 = arith.addf %950, %964 : vector<16x34xf32>
    %c65_259 = arith.constant 65 : index
    %966 = memref.load %arg3[%c65_259] : memref<108xf32, #tpu.memory_space<smem>>
    %967 = vector.broadcast %966 : f32 to vector<16x34xf32>
    %968 = arith.mulf %967, %961 : vector<16x34xf32>
    %969 = arith.addf %954, %968 : vector<16x34xf32>
    %c101 = arith.constant 101 : index
    %970 = memref.load %arg3[%c101] : memref<108xf32, #tpu.memory_space<smem>>
    %971 = vector.broadcast %970 : f32 to vector<16x34xf32>
    %972 = arith.mulf %971, %961 : vector<16x34xf32>
    %973 = arith.addf %958, %972 : vector<16x34xf32>
    %974 = vector.extract_strided_slice %960 {offsets = [1, 0], sizes = [16, 34], strides = [1, 1]} : vector<18x34xf32> to vector<16x34xf32>
    %c32_260 = arith.constant 32 : index
    %975 = memref.load %arg3[%c32_260] : memref<108xf32, #tpu.memory_space<smem>>
    %976 = vector.broadcast %975 : f32 to vector<16x34xf32>
    %977 = arith.mulf %976, %974 : vector<16x34xf32>
    %978 = arith.addf %965, %977 : vector<16x34xf32>
    %c68_261 = arith.constant 68 : index
    %979 = memref.load %arg3[%c68_261] : memref<108xf32, #tpu.memory_space<smem>>
    %980 = vector.broadcast %979 : f32 to vector<16x34xf32>
    %981 = arith.mulf %980, %974 : vector<16x34xf32>
    %982 = arith.addf %969, %981 : vector<16x34xf32>
    %c104 = arith.constant 104 : index
    %983 = memref.load %arg3[%c104] : memref<108xf32, #tpu.memory_space<smem>>
    %984 = vector.broadcast %983 : f32 to vector<16x34xf32>
    %985 = arith.mulf %984, %974 : vector<16x34xf32>
    %986 = arith.addf %973, %985 : vector<16x34xf32>
    %987 = vector.extract_strided_slice %960 {offsets = [2, 0], sizes = [16, 34], strides = [1, 1]} : vector<18x34xf32> to vector<16x34xf32>
    %c35_262 = arith.constant 35 : index
    %988 = memref.load %arg3[%c35_262] : memref<108xf32, #tpu.memory_space<smem>>
    %989 = vector.broadcast %988 : f32 to vector<16x34xf32>
    %990 = arith.mulf %989, %987 : vector<16x34xf32>
    %991 = arith.addf %978, %990 : vector<16x34xf32>
    %c71_263 = arith.constant 71 : index
    %992 = memref.load %arg3[%c71_263] : memref<108xf32, #tpu.memory_space<smem>>
    %993 = vector.broadcast %992 : f32 to vector<16x34xf32>
    %994 = arith.mulf %993, %987 : vector<16x34xf32>
    %995 = arith.addf %982, %994 : vector<16x34xf32>
    %c107 = arith.constant 107 : index
    %996 = memref.load %arg3[%c107] : memref<108xf32, #tpu.memory_space<smem>>
    %997 = vector.broadcast %996 : f32 to vector<16x34xf32>
    %998 = arith.mulf %997, %987 : vector<16x34xf32>
    %999 = arith.addf %986, %998 : vector<16x34xf32>
    %1000 = math.tanh %991 : vector<16x34xf32>
    %1001 = vector.extract_strided_slice %1000 {offsets = [0, 0], sizes = [16, 16], strides = [1, 1]} : vector<16x34xf32> to vector<16x16xf32>
    %c0_264 = arith.constant 0 : index
    %c0_265 = arith.constant 0 : index
    %c0_266 = arith.constant 0 : index
    %c0_267 = arith.constant 0 : index
    %1002 = vector.load %arg7[%c0_264, %c0_265, %c0_266, %c0_267] : memref<1x3x16x32xf32, #tpu.memory_space<vmem>>, vector<1x1x16x16xf32>
    %1003 = vector.shape_cast %1002 : vector<1x1x16x16xf32> to vector<16x16xf32>
    %1004 = vector.shape_cast %1001 : vector<16x16xf32> to vector<1x1x16x16xf32>
    tpu.vector_store %arg7[%c0_264, %c0_265, %c0_266, %c0_267], %1004 {strides = array<i32>} : memref<1x3x16x32xf32, #tpu.memory_space<vmem>>, vector<1x1x16x16xf32>,
    %1005 = vector.extract_strided_slice %1000 {offsets = [0, 18], sizes = [16, 16], strides = [1, 1]} : vector<16x34xf32> to vector<16x16xf32>
    %c0_268 = arith.constant 0 : index
    %c0_269 = arith.constant 0 : index
    %c0_270 = arith.constant 0 : index
    %c16_271 = arith.constant 16 : index
    %1006 = vector.load %arg7[%c0_268, %c0_269, %c0_270, %c16_271] : memref<1x3x16x32xf32, #tpu.memory_space<vmem>>, vector<1x1x16x16xf32>
    %1007 = vector.shape_cast %1006 : vector<1x1x16x16xf32> to vector<16x16xf32>
    %1008 = vector.shape_cast %1005 : vector<16x16xf32> to vector<1x1x16x16xf32>
    tpu.vector_store %arg7[%c0_268, %c0_269, %c0_270, %c16_271], %1008 {strides = array<i32>} : memref<1x3x16x32xf32, #tpu.memory_space<vmem>>, vector<1x1x16x16xf32>,
    %1009 = math.tanh %995 : vector<16x34xf32>
    %1010 = vector.extract_strided_slice %1009 {offsets = [0, 0], sizes = [16, 16], strides = [1, 1]} : vector<16x34xf32> to vector<16x16xf32>
    %c0_272 = arith.constant 0 : index
    %c1_273 = arith.constant 1 : index
    %c0_274 = arith.constant 0 : index
    %c0_275 = arith.constant 0 : index
    %1011 = vector.load %arg7[%c0_272, %c1_273, %c0_274, %c0_275] : memref<1x3x16x32xf32, #tpu.memory_space<vmem>>, vector<1x1x16x16xf32>
    %1012 = vector.shape_cast %1011 : vector<1x1x16x16xf32> to vector<16x16xf32>
    %1013 = vector.shape_cast %1010 : vector<16x16xf32> to vector<1x1x16x16xf32>
    tpu.vector_store %arg7[%c0_272, %c1_273, %c0_274, %c0_275], %1013 {strides = array<i32>} : memref<1x3x16x32xf32, #tpu.memory_space<vmem>>, vector<1x1x16x16xf32>,
    %1014 = vector.extract_strided_slice %1009 {offsets = [0, 18], sizes = [16, 16], strides = [1, 1]} : vector<16x34xf32> to vector<16x16xf32>
    %c0_276 = arith.constant 0 : index
    %c1_277 = arith.constant 1 : index
    %c0_278 = arith.constant 0 : index
    %c16_279 = arith.constant 16 : index
    %1015 = vector.load %arg7[%c0_276, %c1_277, %c0_278, %c16_279] : memref<1x3x16x32xf32, #tpu.memory_space<vmem>>, vector<1x1x16x16xf32>
    %1016 = vector.shape_cast %1015 : vector<1x1x16x16xf32> to vector<16x16xf32>
    %1017 = vector.shape_cast %1014 : vector<16x16xf32> to vector<1x1x16x16xf32>
    tpu.vector_store %arg7[%c0_276, %c1_277, %c0_278, %c16_279], %1017 {strides = array<i32>} : memref<1x3x16x32xf32, #tpu.memory_space<vmem>>, vector<1x1x16x16xf32>,
    %1018 = math.tanh %999 : vector<16x34xf32>
    %1019 = vector.extract_strided_slice %1018 {offsets = [0, 0], sizes = [16, 16], strides = [1, 1]} : vector<16x34xf32> to vector<16x16xf32>
    %c0_280 = arith.constant 0 : index
    %c2_281 = arith.constant 2 : index
    %c0_282 = arith.constant 0 : index
    %c0_283 = arith.constant 0 : index
    %1020 = vector.load %arg7[%c0_280, %c2_281, %c0_282, %c0_283] : memref<1x3x16x32xf32, #tpu.memory_space<vmem>>, vector<1x1x16x16xf32>
    %1021 = vector.shape_cast %1020 : vector<1x1x16x16xf32> to vector<16x16xf32>
    %1022 = vector.shape_cast %1019 : vector<16x16xf32> to vector<1x1x16x16xf32>
    tpu.vector_store %arg7[%c0_280, %c2_281, %c0_282, %c0_283], %1022 {strides = array<i32>} : memref<1x3x16x32xf32, #tpu.memory_space<vmem>>, vector<1x1x16x16xf32>,
    %1023 = vector.extract_strided_slice %1018 {offsets = [0, 18], sizes = [16, 16], strides = [1, 1]} : vector<16x34xf32> to vector<16x16xf32>
    %c0_284 = arith.constant 0 : index
    %c2_285 = arith.constant 2 : index
    %c0_286 = arith.constant 0 : index
    %c16_287 = arith.constant 16 : index
    %1024 = vector.load %arg7[%c0_284, %c2_285, %c0_286, %c16_287] : memref<1x3x16x32xf32, #tpu.memory_space<vmem>>, vector<1x1x16x16xf32>
    %1025 = vector.shape_cast %1024 : vector<1x1x16x16xf32> to vector<16x16xf32>
    %1026 = vector.shape_cast %1023 : vector<16x16xf32> to vector<1x1x16x16xf32>
    tpu.vector_store %arg7[%c0_284, %c2_285, %c0_286, %c16_287], %1026 {strides = array<i32>} : memref<1x3x16x32xf32, #tpu.memory_space<vmem>>, vector<1x1x16x16xf32>,
    return
  }
  func.func @transform_0(%arg0: i32) -> i32 {
    %c0_i32 = arith.constant 0 : i32
    %c0_i32_0 = arith.constant 0 : i32
    return %c0_i32 : i32
  }
  func.func @transform_1(%arg0: i32) -> i32 {
    %c0_i32 = arith.constant 0 : i32
    %c0_i32_0 = arith.constant 0 : i32
    return %c0_i32 : i32
  }
  func.func @transform_2(%arg0: i32) -> i32 {
    %c0_i32 = arith.constant 0 : i32
    %c0_i32_0 = arith.constant 0 : i32
    return %c0_i32 : i32
  }
  func.func @transform_3(%arg0: i32) -> i32 {
    %c0_i32 = arith.constant 0 : i32
    %c0_i32_0 = arith.constant 0 : i32
    return %c0_i32 : i32
  }
  func.func @transform_4(%arg0: i32) -> i32 {
    %c0_i32 = arith.constant 0 : i32
    %c0_i32_0 = arith.constant 0 : i32
    return %c0_i32 : i32
  }
  func.func @transform_5(%arg0: i32) -> (i32, i32, i32, i32) {
    %c0_i32 = arith.constant 0 : i32
    %c0_i32_0 = arith.constant 0 : i32
    %c0_i32_1 = arith.constant 0 : i32
    %c0_i32_2 = arith.constant 0 : i32
    return %arg0, %c0_i32, %c0_i32_0, %c0_i32_1 : i32, i32, i32, i32
  }
  func.func @transform_6(%arg0: i32) -> (i32, i32, i32, i32) {
    %c0_i32 = arith.constant 0 : i32
    %c0_i32_0 = arith.constant 0 : i32
    %c0_i32_1 = arith.constant 0 : i32
    %c0_i32_2 = arith.constant 0 : i32
    return %arg0, %c0_i32, %c0_i32_0, %c0_i32_1 : i32, i32, i32, i32
  }
}

</mosaic_0001>

<llo_original>
// kernel: combined_model_forward.1
$region0: #{combined_model_forward.1}
  #allocation0 [shape = 'u32[]', space=smem, size = 0x4, offset = 0x4, fixed_abs, tag = 'smem constant byte address 0x4 - core index']
  #allocation1 [shape = 'u32[144,128]{1,0:T(1,128)}', space=vmem, size = 0x12000, scoped, tag = 'internal scratch']
  #allocation2 [shape = 'f32[4,24,128]{2,1,0:T(8,128)}', space=vmem, size = 0xc000, scoped, tag = 'scratch operand']
  #allocation3 [shape = 'f32[1]{0:T(128)S(6)}', space=smem, size = 0x200, scoped, tag = 'scoped memory for combined_model_forward.1']
  %s0 = inlined_call_operand.vmem [shape: f32[81], index: 0, kind: input, shape index: {}]
  %s1 = inlined_call_operand.vmem [shape: f32[3], index: 1, kind: input, shape index: {}]
  %s2 = inlined_call_operand.vmem [shape: f32[108], index: 2, kind: input, shape index: {}]
  %s3 = inlined_call_operand.vmem [shape: f32[3], index: 3, kind: input, shape index: {}]
  %s4 = inlined_call_operand.<no memory space> [shape: f32[1], index: 4, kind: input, shape index: {}]
  %s5 = inlined_call_operand.vmem [shape: f32[1,3,18,36], index: 5, kind: input, shape index: {}]
  %s6 = inlined_call_operand.vmem [shape: f32[1,3,16,32], index: 6, kind: output, shape index: {}]
  %s7 = sld [smem:[#allocation0]]
  $region50: #{combined_model_forward.1} parent=0
    _
  %s9 = ssub.s32 1, %s7
  %s10 = scalar_select 0, %s9, %s7
  %11 = sst [smem:[#allocation3]] %s4
  $region1: #{combined_model_forward.1} parent=0
    #allocation4 [shape = 'u8[512]{0}', space=smem, size = 0x200, scoped, tag = 'input window, operand 0, single buffered']
    #allocation5 [shape = 's32[1]{0}', space=sflag, size = 0x4, scoped, tag = 'scoped memory for combined_model_forward.1']
    #allocation6 [shape = 'u8[512]{0}', space=smem, size = 0x200, scoped, tag = 'input window, operand 1, single buffered']
    #allocation7 [shape = 's32[1]{0}', space=sflag, size = 0x4, scoped, tag = 'scoped memory for combined_model_forward.1']
    #allocation8 [shape = 'u8[512]{0}', space=smem, size = 0x200, scoped, tag = 'input window, operand 2, single buffered']
    #allocation9 [shape = 'u8[512]{0}', space=smem, size = 0x200, scoped, tag = 'input window, operand 3, single buffered']
    #allocation10 [shape = 's32[1]{0}', space=sflag, size = 0x4, scoped, tag = 'scoped memory for combined_model_forward.1']
    %12 = vsyncpa [#allocation5], 0
    %13 = vsyncpa [#allocation7], 0
    %14 = vsyncpa [#allocation10], 0
    // Predicated region
    $region2: #{combined_model_forward.1} parent=1 // pred_check
      _
    $region3: #{combined_model_forward.1} parent=1 // pred_check_branch
      %16 = sbr.rel (0) target = $region5
    $region4: #{combined_model_forward.1} parent=1 // pred_region
      %s18 = ssub.s32 16, 16
      %19 = vsyncadd [#allocation5], %s18
      %s21 = sshll.u32 %s0, 4
      %s22 = int_to_ptr.vmem [resolvable:$true] %s21
      %24 = dma.vmem_to_smem %s22, 16, [#allocation4], [#allocation5]
    $region5: #{combined_model_forward.1} parent=1 // pred_fallthru
      _
    // Predicated region
    $region6: #{combined_model_forward.1} parent=1 // pred_check
      _
    $region7: #{combined_model_forward.1} parent=1 // pred_check_branch
      %26 = sbr.rel (0) target = $region9
    $region8: #{combined_model_forward.1} parent=1 // pred_region
      %s28 = ssub.s32 16, 16
      %29 = vsyncadd [#allocation7], %s28
      %s31 = sshll.u32 %s1, 4
      %s32 = int_to_ptr.vmem [resolvable:$true] %s31
      %34 = dma.vmem_to_smem %s32, 16, [#allocation6], [#allocation7]
    $region9: #{combined_model_forward.1} parent=1 // pred_fallthru
      _
    // Predicated region
    $region10: #{combined_model_forward.1} parent=1 // pred_check
      _
    $region11: #{combined_model_forward.1} parent=1 // pred_check_branch
      %36 = sbr.rel (0) target = $region13
    $region12: #{combined_model_forward.1} parent=1 // pred_region
      %s38 = ssub.s32 16, 16
      %39 = vsyncadd [#allocation7], %s38
      %s41 = sshll.u32 %s2, 4
      %s42 = int_to_ptr.vmem [resolvable:$true] %s41
      %44 = dma.vmem_to_smem %s42, 16, [#allocation8], [#allocation7]
    $region13: #{combined_model_forward.1} parent=1 // pred_fallthru
      _
    // Predicated region
    $region14: #{combined_model_forward.1} parent=1 // pred_check
      _
    $region15: #{combined_model_forward.1} parent=1 // pred_check_branch
      %46 = sbr.rel (0) target = $region17
    $region16: #{combined_model_forward.1} parent=1 // pred_region
      %s48 = ssub.s32 16, 16
      %49 = vsyncadd [#allocation10], %s48
      %s51 = sshll.u32 %s3, 4
      %s52 = int_to_ptr.vmem [resolvable:$true] %s51
      %54 = dma.vmem_to_smem %s52, 16, [#allocation9], [#allocation10]
    $region17: #{combined_model_forward.1} parent=1 // pred_fallthru
      _
    // Predicated region
    $region18: #{combined_model_forward.1} parent=1 // pred_check
      _
    $region19: #{combined_model_forward.1} parent=1 // pred_check_branch
      %56 = sbr.rel (0) target = $region21
    $region20: #{combined_model_forward.1} parent=1 // pred_region
      _
    $region21: #{combined_model_forward.1} parent=1 // pred_fallthru
      _
    // Predicated region
    $region22: #{combined_model_forward.1} parent=1 // pred_check
      _
    $region23: #{combined_model_forward.1} parent=1 // pred_check_branch
      %58 = sbr.rel (0) target = $region25
    $region24: #{combined_model_forward.1} parent=1 // pred_region
      _
    $region25: #{combined_model_forward.1} parent=1 // pred_fallthru
      _
    // Predicated region
    $region26: #{combined_model_forward.1} parent=1 // pred_check
      _
    $region27: #{combined_model_forward.1} parent=1 // pred_check_branch
      %60 = sbr.rel (0) target = $region29
    $region28: #{combined_model_forward.1} parent=1 // pred_region
      %61 = dma.done [#allocation5], 16
    $region29: #{combined_model_forward.1} parent=1 // pred_fallthru
      _
    // Predicated region
    $region30: #{combined_model_forward.1} parent=1 // pred_check
      _
    $region31: #{combined_model_forward.1} parent=1 // pred_check_branch
      %63 = sbr.rel (0) target = $region33
    $region32: #{combined_model_forward.1} parent=1 // pred_region
      %64 = dma.done [#allocation7], 16
    $region33: #{combined_model_forward.1} parent=1 // pred_fallthru
      _
    // Predicated region
    $region34: #{combined_model_forward.1} parent=1 // pred_check
      _
    $region35: #{combined_model_forward.1} parent=1 // pred_check_branch
      %66 = sbr.rel (0) target = $region37
    $region36: #{combined_model_forward.1} parent=1 // pred_region
      %67 = dma.done [#allocation7], 16
    $region37: #{combined_model_forward.1} parent=1 // pred_fallthru
      _
    // Predicated region
    $region38: #{combined_model_forward.1} parent=1 // pred_check
      _
    $region39: #{combined_model_forward.1} parent=1 // pred_check_branch
      %69 = sbr.rel (0) target = $region41
    $region40: #{combined_model_forward.1} parent=1 // pred_region
      %70 = dma.done [#allocation10], 16
    $region41: #{combined_model_forward.1} parent=1 // pred_fallthru
      _
    %71 = sfence
    %s72 = sld [smem:[#allocation6]]
    %v73 = vstv %s72
    %v74 = vadd.f32 %v73, 0.0
    %s75 = sld [smem:[#allocation6 + $0x1]]
    %v76 = vstv %s75
    %v77 = vadd.f32 %v76, 0.0
    %s78 = sld [smem:[#allocation6 + $0x2]]
    %v79 = vstv %s78
    %v80 = vadd.f32 %v79, 0.0
    %v81 = vld [vmem:[%s5] sm:$0xff]
    %v82 = vld [vmem:[%s5 + $0x8] sm:$0xff]
    %v83 = vld [vmem:[%s5 + $0x10] sm:$0x3]
    %s84 = sld [smem:[#allocation4]]
    %v85 = vstv %s84
    %v86 = vmul.f32 %v85, %v81
    %v87 = vmul.f32 %v85, %v82
    %v88 = vadd.f32 %v74, %v86
    %v89 = vadd.f32 %v74, %v87
    %s90 = sld [smem:[#allocation4 + $0x1b]]
    %v91 = vstv %s90
    %v92 = vmul.f32 %v91, %v81
    %v93 = vmul.f32 %v91, %v82
    %v94 = vadd.f32 %v77, %v92
    %v95 = vadd.f32 %v77, %v93
    %s96 = sld [smem:[#allocation4 + $0x36]]
    %v97 = vstv %s96
    %v98 = vmul.f32 %v97, %v81
    %v99 = vmul.f32 %v97, %v82
    %v100 = vadd.f32 %v80, %v98
    %v101 = vadd.f32 %v80, %v99
    %s102 = sld [smem:[#allocation4 + $0x3]]
    %v103 = vstv %s102
    %v104 = vmul.f32 %v103, %v81
    %v105 = vmul.f32 %v103, %v82
    %v106 = vmul.f32 %v103, %v83
    %vm110 = vcmask 1046528
    %v111 = vrot.slane %v104, 1
    %v112 = vrot.slane %v105, 1
    %v113 = vsel %vm110, %v111, %v112
    %v114 = vrot.slane %v106, 1
    %v115 = vsel %vm110, %v112, %v114
    %v118 = vadd.f32 %v88, %v113
    %v119 = vadd.f32 %v89, %v115
    %s120 = sld [smem:[#allocation4 + $0x1e]]
    %v121 = vstv %s120
    %v122 = vmul.f32 %v121, %v81
    %v123 = vmul.f32 %v121, %v82
    %v124 = vmul.f32 %v121, %v83
    %v128 = vrot.slane %v122, 1
    %v129 = vrot.slane %v123, 1
    %v130 = vsel %vm110, %v128, %v129
    %v131 = vrot.slane %v124, 1
    %v132 = vsel %vm110, %v129, %v131
    %v135 = vadd.f32 %v94, %v130
    %v136 = vadd.f32 %v95, %v132
    %s137 = sld [smem:[#allocation4 + $0x39]]
    %v138 = vstv %s137
    %v139 = vmul.f32 %v138, %v81
    %v140 = vmul.f32 %v138, %v82
    %v141 = vmul.f32 %v138, %v83
    %v145 = vrot.slane %v139, 1
    %v146 = vrot.slane %v140, 1
    %v147 = vsel %vm110, %v145, %v146
    %v148 = vrot.slane %v141, 1
    %v149 = vsel %vm110, %v146, %v148
    %v152 = vadd.f32 %v100, %v147
    %v153 = vadd.f32 %v101, %v149
    %s154 = sld [smem:[#allocation4 + $0x6]]
    %v155 = vstv %s154
    %v156 = vmul.f32 %v155, %v81
    %v157 = vmul.f32 %v155, %v82
    %v158 = vmul.f32 %v155, %v83
    %vm162 = vcmask 1045504
    %v163 = vrot.slane %v156, 2
    %v164 = vrot.slane %v157, 2
    %v165 = vsel %vm162, %v163, %v164
    %v166 = vrot.slane %v158, 2
    %v167 = vsel %vm162, %v164, %v166
    %v170 = vadd.f32 %v118, %v165
    %v171 = vadd.f32 %v119, %v167
    %s172 = sld [smem:[#allocation4 + $0x21]]
    %v173 = vstv %s172
    %v174 = vmul.f32 %v173, %v81
    %v175 = vmul.f32 %v173, %v82
    %v176 = vmul.f32 %v173, %v83
    %v180 = vrot.slane %v174, 2
    %v181 = vrot.slane %v175, 2
    %v182 = vsel %vm162, %v180, %v181
    %v183 = vrot.slane %v176, 2
    %v184 = vsel %vm162, %v181, %v183
    %v187 = vadd.f32 %v135, %v182
    %v188 = vadd.f32 %v136, %v184
    %s189 = sld [smem:[#allocation4 + $0x3c]]
    %v190 = vstv %s189
    %v191 = vmul.f32 %v190, %v81
    %v192 = vmul.f32 %v190, %v82
    %v193 = vmul.f32 %v190, %v83
    %v197 = vrot.slane %v191, 2
    %v198 = vrot.slane %v192, 2
    %v199 = vsel %vm162, %v197, %v198
    %v200 = vrot.slane %v193, 2
    %v201 = vsel %vm162, %v198, %v200
    %v204 = vadd.f32 %v152, %v199
    %v205 = vadd.f32 %v153, %v201
    %s206 = sld [smem:[#allocation4 + $0x1]]
    %v207 = vstv %s206
    %v208 = vmul.f32 %v207, %v81
    %v209 = vmul.f32 %v207, %v82
    %212 = vrot.lane.b32.xlu0 %v208, 127
    %v213 = vpop.permute.xlu0 %212
    %214 = vrot.lane.b32.xlu0 %v209, 127
    %v215 = vpop.permute.xlu0 %214
    %v218 = vadd.f32 %v170, %v213
    %v219 = vadd.f32 %v171, %v215
    %s220 = sld [smem:[#allocation4 + $0x1c]]
    %v221 = vstv %s220
    %v222 = vmul.f32 %v221, %v81
    %v223 = vmul.f32 %v221, %v82
    %226 = vrot.lane.b32.xlu0 %v222, 127
    %v227 = vpop.permute.xlu0 %226
    %228 = vrot.lane.b32.xlu0 %v223, 127
    %v229 = vpop.permute.xlu0 %228
    %v232 = vadd.f32 %v187, %v227
    %v233 = vadd.f32 %v188, %v229
    %s234 = sld [smem:[#allocation4 + $0x37]]
    %v235 = vstv %s234
    %v236 = vmul.f32 %v235, %v81
    %v237 = vmul.f32 %v235, %v82
    %240 = vrot.lane.b32.xlu0 %v236, 127
    %v241 = vpop.permute.xlu0 %240
    %242 = vrot.lane.b32.xlu0 %v237, 127
    %v243 = vpop.permute.xlu0 %242
    %v246 = vadd.f32 %v204, %v241
    %v247 = vadd.f32 %v205, %v243
    %s248 = sld [smem:[#allocation4 + $0x4]]
    %v249 = vstv %s248
    %v250 = vmul.f32 %v249, %v81
    %v251 = vmul.f32 %v249, %v82
    %v252 = vmul.f32 %v249, %v83
    %v256 = vrot.slane %v250, 1
    %v257 = vrot.slane %v251, 1
    %v258 = vsel %vm110, %v256, %v257
    %v259 = vrot.slane %v252, 1
    %v260 = vsel %vm110, %v257, %v259
    %261 = vrot.lane.b32.xlu0 %v258, 127
    %v262 = vpop.permute.xlu0 %261
    %263 = vrot.lane.b32.xlu0 %v260, 127
    %v264 = vpop.permute.xlu0 %263
    %v267 = vadd.f32 %v218, %v262
    %v268 = vadd.f32 %v219, %v264
    %s269 = sld [smem:[#allocation4 + $0x1f]]
    %v270 = vstv %s269
    %v271 = vmul.f32 %v270, %v81
    %v272 = vmul.f32 %v270, %v82
    %v273 = vmul.f32 %v270, %v83
    %v277 = vrot.slane %v271, 1
    %v278 = vrot.slane %v272, 1
    %v279 = vsel %vm110, %v277, %v278
    %v280 = vrot.slane %v273, 1
    %v281 = vsel %vm110, %v278, %v280
    %282 = vrot.lane.b32.xlu0 %v279, 127
    %v283 = vpop.permute.xlu0 %282
    %284 = vrot.lane.b32.xlu0 %v281, 127
    %v285 = vpop.permute.xlu0 %284
    %v288 = vadd.f32 %v232, %v283
    %v289 = vadd.f32 %v233, %v285
    %s290 = sld [smem:[#allocation4 + $0x3a]]
    %v291 = vstv %s290
    %v292 = vmul.f32 %v291, %v81
    %v293 = vmul.f32 %v291, %v82
    %v294 = vmul.f32 %v291, %v83
    %v298 = vrot.slane %v292, 1
    %v299 = vrot.slane %v293, 1
    %v300 = vsel %vm110, %v298, %v299
    %v301 = vrot.slane %v294, 1
    %v302 = vsel %vm110, %v299, %v301
    %303 = vrot.lane.b32.xlu0 %v300, 127
    %v304 = vpop.permute.xlu0 %303
    %305 = vrot.lane.b32.xlu0 %v302, 127
    %v306 = vpop.permute.xlu0 %305
    %v309 = vadd.f32 %v246, %v304
    %v310 = vadd.f32 %v247, %v306
    %s311 = sld [smem:[#allocation4 + $0x7]]
    %v312 = vstv %s311
    %v313 = vmul.f32 %v312, %v81
    %v314 = vmul.f32 %v312, %v82
    %v315 = vmul.f32 %v312, %v83
    %v319 = vrot.slane %v313, 2
    %v320 = vrot.slane %v314, 2
    %v321 = vsel %vm162, %v319, %v320
    %v322 = vrot.slane %v315, 2
    %v323 = vsel %vm162, %v320, %v322
    %324 = vrot.lane.b32.xlu0 %v321, 127
    %v325 = vpop.permute.xlu0 %324
    %326 = vrot.lane.b32.xlu0 %v323, 127
    %v327 = vpop.permute.xlu0 %326
    %v330 = vadd.f32 %v267, %v325
    %v331 = vadd.f32 %v268, %v327
    %s332 = sld [smem:[#allocation4 + $0x22]]
    %v333 = vstv %s332
    %v334 = vmul.f32 %v333, %v81
    %v335 = vmul.f32 %v333, %v82
    %v336 = vmul.f32 %v333, %v83
    %v340 = vrot.slane %v334, 2
    %v341 = vrot.slane %v335, 2
    %v342 = vsel %vm162, %v340, %v341
    %v343 = vrot.slane %v336, 2
    %v344 = vsel %vm162, %v341, %v343
    %345 = vrot.lane.b32.xlu0 %v342, 127
    %v346 = vpop.permute.xlu0 %345
    %347 = vrot.lane.b32.xlu0 %v344, 127
    %v348 = vpop.permute.xlu0 %347
    %v351 = vadd.f32 %v288, %v346
    %v352 = vadd.f32 %v289, %v348
    %s353 = sld [smem:[#allocation4 + $0x3d]]
    %v354 = vstv %s353
    %v355 = vmul.f32 %v354, %v81
    %v356 = vmul.f32 %v354, %v82
    %v357 = vmul.f32 %v354, %v83
    %v361 = vrot.slane %v355, 2
    %v362 = vrot.slane %v356, 2
    %v363 = vsel %vm162, %v361, %v362
    %v364 = vrot.slane %v357, 2
    %v365 = vsel %vm162, %v362, %v364
    %366 = vrot.lane.b32.xlu0 %v363, 127
    %v367 = vpop.permute.xlu0 %366
    %368 = vrot.lane.b32.xlu0 %v365, 127
    %v369 = vpop.permute.xlu0 %368
    %v372 = vadd.f32 %v309, %v367
    %v373 = vadd.f32 %v310, %v369
    %s374 = sld [smem:[#allocation4 + $0x2]]
    %v375 = vstv %s374
    %v376 = vmul.f32 %v375, %v81
    %v377 = vmul.f32 %v375, %v82
    %380 = vrot.lane.b32.xlu0 %v376, 126
    %v381 = vpop.permute.xlu0 %380
    %382 = vrot.lane.b32.xlu0 %v377, 126
    %v383 = vpop.permute.xlu0 %382
    %v386 = vadd.f32 %v330, %v381
    %v387 = vadd.f32 %v331, %v383
    %s388 = sld [smem:[#allocation4 + $0x1d]]
    %v389 = vstv %s388
    %v390 = vmul.f32 %v389, %v81
    %v391 = vmul.f32 %v389, %v82
    %394 = vrot.lane.b32.xlu0 %v390, 126
    %v395 = vpop.permute.xlu0 %394
    %396 = vrot.lane.b32.xlu0 %v391, 126
    %v397 = vpop.permute.xlu0 %396
    %v400 = vadd.f32 %v351, %v395
    %v401 = vadd.f32 %v352, %v397
    %s402 = sld [smem:[#allocation4 + $0x38]]
    %v403 = vstv %s402
    %v404 = vmul.f32 %v403, %v81
    %v405 = vmul.f32 %v403, %v82
    %408 = vrot.lane.b32.xlu0 %v404, 126
    %v409 = vpop.permute.xlu0 %408
    %410 = vrot.lane.b32.xlu0 %v405, 126
    %v411 = vpop.permute.xlu0 %410
    %v414 = vadd.f32 %v372, %v409
    %v415 = vadd.f32 %v373, %v411
    %s416 = sld [smem:[#allocation4 + $0x5]]
    %v417 = vstv %s416
    %v418 = vmul.f32 %v417, %v81
    %v419 = vmul.f32 %v417, %v82
    %v420 = vmul.f32 %v417, %v83
    %v424 = vrot.slane %v418, 1
    %v425 = vrot.slane %v419, 1
    %v426 = vsel %vm110, %v424, %v425
    %v427 = vrot.slane %v420, 1
    %v428 = vsel %vm110, %v425, %v427
    %429 = vrot.lane.b32.xlu0 %v426, 126
    %v430 = vpop.permute.xlu0 %429
    %431 = vrot.lane.b32.xlu0 %v428, 126
    %v432 = vpop.permute.xlu0 %431
    %v435 = vadd.f32 %v386, %v430
    %v436 = vadd.f32 %v387, %v432
    %s437 = sld [smem:[#allocation4 + $0x20]]
    %v438 = vstv %s437
    %v439 = vmul.f32 %v438, %v81
    %v440 = vmul.f32 %v438, %v82
    %v441 = vmul.f32 %v438, %v83
    %v445 = vrot.slane %v439, 1
    %v446 = vrot.slane %v440, 1
    %v447 = vsel %vm110, %v445, %v446
    %v448 = vrot.slane %v441, 1
    %v449 = vsel %vm110, %v446, %v448
    %450 = vrot.lane.b32.xlu0 %v447, 126
    %v451 = vpop.permute.xlu0 %450
    %452 = vrot.lane.b32.xlu0 %v449, 126
    %v453 = vpop.permute.xlu0 %452
    %v456 = vadd.f32 %v400, %v451
    %v457 = vadd.f32 %v401, %v453
    %s458 = sld [smem:[#allocation4 + $0x3b]]
    %v459 = vstv %s458
    %v460 = vmul.f32 %v459, %v81
    %v461 = vmul.f32 %v459, %v82
    %v462 = vmul.f32 %v459, %v83
    %v466 = vrot.slane %v460, 1
    %v467 = vrot.slane %v461, 1
    %v468 = vsel %vm110, %v466, %v467
    %v469 = vrot.slane %v462, 1
    %v470 = vsel %vm110, %v467, %v469
    %471 = vrot.lane.b32.xlu0 %v468, 126
    %v472 = vpop.permute.xlu0 %471
    %473 = vrot.lane.b32.xlu0 %v470, 126
    %v474 = vpop.permute.xlu0 %473
    %v477 = vadd.f32 %v414, %v472
    %v478 = vadd.f32 %v415, %v474
    %s479 = sld [smem:[#allocation4 + $0x8]]
    %v480 = vstv %s479
    %v481 = vmul.f32 %v480, %v81
    %v482 = vmul.f32 %v480, %v82
    %v483 = vmul.f32 %v480, %v83
    %v487 = vrot.slane %v481, 2
    %v488 = vrot.slane %v482, 2
    %v489 = vsel %vm162, %v487, %v488
    %v490 = vrot.slane %v483, 2
    %v491 = vsel %vm162, %v488, %v490
    %492 = vrot.lane.b32.xlu0 %v489, 126
    %v493 = vpop.permute.xlu0 %492
    %494 = vrot.lane.b32.xlu0 %v491, 126
    %v495 = vpop.permute.xlu0 %494
    %v498 = vadd.f32 %v435, %v493
    %v499 = vadd.f32 %v436, %v495
    %s500 = sld [smem:[#allocation4 + $0x23]]
    %v501 = vstv %s500
    %v502 = vmul.f32 %v501, %v81
    %v503 = vmul.f32 %v501, %v82
    %v504 = vmul.f32 %v501, %v83
    %v508 = vrot.slane %v502, 2
    %v509 = vrot.slane %v503, 2
    %v510 = vsel %vm162, %v508, %v509
    %v511 = vrot.slane %v504, 2
    %v512 = vsel %vm162, %v509, %v511
    %513 = vrot.lane.b32.xlu0 %v510, 126
    %v514 = vpop.permute.xlu0 %513
    %515 = vrot.lane.b32.xlu0 %v512, 126
    %v516 = vpop.permute.xlu0 %515
    %v519 = vadd.f32 %v456, %v514
    %v520 = vadd.f32 %v457, %v516
    %s521 = sld [smem:[#allocation4 + $0x3e]]
    %v522 = vstv %s521
    %v523 = vmul.f32 %v522, %v81
    %v524 = vmul.f32 %v522, %v82
    %v525 = vmul.f32 %v522, %v83
    %v529 = vrot.slane %v523, 2
    %v530 = vrot.slane %v524, 2
    %v531 = vsel %vm162, %v529, %v530
    %v532 = vrot.slane %v525, 2
    %v533 = vsel %vm162, %v530, %v532
    %534 = vrot.lane.b32.xlu0 %v531, 126
    %v535 = vpop.permute.xlu0 %534
    %536 = vrot.lane.b32.xlu0 %v533, 126
    %v537 = vpop.permute.xlu0 %536
    %v540 = vadd.f32 %v477, %v535
    %v541 = vadd.f32 %v478, %v537
    %s542 = scalar_lea.vmem %s5, 24
    %v543 = vld [vmem:[%s542] sm:$0xff]
    %v544 = vld [vmem:[%s542 + $0x8] sm:$0xff]
    %v545 = vld [vmem:[%s542 + $0x10] sm:$0x3]
    %s546 = sld [smem:[#allocation4 + $0x9]]
    %v547 = vstv %s546
    %v548 = vmul.f32 %v547, %v543
    %v549 = vmul.f32 %v547, %v544
    %v550 = vadd.f32 %v498, %v548
    %v551 = vadd.f32 %v499, %v549
    %s552 = sld [smem:[#allocation4 + $0x24]]
    %v553 = vstv %s552
    %v554 = vmul.f32 %v553, %v543
    %v555 = vmul.f32 %v553, %v544
    %v556 = vadd.f32 %v519, %v554
    %v557 = vadd.f32 %v520, %v555
    %s558 = sld [smem:[#allocation4 + $0x3f]]
    %v559 = vstv %s558
    %v560 = vmul.f32 %v559, %v543
    %v561 = vmul.f32 %v559, %v544
    %v562 = vadd.f32 %v540, %v560
    %v563 = vadd.f32 %v541, %v561
    %s564 = sld [smem:[#allocation4 + $0xc]]
    %v565 = vstv %s564
    %v566 = vmul.f32 %v565, %v543
    %v567 = vmul.f32 %v565, %v544
    %v568 = vmul.f32 %v565, %v545
    %v572 = vrot.slane %v566, 1
    %v573 = vrot.slane %v567, 1
    %v574 = vsel %vm110, %v572, %v573
    %v575 = vrot.slane %v568, 1
    %v576 = vsel %vm110, %v573, %v575
    %v579 = vadd.f32 %v550, %v574
    %v580 = vadd.f32 %v551, %v576
    %s581 = sld [smem:[#allocation4 + $0x27]]
    %v582 = vstv %s581
    %v583 = vmul.f32 %v582, %v543
    %v584 = vmul.f32 %v582, %v544
    %v585 = vmul.f32 %v582, %v545
    %v589 = vrot.slane %v583, 1
    %v590 = vrot.slane %v584, 1
    %v591 = vsel %vm110, %v589, %v590
    %v592 = vrot.slane %v585, 1
    %v593 = vsel %vm110, %v590, %v592
    %v596 = vadd.f32 %v556, %v591
    %v597 = vadd.f32 %v557, %v593
    %s598 = sld [smem:[#allocation4 + $0x42]]
    %v599 = vstv %s598
    %v600 = vmul.f32 %v599, %v543
    %v601 = vmul.f32 %v599, %v544
    %v602 = vmul.f32 %v599, %v545
    %v606 = vrot.slane %v600, 1
    %v607 = vrot.slane %v601, 1
    %v608 = vsel %vm110, %v606, %v607
    %v609 = vrot.slane %v602, 1
    %v610 = vsel %vm110, %v607, %v609
    %v613 = vadd.f32 %v562, %v608
    %v614 = vadd.f32 %v563, %v610
    %s615 = sld [smem:[#allocation4 + $0xf]]
    %v616 = vstv %s615
    %v617 = vmul.f32 %v616, %v543
    %v618 = vmul.f32 %v616, %v544
    %v619 = vmul.f32 %v616, %v545
    %v623 = vrot.slane %v617, 2
    %v624 = vrot.slane %v618, 2
    %v625 = vsel %vm162, %v623, %v624
    %v626 = vrot.slane %v619, 2
    %v627 = vsel %vm162, %v624, %v626
    %v630 = vadd.f32 %v579, %v625
    %v631 = vadd.f32 %v580, %v627
    %s632 = sld [smem:[#allocation4 + $0x2a]]
    %v633 = vstv %s632
    %v634 = vmul.f32 %v633, %v543
    %v635 = vmul.f32 %v633, %v544
    %v636 = vmul.f32 %v633, %v545
    %v640 = vrot.slane %v634, 2
    %v641 = vrot.slane %v635, 2
    %v642 = vsel %vm162, %v640, %v641
    %v643 = vrot.slane %v636, 2
    %v644 = vsel %vm162, %v641, %v643
    %v647 = vadd.f32 %v596, %v642
    %v648 = vadd.f32 %v597, %v644
    %s649 = sld [smem:[#allocation4 + $0x45]]
    %v650 = vstv %s649
    %v651 = vmul.f32 %v650, %v543
    %v652 = vmul.f32 %v650, %v544
    %v653 = vmul.f32 %v650, %v545
    %v657 = vrot.slane %v651, 2
    %v658 = vrot.slane %v652, 2
    %v659 = vsel %vm162, %v657, %v658
    %v660 = vrot.slane %v653, 2
    %v661 = vsel %vm162, %v658, %v660
    %v664 = vadd.f32 %v613, %v659
    %v665 = vadd.f32 %v614, %v661
    %s666 = sld [smem:[#allocation4 + $0xa]]
    %v667 = vstv %s666
    %v668 = vmul.f32 %v667, %v543
    %v669 = vmul.f32 %v667, %v544
    %672 = vrot.lane.b32.xlu0 %v668, 127
    %v673 = vpop.permute.xlu0 %672
    %674 = vrot.lane.b32.xlu0 %v669, 127
    %v675 = vpop.permute.xlu0 %674
    %v678 = vadd.f32 %v630, %v673
    %v679 = vadd.f32 %v631, %v675
    %s680 = sld [smem:[#allocation4 + $0x25]]
    %v681 = vstv %s680
    %v682 = vmul.f32 %v681, %v543
    %v683 = vmul.f32 %v681, %v544
    %686 = vrot.lane.b32.xlu0 %v682, 127
    %v687 = vpop.permute.xlu0 %686
    %688 = vrot.lane.b32.xlu0 %v683, 127
    %v689 = vpop.permute.xlu0 %688
    %v692 = vadd.f32 %v647, %v687
    %v693 = vadd.f32 %v648, %v689
    %s694 = sld [smem:[#allocation4 + $0x40]]
    %v695 = vstv %s694
    %v696 = vmul.f32 %v695, %v543
    %v697 = vmul.f32 %v695, %v544
    %700 = vrot.lane.b32.xlu0 %v696, 127
    %v701 = vpop.permute.xlu0 %700
    %702 = vrot.lane.b32.xlu0 %v697, 127
    %v703 = vpop.permute.xlu0 %702
    %v706 = vadd.f32 %v664, %v701
    %v707 = vadd.f32 %v665, %v703
    %s708 = sld [smem:[#allocation4 + $0xd]]
    %v709 = vstv %s708
    %v710 = vmul.f32 %v709, %v543
    %v711 = vmul.f32 %v709, %v544
    %v712 = vmul.f32 %v709, %v545
    %v716 = vrot.slane %v710, 1
    %v717 = vrot.slane %v711, 1
    %v718 = vsel %vm110, %v716, %v717
    %v719 = vrot.slane %v712, 1
    %v720 = vsel %vm110, %v717, %v719
    %721 = vrot.lane.b32.xlu0 %v718, 127
    %v722 = vpop.permute.xlu0 %721
    %723 = vrot.lane.b32.xlu0 %v720, 127
    %v724 = vpop.permute.xlu0 %723
    %v727 = vadd.f32 %v678, %v722
    %v728 = vadd.f32 %v679, %v724
    %s729 = sld [smem:[#allocation4 + $0x28]]
    %v730 = vstv %s729
    %v731 = vmul.f32 %v730, %v543
    %v732 = vmul.f32 %v730, %v544
    %v733 = vmul.f32 %v730, %v545
    %v737 = vrot.slane %v731, 1
    %v738 = vrot.slane %v732, 1
    %v739 = vsel %vm110, %v737, %v738
    %v740 = vrot.slane %v733, 1
    %v741 = vsel %vm110, %v738, %v740
    %742 = vrot.lane.b32.xlu0 %v739, 127
    %v743 = vpop.permute.xlu0 %742
    %744 = vrot.lane.b32.xlu0 %v741, 127
    %v745 = vpop.permute.xlu0 %744
    %v748 = vadd.f32 %v692, %v743
    %v749 = vadd.f32 %v693, %v745
    %s750 = sld [smem:[#allocation4 + $0x43]]
    %v751 = vstv %s750
    %v752 = vmul.f32 %v751, %v543
    %v753 = vmul.f32 %v751, %v544
    %v754 = vmul.f32 %v751, %v545
    %v758 = vrot.slane %v752, 1
    %v759 = vrot.slane %v753, 1
    %v760 = vsel %vm110, %v758, %v759
    %v761 = vrot.slane %v754, 1
    %v762 = vsel %vm110, %v759, %v761
    %763 = vrot.lane.b32.xlu0 %v760, 127
    %v764 = vpop.permute.xlu0 %763
    %765 = vrot.lane.b32.xlu0 %v762, 127
    %v766 = vpop.permute.xlu0 %765
    %v769 = vadd.f32 %v706, %v764
    %v770 = vadd.f32 %v707, %v766
    %s771 = sld [smem:[#allocation4 + $0x10]]
    %v772 = vstv %s771
    %v773 = vmul.f32 %v772, %v543
    %v774 = vmul.f32 %v772, %v544
    %v775 = vmul.f32 %v772, %v545
    %v779 = vrot.slane %v773, 2
    %v780 = vrot.slane %v774, 2
    %v781 = vsel %vm162, %v779, %v780
    %v782 = vrot.slane %v775, 2
    %v783 = vsel %vm162, %v780, %v782
    %784 = vrot.lane.b32.xlu0 %v781, 127
    %v785 = vpop.permute.xlu0 %784
    %786 = vrot.lane.b32.xlu0 %v783, 127
    %v787 = vpop.permute.xlu0 %786
    %v790 = vadd.f32 %v727, %v785
    %v791 = vadd.f32 %v728, %v787
    %s792 = sld [smem:[#allocation4 + $0x2b]]
    %v793 = vstv %s792
    %v794 = vmul.f32 %v793, %v543
    %v795 = vmul.f32 %v793, %v544
    %v796 = vmul.f32 %v793, %v545
    %v800 = vrot.slane %v794, 2
    %v801 = vrot.slane %v795, 2
    %v802 = vsel %vm162, %v800, %v801
    %v803 = vrot.slane %v796, 2
    %v804 = vsel %vm162, %v801, %v803
    %805 = vrot.lane.b32.xlu0 %v802, 127
    %v806 = vpop.permute.xlu0 %805
    %807 = vrot.lane.b32.xlu0 %v804, 127
    %v808 = vpop.permute.xlu0 %807
    %v811 = vadd.f32 %v748, %v806
    %v812 = vadd.f32 %v749, %v808
    %s813 = sld [smem:[#allocation4 + $0x46]]
    %v814 = vstv %s813
    %v815 = vmul.f32 %v814, %v543
    %v816 = vmul.f32 %v814, %v544
    %v817 = vmul.f32 %v814, %v545
    %v821 = vrot.slane %v815, 2
    %v822 = vrot.slane %v816, 2
    %v823 = vsel %vm162, %v821, %v822
    %v824 = vrot.slane %v817, 2
    %v825 = vsel %vm162, %v822, %v824
    %826 = vrot.lane.b32.xlu0 %v823, 127
    %v827 = vpop.permute.xlu0 %826
    %828 = vrot.lane.b32.xlu0 %v825, 127
    %v829 = vpop.permute.xlu0 %828
    %v832 = vadd.f32 %v769, %v827
    %v833 = vadd.f32 %v770, %v829
    %s834 = sld [smem:[#allocation4 + $0xb]]
    %v835 = vstv %s834
    %v836 = vmul.f32 %v835, %v543
    %v837 = vmul.f32 %v835, %v544
    %840 = vrot.lane.b32.xlu0 %v836, 126
    %v841 = vpop.permute.xlu0 %840
    %842 = vrot.lane.b32.xlu0 %v837, 126
    %v843 = vpop.permute.xlu0 %842
    %v846 = vadd.f32 %v790, %v841
    %v847 = vadd.f32 %v791, %v843
    %s848 = sld [smem:[#allocation4 + $0x26]]
    %v849 = vstv %s848
    %v850 = vmul.f32 %v849, %v543
    %v851 = vmul.f32 %v849, %v544
    %854 = vrot.lane.b32.xlu0 %v850, 126
    %v855 = vpop.permute.xlu0 %854
    %856 = vrot.lane.b32.xlu0 %v851, 126
    %v857 = vpop.permute.xlu0 %856
    %v860 = vadd.f32 %v811, %v855
    %v861 = vadd.f32 %v812, %v857
    %s862 = sld [smem:[#allocation4 + $0x41]]
    %v863 = vstv %s862
    %v864 = vmul.f32 %v863, %v543
    %v865 = vmul.f32 %v863, %v544
    %868 = vrot.lane.b32.xlu0 %v864, 126
    %v869 = vpop.permute.xlu0 %868
    %870 = vrot.lane.b32.xlu0 %v865, 126
    %v871 = vpop.permute.xlu0 %870
    %v874 = vadd.f32 %v832, %v869
    %v875 = vadd.f32 %v833, %v871
    %s876 = sld [smem:[#allocation4 + $0xe]]
    %v877 = vstv %s876
    %v878 = vmul.f32 %v877, %v543
    %v879 = vmul.f32 %v877, %v544
    %v880 = vmul.f32 %v877, %v545
    %v884 = vrot.slane %v878, 1
    %v885 = vrot.slane %v879, 1
    %v886 = vsel %vm110, %v884, %v885
    %v887 = vrot.slane %v880, 1
    %v888 = vsel %vm110, %v885, %v887
    %889 = vrot.lane.b32.xlu0 %v886, 126
    %v890 = vpop.permute.xlu0 %889
    %891 = vrot.lane.b32.xlu0 %v888, 126
    %v892 = vpop.permute.xlu0 %891
    %v895 = vadd.f32 %v846, %v890
    %v896 = vadd.f32 %v847, %v892
    %s897 = sld [smem:[#allocation4 + $0x29]]
    %v898 = vstv %s897
    %v899 = vmul.f32 %v898, %v543
    %v900 = vmul.f32 %v898, %v544
    %v901 = vmul.f32 %v898, %v545
    %v905 = vrot.slane %v899, 1
    %v906 = vrot.slane %v900, 1
    %v907 = vsel %vm110, %v905, %v906
    %v908 = vrot.slane %v901, 1
    %v909 = vsel %vm110, %v906, %v908
    %910 = vrot.lane.b32.xlu0 %v907, 126
    %v911 = vpop.permute.xlu0 %910
    %912 = vrot.lane.b32.xlu0 %v909, 126
    %v913 = vpop.permute.xlu0 %912
    %v916 = vadd.f32 %v860, %v911
    %v917 = vadd.f32 %v861, %v913
    %s918 = sld [smem:[#allocation4 + $0x44]]
    %v919 = vstv %s918
    %v920 = vmul.f32 %v919, %v543
    %v921 = vmul.f32 %v919, %v544
    %v922 = vmul.f32 %v919, %v545
    %v926 = vrot.slane %v920, 1
    %v927 = vrot.slane %v921, 1
    %v928 = vsel %vm110, %v926, %v927
    %v929 = vrot.slane %v922, 1
    %v930 = vsel %vm110, %v927, %v929
    %931 = vrot.lane.b32.xlu0 %v928, 126
    %v932 = vpop.permute.xlu0 %931
    %933 = vrot.lane.b32.xlu0 %v930, 126
    %v934 = vpop.permute.xlu0 %933
    %v937 = vadd.f32 %v874, %v932
    %v938 = vadd.f32 %v875, %v934
    %s939 = sld [smem:[#allocation4 + $0x11]]
    %v940 = vstv %s939
    %v941 = vmul.f32 %v940, %v543
    %v942 = vmul.f32 %v940, %v544
    %v943 = vmul.f32 %v940, %v545
    %v947 = vrot.slane %v941, 2
    %v948 = vrot.slane %v942, 2
    %v949 = vsel %vm162, %v947, %v948
    %v950 = vrot.slane %v943, 2
    %v951 = vsel %vm162, %v948, %v950
    %952 = vrot.lane.b32.xlu0 %v949, 126
    %v953 = vpop.permute.xlu0 %952
    %954 = vrot.lane.b32.xlu0 %v951, 126
    %v955 = vpop.permute.xlu0 %954
    %v958 = vadd.f32 %v895, %v953
    %v959 = vadd.f32 %v896, %v955
    %s960 = sld [smem:[#allocation4 + $0x2c]]
    %v961 = vstv %s960
    %v962 = vmul.f32 %v961, %v543
    %v963 = vmul.f32 %v961, %v544
    %v964 = vmul.f32 %v961, %v545
    %v968 = vrot.slane %v962, 2
    %v969 = vrot.slane %v963, 2
    %v970 = vsel %vm162, %v968, %v969
    %v971 = vrot.slane %v964, 2
    %v972 = vsel %vm162, %v969, %v971
    %973 = vrot.lane.b32.xlu0 %v970, 126
    %v974 = vpop.permute.xlu0 %973
    %975 = vrot.lane.b32.xlu0 %v972, 126
    %v976 = vpop.permute.xlu0 %975
    %v979 = vadd.f32 %v916, %v974
    %v980 = vadd.f32 %v917, %v976
    %s981 = sld [smem:[#allocation4 + $0x47]]
    %v982 = vstv %s981
    %v983 = vmul.f32 %v982, %v543
    %v984 = vmul.f32 %v982, %v544
    %v985 = vmul.f32 %v982, %v545
    %v989 = vrot.slane %v983, 2
    %v990 = vrot.slane %v984, 2
    %v991 = vsel %vm162, %v989, %v990
    %v992 = vrot.slane %v985, 2
    %v993 = vsel %vm162, %v990, %v992
    %994 = vrot.lane.b32.xlu0 %v991, 126
    %v995 = vpop.permute.xlu0 %994
    %996 = vrot.lane.b32.xlu0 %v993, 126
    %v997 = vpop.permute.xlu0 %996
    %v1000 = vadd.f32 %v937, %v995
    %v1001 = vadd.f32 %v938, %v997
    %s1002 = scalar_lea.vmem %s5, 48
    %v1003 = vld [vmem:[%s1002] sm:$0xff]
    %v1004 = vld [vmem:[%s1002 + $0x8] sm:$0xff]
    %v1005 = vld [vmem:[%s1002 + $0x10] sm:$0x3]
    %s1006 = sld [smem:[#allocation4 + $0x12]]
    %v1007 = vstv %s1006
    %v1008 = vmul.f32 %v1007, %v1003
    %v1009 = vmul.f32 %v1007, %v1004
    %v1010 = vadd.f32 %v958, %v1008
    %v1011 = vadd.f32 %v959, %v1009
    %s1012 = sld [smem:[#allocation4 + $0x2d]]
    %v1013 = vstv %s1012
    %v1014 = vmul.f32 %v1013, %v1003
    %v1015 = vmul.f32 %v1013, %v1004
    %v1016 = vadd.f32 %v979, %v1014
    %v1017 = vadd.f32 %v980, %v1015
    %s1018 = sld [smem:[#allocation4 + $0x48]]
    %v1019 = vstv %s1018
    %v1020 = vmul.f32 %v1019, %v1003
    %v1021 = vmul.f32 %v1019, %v1004
    %v1022 = vadd.f32 %v1000, %v1020
    %v1023 = vadd.f32 %v1001, %v1021
    %s1024 = sld [smem:[#allocation4 + $0x15]]
    %v1025 = vstv %s1024
    %v1026 = vmul.f32 %v1025, %v1003
    %v1027 = vmul.f32 %v1025, %v1004
    %v1028 = vmul.f32 %v1025, %v1005
    %v1032 = vrot.slane %v1026, 1
    %v1033 = vrot.slane %v1027, 1
    %v1034 = vsel %vm110, %v1032, %v1033
    %v1035 = vrot.slane %v1028, 1
    %v1036 = vsel %vm110, %v1033, %v1035
    %v1039 = vadd.f32 %v1010, %v1034
    %v1040 = vadd.f32 %v1011, %v1036
    %s1041 = sld [smem:[#allocation4 + $0x30]]
    %v1042 = vstv %s1041
    %v1043 = vmul.f32 %v1042, %v1003
    %v1044 = vmul.f32 %v1042, %v1004
    %v1045 = vmul.f32 %v1042, %v1005
    %v1049 = vrot.slane %v1043, 1
    %v1050 = vrot.slane %v1044, 1
    %v1051 = vsel %vm110, %v1049, %v1050
    %v1052 = vrot.slane %v1045, 1
    %v1053 = vsel %vm110, %v1050, %v1052
    %v1056 = vadd.f32 %v1016, %v1051
    %v1057 = vadd.f32 %v1017, %v1053
    %s1058 = sld [smem:[#allocation4 + $0x4b]]
    %v1059 = vstv %s1058
    %v1060 = vmul.f32 %v1059, %v1003
    %v1061 = vmul.f32 %v1059, %v1004
    %v1062 = vmul.f32 %v1059, %v1005
    %v1066 = vrot.slane %v1060, 1
    %v1067 = vrot.slane %v1061, 1
    %v1068 = vsel %vm110, %v1066, %v1067
    %v1069 = vrot.slane %v1062, 1
    %v1070 = vsel %vm110, %v1067, %v1069
    %v1073 = vadd.f32 %v1022, %v1068
    %v1074 = vadd.f32 %v1023, %v1070
    %s1075 = sld [smem:[#allocation4 + $0x18]]
    %v1076 = vstv %s1075
    %v1077 = vmul.f32 %v1076, %v1003
    %v1078 = vmul.f32 %v1076, %v1004
    %v1079 = vmul.f32 %v1076, %v1005
    %v1083 = vrot.slane %v1077, 2
    %v1084 = vrot.slane %v1078, 2
    %v1085 = vsel %vm162, %v1083, %v1084
    %v1086 = vrot.slane %v1079, 2
    %v1087 = vsel %vm162, %v1084, %v1086
    %v1090 = vadd.f32 %v1039, %v1085
    %v1091 = vadd.f32 %v1040, %v1087
    %s1092 = sld [smem:[#allocation4 + $0x33]]
    %v1093 = vstv %s1092
    %v1094 = vmul.f32 %v1093, %v1003
    %v1095 = vmul.f32 %v1093, %v1004
    %v1096 = vmul.f32 %v1093, %v1005
    %v1100 = vrot.slane %v1094, 2
    %v1101 = vrot.slane %v1095, 2
    %v1102 = vsel %vm162, %v1100, %v1101
    %v1103 = vrot.slane %v1096, 2
    %v1104 = vsel %vm162, %v1101, %v1103
    %v1107 = vadd.f32 %v1056, %v1102
    %v1108 = vadd.f32 %v1057, %v1104
    %s1109 = sld [smem:[#allocation4 + $0x4e]]
    %v1110 = vstv %s1109
    %v1111 = vmul.f32 %v1110, %v1003
    %v1112 = vmul.f32 %v1110, %v1004
    %v1113 = vmul.f32 %v1110, %v1005
    %v1117 = vrot.slane %v1111, 2
    %v1118 = vrot.slane %v1112, 2
    %v1119 = vsel %vm162, %v1117, %v1118
    %v1120 = vrot.slane %v1113, 2
    %v1121 = vsel %vm162, %v1118, %v1120
    %v1124 = vadd.f32 %v1073, %v1119
    %v1125 = vadd.f32 %v1074, %v1121
    %s1126 = sld [smem:[#allocation4 + $0x13]]
    %v1127 = vstv %s1126
    %v1128 = vmul.f32 %v1127, %v1003
    %v1129 = vmul.f32 %v1127, %v1004
    %1132 = vrot.lane.b32.xlu0 %v1128, 127
    %v1133 = vpop.permute.xlu0 %1132
    %1134 = vrot.lane.b32.xlu0 %v1129, 127
    %v1135 = vpop.permute.xlu0 %1134
    %v1138 = vadd.f32 %v1090, %v1133
    %v1139 = vadd.f32 %v1091, %v1135
    %s1140 = sld [smem:[#allocation4 + $0x2e]]
    %v1141 = vstv %s1140
    %v1142 = vmul.f32 %v1141, %v1003
    %v1143 = vmul.f32 %v1141, %v1004
    %1146 = vrot.lane.b32.xlu0 %v1142, 127
    %v1147 = vpop.permute.xlu0 %1146
    %1148 = vrot.lane.b32.xlu0 %v1143, 127
    %v1149 = vpop.permute.xlu0 %1148
    %v1152 = vadd.f32 %v1107, %v1147
    %v1153 = vadd.f32 %v1108, %v1149
    %s1154 = sld [smem:[#allocation4 + $0x49]]
    %v1155 = vstv %s1154
    %v1156 = vmul.f32 %v1155, %v1003
    %v1157 = vmul.f32 %v1155, %v1004
    %1160 = vrot.lane.b32.xlu0 %v1156, 127
    %v1161 = vpop.permute.xlu0 %1160
    %1162 = vrot.lane.b32.xlu0 %v1157, 127
    %v1163 = vpop.permute.xlu0 %1162
    %v1166 = vadd.f32 %v1124, %v1161
    %v1167 = vadd.f32 %v1125, %v1163
    %s1168 = sld [smem:[#allocation4 + $0x16]]
    %v1169 = vstv %s1168
    %v1170 = vmul.f32 %v1169, %v1003
    %v1171 = vmul.f32 %v1169, %v1004
    %v1172 = vmul.f32 %v1169, %v1005
    %v1176 = vrot.slane %v1170, 1
    %v1177 = vrot.slane %v1171, 1
    %v1178 = vsel %vm110, %v1176, %v1177
    %v1179 = vrot.slane %v1172, 1
    %v1180 = vsel %vm110, %v1177, %v1179
    %1181 = vrot.lane.b32.xlu0 %v1178, 127
    %v1182 = vpop.permute.xlu0 %1181
    %1183 = vrot.lane.b32.xlu0 %v1180, 127
    %v1184 = vpop.permute.xlu0 %1183
    %v1187 = vadd.f32 %v1138, %v1182
    %v1188 = vadd.f32 %v1139, %v1184
    %s1189 = sld [smem:[#allocation4 + $0x31]]
    %v1190 = vstv %s1189
    %v1191 = vmul.f32 %v1190, %v1003
    %v1192 = vmul.f32 %v1190, %v1004
    %v1193 = vmul.f32 %v1190, %v1005
    %v1197 = vrot.slane %v1191, 1
    %v1198 = vrot.slane %v1192, 1
    %v1199 = vsel %vm110, %v1197, %v1198
    %v1200 = vrot.slane %v1193, 1
    %v1201 = vsel %vm110, %v1198, %v1200
    %1202 = vrot.lane.b32.xlu0 %v1199, 127
    %v1203 = vpop.permute.xlu0 %1202
    %1204 = vrot.lane.b32.xlu0 %v1201, 127
    %v1205 = vpop.permute.xlu0 %1204
    %v1208 = vadd.f32 %v1152, %v1203
    %v1209 = vadd.f32 %v1153, %v1205
    %s1210 = sld [smem:[#allocation4 + $0x4c]]
    %v1211 = vstv %s1210
    %v1212 = vmul.f32 %v1211, %v1003
    %v1213 = vmul.f32 %v1211, %v1004
    %v1214 = vmul.f32 %v1211, %v1005
    %v1218 = vrot.slane %v1212, 1
    %v1219 = vrot.slane %v1213, 1
    %v1220 = vsel %vm110, %v1218, %v1219
    %v1221 = vrot.slane %v1214, 1
    %v1222 = vsel %vm110, %v1219, %v1221
    %1223 = vrot.lane.b32.xlu0 %v1220, 127
    %v1224 = vpop.permute.xlu0 %1223
    %1225 = vrot.lane.b32.xlu0 %v1222, 127
    %v1226 = vpop.permute.xlu0 %1225
    %v1229 = vadd.f32 %v1166, %v1224
    %v1230 = vadd.f32 %v1167, %v1226
    %s1231 = sld [smem:[#allocation4 + $0x19]]
    %v1232 = vstv %s1231
    %v1233 = vmul.f32 %v1232, %v1003
    %v1234 = vmul.f32 %v1232, %v1004
    %v1235 = vmul.f32 %v1232, %v1005
    %v1239 = vrot.slane %v1233, 2
    %v1240 = vrot.slane %v1234, 2
    %v1241 = vsel %vm162, %v1239, %v1240
    %v1242 = vrot.slane %v1235, 2
    %v1243 = vsel %vm162, %v1240, %v1242
    %1244 = vrot.lane.b32.xlu0 %v1241, 127
    %v1245 = vpop.permute.xlu0 %1244
    %1246 = vrot.lane.b32.xlu0 %v1243, 127
    %v1247 = vpop.permute.xlu0 %1246
    %v1250 = vadd.f32 %v1187, %v1245
    %v1251 = vadd.f32 %v1188, %v1247
    %s1252 = sld [smem:[#allocation4 + $0x34]]
    %v1253 = vstv %s1252
    %v1254 = vmul.f32 %v1253, %v1003
    %v1255 = vmul.f32 %v1253, %v1004
    %v1256 = vmul.f32 %v1253, %v1005
    %v1260 = vrot.slane %v1254, 2
    %v1261 = vrot.slane %v1255, 2
    %v1262 = vsel %vm162, %v1260, %v1261
    %v1263 = vrot.slane %v1256, 2
    %v1264 = vsel %vm162, %v1261, %v1263
    %1265 = vrot.lane.b32.xlu0 %v1262, 127
    %v1266 = vpop.permute.xlu0 %1265
    %1267 = vrot.lane.b32.xlu0 %v1264, 127
    %v1268 = vpop.permute.xlu0 %1267
    %v1271 = vadd.f32 %v1208, %v1266
    %v1272 = vadd.f32 %v1209, %v1268
    %s1273 = sld [smem:[#allocation4 + $0x4f]]
    %v1274 = vstv %s1273
    %v1275 = vmul.f32 %v1274, %v1003
    %v1276 = vmul.f32 %v1274, %v1004
    %v1277 = vmul.f32 %v1274, %v1005
    %v1281 = vrot.slane %v1275, 2
    %v1282 = vrot.slane %v1276, 2
    %v1283 = vsel %vm162, %v1281, %v1282
    %v1284 = vrot.slane %v1277, 2
    %v1285 = vsel %vm162, %v1282, %v1284
    %1286 = vrot.lane.b32.xlu0 %v1283, 127
    %v1287 = vpop.permute.xlu0 %1286
    %1288 = vrot.lane.b32.xlu0 %v1285, 127
    %v1289 = vpop.permute.xlu0 %1288
    %v1292 = vadd.f32 %v1229, %v1287
    %v1293 = vadd.f32 %v1230, %v1289
    %s1294 = sld [smem:[#allocation4 + $0x14]]
    %v1295 = vstv %s1294
    %v1296 = vmul.f32 %v1295, %v1003
    %v1297 = vmul.f32 %v1295, %v1004
    %1300 = vrot.lane.b32.xlu0 %v1296, 126
    %v1301 = vpop.permute.xlu0 %1300
    %1302 = vrot.lane.b32.xlu0 %v1297, 126
    %v1303 = vpop.permute.xlu0 %1302
    %v1306 = vadd.f32 %v1250, %v1301
    %v1307 = vadd.f32 %v1251, %v1303
    %s1308 = sld [smem:[#allocation4 + $0x2f]]
    %v1309 = vstv %s1308
    %v1310 = vmul.f32 %v1309, %v1003
    %v1311 = vmul.f32 %v1309, %v1004
    %1314 = vrot.lane.b32.xlu0 %v1310, 126
    %v1315 = vpop.permute.xlu0 %1314
    %1316 = vrot.lane.b32.xlu0 %v1311, 126
    %v1317 = vpop.permute.xlu0 %1316
    %v1320 = vadd.f32 %v1271, %v1315
    %v1321 = vadd.f32 %v1272, %v1317
    %s1322 = sld [smem:[#allocation4 + $0x4a]]
    %v1323 = vstv %s1322
    %v1324 = vmul.f32 %v1323, %v1003
    %v1325 = vmul.f32 %v1323, %v1004
    %1328 = vrot.lane.b32.xlu0 %v1324, 126
    %v1329 = vpop.permute.xlu0 %1328
    %1330 = vrot.lane.b32.xlu0 %v1325, 126
    %v1331 = vpop.permute.xlu0 %1330
    %v1334 = vadd.f32 %v1292, %v1329
    %v1335 = vadd.f32 %v1293, %v1331
    %s1336 = sld [smem:[#allocation4 + $0x17]]
    %v1337 = vstv %s1336
    %v1338 = vmul.f32 %v1337, %v1003
    %v1339 = vmul.f32 %v1337, %v1004
    %v1340 = vmul.f32 %v1337, %v1005
    %v1344 = vrot.slane %v1338, 1
    %v1345 = vrot.slane %v1339, 1
    %v1346 = vsel %vm110, %v1344, %v1345
    %v1347 = vrot.slane %v1340, 1
    %v1348 = vsel %vm110, %v1345, %v1347
    %1349 = vrot.lane.b32.xlu0 %v1346, 126
    %v1350 = vpop.permute.xlu0 %1349
    %1351 = vrot.lane.b32.xlu0 %v1348, 126
    %v1352 = vpop.permute.xlu0 %1351
    %v1355 = vadd.f32 %v1306, %v1350
    %v1356 = vadd.f32 %v1307, %v1352
    %s1357 = sld [smem:[#allocation4 + $0x32]]
    %v1358 = vstv %s1357
    %v1359 = vmul.f32 %v1358, %v1003
    %v1360 = vmul.f32 %v1358, %v1004
    %v1361 = vmul.f32 %v1358, %v1005
    %v1365 = vrot.slane %v1359, 1
    %v1366 = vrot.slane %v1360, 1
    %v1367 = vsel %vm110, %v1365, %v1366
    %v1368 = vrot.slane %v1361, 1
    %v1369 = vsel %vm110, %v1366, %v1368
    %1370 = vrot.lane.b32.xlu0 %v1367, 126
    %v1371 = vpop.permute.xlu0 %1370
    %1372 = vrot.lane.b32.xlu0 %v1369, 126
    %v1373 = vpop.permute.xlu0 %1372
    %v1376 = vadd.f32 %v1320, %v1371
    %v1377 = vadd.f32 %v1321, %v1373
    %s1378 = sld [smem:[#allocation4 + $0x4d]]
    %v1379 = vstv %s1378
    %v1380 = vmul.f32 %v1379, %v1003
    %v1381 = vmul.f32 %v1379, %v1004
    %v1382 = vmul.f32 %v1379, %v1005
    %v1386 = vrot.slane %v1380, 1
    %v1387 = vrot.slane %v1381, 1
    %v1388 = vsel %vm110, %v1386, %v1387
    %v1389 = vrot.slane %v1382, 1
    %v1390 = vsel %vm110, %v1387, %v1389
    %1391 = vrot.lane.b32.xlu0 %v1388, 126
    %v1392 = vpop.permute.xlu0 %1391
    %1393 = vrot.lane.b32.xlu0 %v1390, 126
    %v1394 = vpop.permute.xlu0 %1393
    %v1397 = vadd.f32 %v1334, %v1392
    %v1398 = vadd.f32 %v1335, %v1394
    %s1399 = sld [smem:[#allocation4 + $0x1a]]
    %v1400 = vstv %s1399
    %v1401 = vmul.f32 %v1400, %v1003
    %v1402 = vmul.f32 %v1400, %v1004
    %v1403 = vmul.f32 %v1400, %v1005
    %v1407 = vrot.slane %v1401, 2
    %v1408 = vrot.slane %v1402, 2
    %v1409 = vsel %vm162, %v1407, %v1408
    %v1410 = vrot.slane %v1403, 2
    %v1411 = vsel %vm162, %v1408, %v1410
    %1412 = vrot.lane.b32.xlu0 %v1409, 126
    %v1413 = vpop.permute.xlu0 %1412
    %1414 = vrot.lane.b32.xlu0 %v1411, 126
    %v1415 = vpop.permute.xlu0 %1414
    %v1418 = vadd.f32 %v1355, %v1413
    %v1419 = vadd.f32 %v1356, %v1415
    %s1420 = sld [smem:[#allocation4 + $0x35]]
    %v1421 = vstv %s1420
    %v1422 = vmul.f32 %v1421, %v1003
    %v1423 = vmul.f32 %v1421, %v1004
    %v1424 = vmul.f32 %v1421, %v1005
    %v1428 = vrot.slane %v1422, 2
    %v1429 = vrot.slane %v1423, 2
    %v1430 = vsel %vm162, %v1428, %v1429
    %v1431 = vrot.slane %v1424, 2
    %v1432 = vsel %vm162, %v1429, %v1431
    %1433 = vrot.lane.b32.xlu0 %v1430, 126
    %v1434 = vpop.permute.xlu0 %1433
    %1435 = vrot.lane.b32.xlu0 %v1432, 126
    %v1436 = vpop.permute.xlu0 %1435
    %v1439 = vadd.f32 %v1376, %v1434
    %v1440 = vadd.f32 %v1377, %v1436
    %s1441 = sld [smem:[#allocation4 + $0x50]]
    %v1442 = vstv %s1441
    %v1443 = vmul.f32 %v1442, %v1003
    %v1444 = vmul.f32 %v1442, %v1004
    %v1445 = vmul.f32 %v1442, %v1005
    %v1449 = vrot.slane %v1443, 2
    %v1450 = vrot.slane %v1444, 2
    %v1451 = vsel %vm162, %v1449, %v1450
    %v1452 = vrot.slane %v1445, 2
    %v1453 = vsel %vm162, %v1450, %v1452
    %1454 = vrot.lane.b32.xlu0 %v1451, 126
    %v1455 = vpop.permute.xlu0 %1454
    %1456 = vrot.lane.b32.xlu0 %v1453, 126
    %v1457 = vpop.permute.xlu0 %1456
    %v1460 = vadd.f32 %v1397, %v1455
    %v1461 = vadd.f32 %v1398, %v1457
    %v1462 = vld [vmem:[%s5 + $0x1] sm:$0xff]
    %v1463 = vld [vmem:[%s5 + $0x9] sm:$0xff]
    %v1464 = vld [vmem:[%s542 + $0x1] sm:$0xff]
    %v1465 = vld [vmem:[%s542 + $0x9] sm:$0xff]
    %v1466 = vld [vmem:[%s1002 + $0x1] sm:$0xff]
    %v1467 = vld [vmem:[%s1002 + $0x9] sm:$0xff]
    %v1468 = vmul.f32 %v1462, 0.2989
    %v1469 = vmul.f32 %v1463, 0.2989
    %v1470 = vmul.f32 %v1464, 0.587
    %v1471 = vmul.f32 %v1465, 0.587
    %v1472 = vadd.f32 %v1468, %v1470
    %v1473 = vadd.f32 %v1469, %v1471
    %v1474 = vmul.f32 %v1466, 0.114
    %v1475 = vmul.f32 %v1467, 0.114
    %v1476 = vadd.f32 %v1472, %v1474
    %v1477 = vadd.f32 %v1473, %v1475
    %v1478 = vmul.f32 %v1418, 0.2989
    %v1479 = vmul.f32 %v1419, 0.2989
    %v1480 = vmul.f32 %v1439, 0.587
    %v1481 = vmul.f32 %v1440, 0.587
    %v1482 = vadd.f32 %v1478, %v1480
    %v1483 = vadd.f32 %v1479, %v1481
    %v1484 = vmul.f32 %v1460, 0.114
    %v1485 = vmul.f32 %v1461, 0.114
    %v1486 = vadd.f32 %v1482, %v1484
    %v1487 = vadd.f32 %v1483, %v1485
    %1490 = vrot.lane.b32.xlu0 %v1486, 1
    %v1491 = vpop.permute.xlu0 %1490
    %1492 = vrot.lane.b32.xlu0 %v1487, 1
    %v1493 = vpop.permute.xlu0 %1492
    %v1496 = vsub.f32 %v1476, %v1491
    %v1497 = vsub.f32 %v1477, %v1493
    %s1498 = sld [smem:[#allocation3]]
    %v1499 = vstv %s1498
    %v1500 = vsub.f32 %v1496, %v1499
    %v1501 = vsub.f32 %v1497, %v1499
    %v1502 = vmax.f32 %v1500, 0.0
    %v1503 = vmax.f32 %v1501, 0.0
    %1506 = vrot.lane.b32.xlu0 %v1418, 1
    %v1507 = vpop.permute.xlu0 %1506
    %1508 = vrot.lane.b32.xlu0 %v1419, 1
    %v1509 = vpop.permute.xlu0 %1508
    %vm1512 = vcmask 285704
    %1513 = vst.msk [vmem:[#allocation2 + $0x1] sm:$0xff] %vm1512, %v1507
    %1514 = vst.msk [vmem:[#allocation2 + $0x9] sm:$0xff] %vm1512, %v1509
    %1517 = vrot.lane.b32.xlu0 %v1439, 1
    %v1518 = vpop.permute.xlu0 %1517
    %1519 = vrot.lane.b32.xlu0 %v1440, 1
    %v1520 = vpop.permute.xlu0 %1519
    %s1523 = scalar_lea.vmem [#allocation2], 24
    %1524 = vst.msk [vmem:[%s1523 + $0x1] sm:$0xff] %vm1512, %v1518
    %1525 = vst.msk [vmem:[%s1523 + $0x9] sm:$0xff] %vm1512, %v1520
    %1528 = vrot.lane.b32.xlu0 %v1460, 1
    %v1529 = vpop.permute.xlu0 %1528
    %1530 = vrot.lane.b32.xlu0 %v1461, 1
    %v1531 = vpop.permute.xlu0 %1530
    %s1534 = scalar_lea.vmem [#allocation2], 48
    %1535 = vst.msk [vmem:[%s1534 + $0x1] sm:$0xff] %vm1512, %v1529
    %1536 = vst.msk [vmem:[%s1534 + $0x9] sm:$0xff] %vm1512, %v1531
    %v1537 = vlaneseq
    %v1538 = vshrl.u32 %v1537, 7
    %v1539 = vadd.s32 %v1538, 8
    %v1540 = vlaneseq
    %v1541 = vand.u32 %v1540, 127
    %vm1542 = vcmp.eq.s32.totalorder %v1538, %v1541
    %vm1543 = vcmp.eq.s32.totalorder %v1539, %v1541
    %v1544 = vsel %vm1542, 1, 0
    %v1545 = vsel %vm1543, 1, 0
    %v1546 = vcvt.s32.f32 %v1544
    %v1547 = vcvt.s32.f32 %v1545
    %1550 = vrot.lane.b32.xlu0 %v1502, 127
    %v1551 = vpop.permute.xlu0 %1550
    %1552 = vrot.lane.b32.xlu0 %v1503, 127
    %v1553 = vpop.permute.xlu0 %1552
    %vm1554 = vcmask 130048
    %v1556 = vsel %vm1554, %v1546, 0
    %v1559 = vsel %vm1554, %v1547, 0
    %v1561 = vsel %vm1554, %v1551, 0
    %v1563 = vsel %vm1554, %v1553, 0
    %1565 = vmatprep.subr.mxu0 0.0
    %v1566 = vand.u32 %v1561, 4294901760
    %1567 = vmatpush1.xpose.msra.mxu0 %v1566
    %1568 = vmatprep.subr.mxu0 0.0
    %v1569 = vand.u32 %v1563, 4294901760
    %1570 = vmatpush1.xpose.msra.mxu0 %v1569
    %1571 = vmatprep.subr.mxu0 0.0
    %1572 = vmatpush1.xpose.msra.mxu0 0.0
    %1573 = vmatprep.subr.mxu0 0.0
    %1574 = vmatpush1.xpose.msra.mxu0 0.0
    %1575 = vmatprep.subr.mxu0 0.0
    %1576 = vmatpush1.xpose.msra.mxu0 0.0
    %1577 = vmatprep.subr.mxu0 0.0
    %1578 = vmatpush1.xpose.msra.mxu0 0.0
    %1579 = vmatprep.subr.mxu0 0.0
    %1580 = vmatpush1.xpose.msra.mxu0 0.0
    %1581 = vmatprep.subr.mxu0 0.0
    %1582 = vmatpush1.xpose.msra.mxu0 0.0
    %1583 = vmatprep.subr.mxu0 0.0
    %1584 = vmatpush1.xpose.msra.mxu0 0.0
    %1585 = vmatprep.subr.mxu0 0.0
    %1586 = vmatpush1.xpose.msra.mxu0 0.0
    %1587 = vmatprep.subr.mxu0 0.0
    %1588 = vmatpush1.xpose.msra.mxu0 0.0
    %1589 = vmatprep.subr.mxu0 0.0
    %1590 = vmatpush1.xpose.msra.mxu0 0.0
    %1591 = vmatprep.subr.mxu0 0.0
    %1592 = vmatpush1.xpose.msra.mxu0 0.0
    %1593 = vmatprep.subr.mxu0 0.0
    %1594 = vmatpush1.xpose.msra.mxu0 0.0
    %1595 = vmatprep.subr.mxu0 0.0
    %1596 = vmatpush1.xpose.msra.mxu0 0.0
    %1597 = vmatprep.subr.mxu0 0.0
    %1598 = vmatpush1.xpose.msra.mxu0 0.0
    %1599 = vmatprep.subr.mxu0 0.0
    %1600 = vmatpush1.xpose.msra.mxu0 0.0
    %1601 = vmatprep.subr.mxu0 0.0
    %1602 = vmatpush1.xpose.msra.mxu0 0.0
    %1603 = vmatprep.subr.mxu0 0.0
    %1604 = vmatpush1.xpose.msra.mxu0 0.0
    %1605 = vmatprep.subr.mxu0 0.0
    %1606 = vmatpush1.xpose.msra.mxu0 0.0
    %1607 = vmatprep.subr.mxu0 0.0
    %1608 = vmatpush1.xpose.msra.mxu0 0.0
    %1609 = vmatprep.subr.mxu0 0.0
    %1610 = vmatpush1.xpose.msra.mxu0 0.0
    %1611 = vmatprep.subr.mxu0 0.0
    %1612 = vmatpush1.xpose.msra.mxu0 0.0
    %1613 = vmatprep.subr.mxu0 0.0
    %1614 = vmatpush1.xpose.msra.mxu0 0.0
    %1615 = vmatprep.subr.mxu0 0.0
    %1616 = vmatpush1.xpose.msra.mxu0 0.0
    %1617 = vmatprep.subr.mxu0 0.0
    %1618 = vmatpush1.xpose.msra.mxu0 0.0
    %1619 = vmatprep.subr.mxu0 0.0
    %1620 = vmatpush1.xpose.msra.mxu0 0.0
    %1621 = vmatprep.subr.mxu0 0.0
    %1622 = vmatpush1.xpose.msra.mxu0 0.0
    %1623 = vmatprep.subr.mxu0 0.0
    %1624 = vmatpush1.xpose.msra.mxu0 0.0
    %1625 = vmatprep.subr.mxu0 0.0
    %1626 = vmatpush1.xpose.msra.mxu0 0.0
    %1627 = vmatprep.subr.mxu0 0.0
    %1628 = vmatpush1.xpose.msra.mxu0 0.0
    %1629 = vmatprep.subr.mxu0 0.0
    %1630 = vmatpush1.xpose.msra.mxu0 0.0
    %1631 = vmatprep.mubr.f32.mxu0 0.0
    %v1632 = vand.u32 %v1556, 4294901760
    %v1633 = vsub.f32 %v1556, %v1632
    %v1634 = vand.u32 %v1633, 4294901760
    %v1635 = vsub.f32 %v1633, %v1634
    %v1636 = vand.u32 %v1635, 4294901760
    %1637 = vmatmul.mubr.f32.gmra.mrb[0].mxu0 %v1636
    %v1638 = vpop.f32.mrb[0].mxu0
    %v1639 = vadd.f32 0.0, %v1638
    %v1640 = vpop.f32.mrb[0].mxu0
    %1641 = vmatprep.mubr.f32.mxu0 0.0
    %v1642 = vand.u32 %v1559, 4294901760
    %v1643 = vsub.f32 %v1559, %v1642
    %v1644 = vand.u32 %v1643, 4294901760
    %v1645 = vsub.f32 %v1643, %v1644
    %v1646 = vand.u32 %v1645, 4294901760
    %1647 = vmatmul.mubr.f32.gmra.mrb[0].mxu0 %v1646
    %v1648 = vpop.f32.mrb[0].mxu0
    %v1649 = vadd.f32 0.0, %v1648
    %v1650 = vpop.f32.mrb[0].mxu0
    %1651 = vdwg.mxu0
    %1652 = vmatprep.subr.mxu0 0.0
    %v1653 = vand.u32 %v1561, 4294901760
    %v1654 = vsub.f32 %v1561, %v1653
    %v1655 = vand.u32 %v1654, 4294901760
    %v1656 = vsub.f32 %v1654, %v1655
    %v1657 = vand.u32 %v1656, 4294901760
    %1658 = vmatpush1.xpose.msra.mxu0 %v1657
    %1659 = vmatprep.subr.mxu0 0.0
    %v1660 = vand.u32 %v1563, 4294901760
    %v1661 = vsub.f32 %v1563, %v1660
    %v1662 = vand.u32 %v1661, 4294901760
    %v1663 = vsub.f32 %v1661, %v1662
    %v1664 = vand.u32 %v1663, 4294901760
    %1665 = vmatpush1.xpose.msra.mxu0 %v1664
    %1666 = vmatprep.subr.mxu0 0.0
    %1667 = vmatpush1.xpose.msra.mxu0 0.0
    %1668 = vmatprep.subr.mxu0 0.0
    %1669 = vmatpush1.xpose.msra.mxu0 0.0
    %1670 = vmatprep.subr.mxu0 0.0
    %1671 = vmatpush1.xpose.msra.mxu0 0.0
    %1672 = vmatprep.subr.mxu0 0.0
    %1673 = vmatpush1.xpose.msra.mxu0 0.0
    %1674 = vmatprep.subr.mxu0 0.0
    %1675 = vmatpush1.xpose.msra.mxu0 0.0
    %1676 = vmatprep.subr.mxu0 0.0
    %1677 = vmatpush1.xpose.msra.mxu0 0.0
    %1678 = vmatprep.subr.mxu0 0.0
    %1679 = vmatpush1.xpose.msra.mxu0 0.0
    %1680 = vmatprep.subr.mxu0 0.0
    %1681 = vmatpush1.xpose.msra.mxu0 0.0
    %1682 = vmatprep.subr.mxu0 0.0
    %1683 = vmatpush1.xpose.msra.mxu0 0.0
    %1684 = vmatprep.subr.mxu0 0.0
    %1685 = vmatpush1.xpose.msra.mxu0 0.0
    %1686 = vmatprep.subr.mxu0 0.0
    %1687 = vmatpush1.xpose.msra.mxu0 0.0
    %1688 = vmatprep.subr.mxu0 0.0
    %1689 = vmatpush1.xpose.msra.mxu0 0.0
    %1690 = vmatprep.subr.mxu0 0.0
    %1691 = vmatpush1.xpose.msra.mxu0 0.0
    %1692 = vmatprep.subr.mxu0 0.0
    %1693 = vmatpush1.xpose.msra.mxu0 0.0
    %1694 = vmatprep.subr.mxu0 0.0
    %1695 = vmatpush1.xpose.msra.mxu0 0.0
    %1696 = vmatprep.subr.mxu0 0.0
    %1697 = vmatpush1.xpose.msra.mxu0 0.0
    %1698 = vmatprep.subr.mxu0 0.0
    %1699 = vmatpush1.xpose.msra.mxu0 0.0
    %1700 = vmatprep.subr.mxu0 0.0
    %1701 = vmatpush1.xpose.msra.mxu0 0.0
    %1702 = vmatprep.subr.mxu0 0.0
    %1703 = vmatpush1.xpose.msra.mxu0 0.0
    %1704 = vmatprep.subr.mxu0 0.0
    %1705 = vmatpush1.xpose.msra.mxu0 0.0
    %1706 = vmatprep.subr.mxu0 0.0
    %1707 = vmatpush1.xpose.msra.mxu0 0.0
    %1708 = vmatprep.subr.mxu0 0.0
    %1709 = vmatpush1.xpose.msra.mxu0 0.0
    %1710 = vmatprep.subr.mxu0 0.0
    %1711 = vmatpush1.xpose.msra.mxu0 0.0
    %1712 = vmatprep.subr.mxu0 0.0
    %1713 = vmatpush1.xpose.msra.mxu0 0.0
    %1714 = vmatprep.subr.mxu0 0.0
    %1715 = vmatpush1.xpose.msra.mxu0 0.0
    %1716 = vmatprep.subr.mxu0 0.0
    %1717 = vmatpush1.xpose.msra.mxu0 0.0
    %1718 = vmatprep.subr.mxu0 0.0
    %1719 = vmatpush1.xpose.msra.mxu0 0.0
    %1720 = vmatprep.subr.mxu0 0.0
    %1721 = vmatpush1.xpose.msra.mxu0 0.0
    %1722 = vmatprep.subr.mxu0 0.0
    %1723 = vmatpush1.xpose.msra.mxu0 0.0
    %1724 = vmatprep.subr.mxu0 0.0
    %1725 = vmatpush1.xpose.msra.mxu0 0.0
    %1726 = vmatprep.mubr.f32.mxu0 0.0
    %v1727 = vand.u32 %v1556, 4294901760
    %1728 = vmatmul.mubr.f32.gmra.mrb[0].mxu0 %v1727
    %v1729 = vpop.f32.mrb[0].mxu0
    %v1730 = vadd.f32 %v1639, %v1729
    %v1731 = vpop.f32.mrb[0].mxu0
    %1732 = vmatprep.mubr.f32.mxu0 0.0
    %v1733 = vand.u32 %v1559, 4294901760
    %1734 = vmatmul.mubr.f32.gmra.mrb[0].mxu0 %v1733
    %v1735 = vpop.f32.mrb[0].mxu0
    %v1736 = vadd.f32 %v1649, %v1735
    %v1737 = vpop.f32.mrb[0].mxu0
    %1738 = vdwg.mxu0
    %1739 = vmatprep.subr.mxu0 0.0
    %v1740 = vand.u32 %v1561, 4294901760
    %v1741 = vsub.f32 %v1561, %v1740
    %1742 = vmatpush1.xpose.msra.mxu0 %v1741
    %1743 = vmatprep.subr.mxu0 0.0
    %v1744 = vand.u32 %v1563, 4294901760
    %v1745 = vsub.f32 %v1563, %v1744
    %1746 = vmatpush1.xpose.msra.mxu0 %v1745
    %1747 = vmatprep.subr.mxu0 0.0
    %1748 = vmatpush1.xpose.msra.mxu0 0.0
    %1749 = vmatprep.subr.mxu0 0.0
    %1750 = vmatpush1.xpose.msra.mxu0 0.0
    %1751 = vmatprep.subr.mxu0 0.0
    %1752 = vmatpush1.xpose.msra.mxu0 0.0
    %1753 = vmatprep.subr.mxu0 0.0
    %1754 = vmatpush1.xpose.msra.mxu0 0.0
    %1755 = vmatprep.subr.mxu0 0.0
    %1756 = vmatpush1.xpose.msra.mxu0 0.0
    %1757 = vmatprep.subr.mxu0 0.0
    %1758 = vmatpush1.xpose.msra.mxu0 0.0
    %1759 = vmatprep.subr.mxu0 0.0
    %1760 = vmatpush1.xpose.msra.mxu0 0.0
    %1761 = vmatprep.subr.mxu0 0.0
    %1762 = vmatpush1.xpose.msra.mxu0 0.0
    %1763 = vmatprep.subr.mxu0 0.0
    %1764 = vmatpush1.xpose.msra.mxu0 0.0
    %1765 = vmatprep.subr.mxu0 0.0
    %1766 = vmatpush1.xpose.msra.mxu0 0.0
    %1767 = vmatprep.subr.mxu0 0.0
    %1768 = vmatpush1.xpose.msra.mxu0 0.0
    %1769 = vmatprep.subr.mxu0 0.0
    %1770 = vmatpush1.xpose.msra.mxu0 0.0
    %1771 = vmatprep.subr.mxu0 0.0
    %1772 = vmatpush1.xpose.msra.mxu0 0.0
    %1773 = vmatprep.subr.mxu0 0.0
    %1774 = vmatpush1.xpose.msra.mxu0 0.0
    %1775 = vmatprep.subr.mxu0 0.0
    %1776 = vmatpush1.xpose.msra.mxu0 0.0
    %1777 = vmatprep.subr.mxu0 0.0
    %1778 = vmatpush1.xpose.msra.mxu0 0.0
    %1779 = vmatprep.subr.mxu0 0.0
    %1780 = vmatpush1.xpose.msra.mxu0 0.0
    %1781 = vmatprep.subr.mxu0 0.0
    %1782 = vmatpush1.xpose.msra.mxu0 0.0
    %1783 = vmatprep.subr.mxu0 0.0
    %1784 = vmatpush1.xpose.msra.mxu0 0.0
    %1785 = vmatprep.subr.mxu0 0.0
    %1786 = vmatpush1.xpose.msra.mxu0 0.0
    %1787 = vmatprep.subr.mxu0 0.0
    %1788 = vmatpush1.xpose.msra.mxu0 0.0
    %1789 = vmatprep.subr.mxu0 0.0
    %1790 = vmatpush1.xpose.msra.mxu0 0.0
    %1791 = vmatprep.subr.mxu0 0.0
    %1792 = vmatpush1.xpose.msra.mxu0 0.0
    %1793 = vmatprep.subr.mxu0 0.0
    %1794 = vmatpush1.xpose.msra.mxu0 0.0
    %1795 = vmatprep.subr.mxu0 0.0
    %1796 = vmatpush1.xpose.msra.mxu0 0.0
    %1797 = vmatprep.subr.mxu0 0.0
    %1798 = vmatpush1.xpose.msra.mxu0 0.0
    %1799 = vmatprep.subr.mxu0 0.0
    %1800 = vmatpush1.xpose.msra.mxu0 0.0
    %1801 = vmatprep.subr.mxu0 0.0
    %1802 = vmatpush1.xpose.msra.mxu0 0.0
    %1803 = vmatprep.subr.mxu0 0.0
    %1804 = vmatpush1.xpose.msra.mxu0 0.0
    %1805 = vmatprep.subr.mxu0 0.0
    %1806 = vmatpush1.xpose.msra.mxu0 0.0
    %1807 = vmatprep.mubr.f32.mxu0 0.0
    %v1808 = vand.u32 %v1556, 4294901760
    %v1809 = vsub.f32 %v1556, %v1808
    %1810 = vmatmul.mubr.f32.gmra.mrb[0].mxu0 %v1809
    %v1811 = vpop.f32.mrb[0].mxu0
    %v1812 = vadd.f32 %v1730, %v1811
    %v1813 = vpop.f32.mrb[0].mxu0
    %1814 = vmatprep.mubr.f32.mxu0 0.0
    %v1815 = vand.u32 %v1559, 4294901760
    %v1816 = vsub.f32 %v1559, %v1815
    %1817 = vmatmul.mubr.f32.gmra.mrb[0].mxu0 %v1816
    %v1818 = vpop.f32.mrb[0].mxu0
    %v1819 = vadd.f32 %v1736, %v1818
    %v1820 = vpop.f32.mrb[0].mxu0
    %1821 = vdwg.mxu0
    %1822 = vmatprep.subr.mxu0 0.0
    %v1823 = vand.u32 %v1561, 4294901760
    %1824 = vmatpush1.xpose.msra.mxu0 %v1823
    %1825 = vmatprep.subr.mxu0 0.0
    %v1826 = vand.u32 %v1563, 4294901760
    %1827 = vmatpush1.xpose.msra.mxu0 %v1826
    %1828 = vmatprep.subr.mxu0 0.0
    %1829 = vmatpush1.xpose.msra.mxu0 0.0
    %1830 = vmatprep.subr.mxu0 0.0
    %1831 = vmatpush1.xpose.msra.mxu0 0.0
    %1832 = vmatprep.subr.mxu0 0.0
    %1833 = vmatpush1.xpose.msra.mxu0 0.0
    %1834 = vmatprep.subr.mxu0 0.0
    %1835 = vmatpush1.xpose.msra.mxu0 0.0
    %1836 = vmatprep.subr.mxu0 0.0
    %1837 = vmatpush1.xpose.msra.mxu0 0.0
    %1838 = vmatprep.subr.mxu0 0.0
    %1839 = vmatpush1.xpose.msra.mxu0 0.0
    %1840 = vmatprep.subr.mxu0 0.0
    %1841 = vmatpush1.xpose.msra.mxu0 0.0
    %1842 = vmatprep.subr.mxu0 0.0
    %1843 = vmatpush1.xpose.msra.mxu0 0.0
    %1844 = vmatprep.subr.mxu0 0.0
    %1845 = vmatpush1.xpose.msra.mxu0 0.0
    %1846 = vmatprep.subr.mxu0 0.0
    %1847 = vmatpush1.xpose.msra.mxu0 0.0
    %1848 = vmatprep.subr.mxu0 0.0
    %1849 = vmatpush1.xpose.msra.mxu0 0.0
    %1850 = vmatprep.subr.mxu0 0.0
    %1851 = vmatpush1.xpose.msra.mxu0 0.0
    %1852 = vmatprep.subr.mxu0 0.0
    %1853 = vmatpush1.xpose.msra.mxu0 0.0
    %1854 = vmatprep.subr.mxu0 0.0
    %1855 = vmatpush1.xpose.msra.mxu0 0.0
    %1856 = vmatprep.subr.mxu0 0.0
    %1857 = vmatpush1.xpose.msra.mxu0 0.0
    %1858 = vmatprep.subr.mxu0 0.0
    %1859 = vmatpush1.xpose.msra.mxu0 0.0
    %1860 = vmatprep.subr.mxu0 0.0
    %1861 = vmatpush1.xpose.msra.mxu0 0.0
    %1862 = vmatprep.subr.mxu0 0.0
    %1863 = vmatpush1.xpose.msra.mxu0 0.0
    %1864 = vmatprep.subr.mxu0 0.0
    %1865 = vmatpush1.xpose.msra.mxu0 0.0
    %1866 = vmatprep.subr.mxu0 0.0
    %1867 = vmatpush1.xpose.msra.mxu0 0.0
    %1868 = vmatprep.subr.mxu0 0.0
    %1869 = vmatpush1.xpose.msra.mxu0 0.0
    %1870 = vmatprep.subr.mxu0 0.0
    %1871 = vmatpush1.xpose.msra.mxu0 0.0
    %1872 = vmatprep.subr.mxu0 0.0
    %1873 = vmatpush1.xpose.msra.mxu0 0.0
    %1874 = vmatprep.subr.mxu0 0.0
    %1875 = vmatpush1.xpose.msra.mxu0 0.0
    %1876 = vmatprep.subr.mxu0 0.0
    %1877 = vmatpush1.xpose.msra.mxu0 0.0
    %1878 = vmatprep.subr.mxu0 0.0
    %1879 = vmatpush1.xpose.msra.mxu0 0.0
    %1880 = vmatprep.subr.mxu0 0.0
    %1881 = vmatpush1.xpose.msra.mxu0 0.0
    %1882 = vmatprep.subr.mxu0 0.0
    %1883 = vmatpush1.xpose.msra.mxu0 0.0
    %1884 = vmatprep.subr.mxu0 0.0
    %1885 = vmatpush1.xpose.msra.mxu0 0.0
    %1886 = vmatprep.subr.mxu0 0.0
    %1887 = vmatpush1.xpose.msra.mxu0 0.0
    %1888 = vmatprep.mubr.f32.mxu0 0.0
    %v1889 = vand.u32 %v1556, 4294901760
    %v1890 = vsub.f32 %v1556, %v1889
    %v1891 = vand.u32 %v1890, 4294901760
    %1892 = vmatmul.mubr.f32.gmra.mrb[0].mxu0 %v1891
    %v1893 = vpop.f32.mrb[0].mxu0
    %v1894 = vadd.f32 %v1812, %v1893
    %v1895 = vpop.f32.mrb[0].mxu0
    %1896 = vmatprep.mubr.f32.mxu0 0.0
    %v1897 = vand.u32 %v1559, 4294901760
    %v1898 = vsub.f32 %v1559, %v1897
    %v1899 = vand.u32 %v1898, 4294901760
    %1900 = vmatmul.mubr.f32.gmra.mrb[0].mxu0 %v1899
    %v1901 = vpop.f32.mrb[0].mxu0
    %v1902 = vadd.f32 %v1819, %v1901
    %v1903 = vpop.f32.mrb[0].mxu0
    %1904 = vdwg.mxu0
    %1905 = vmatprep.subr.mxu0 0.0
    %v1906 = vand.u32 %v1561, 4294901760
    %v1907 = vsub.f32 %v1561, %v1906
    %v1908 = vand.u32 %v1907, 4294901760
    %1909 = vmatpush1.xpose.msra.mxu0 %v1908
    %1910 = vmatprep.subr.mxu0 0.0
    %v1911 = vand.u32 %v1563, 4294901760
    %v1912 = vsub.f32 %v1563, %v1911
    %v1913 = vand.u32 %v1912, 4294901760
    %1914 = vmatpush1.xpose.msra.mxu0 %v1913
    %1915 = vmatprep.subr.mxu0 0.0
    %1916 = vmatpush1.xpose.msra.mxu0 0.0
    %1917 = vmatprep.subr.mxu0 0.0
    %1918 = vmatpush1.xpose.msra.mxu0 0.0
    %1919 = vmatprep.subr.mxu0 0.0
    %1920 = vmatpush1.xpose.msra.mxu0 0.0
    %1921 = vmatprep.subr.mxu0 0.0
    %1922 = vmatpush1.xpose.msra.mxu0 0.0
    %1923 = vmatprep.subr.mxu0 0.0
    %1924 = vmatpush1.xpose.msra.mxu0 0.0
    %1925 = vmatprep.subr.mxu0 0.0
    %1926 = vmatpush1.xpose.msra.mxu0 0.0
    %1927 = vmatprep.subr.mxu0 0.0
    %1928 = vmatpush1.xpose.msra.mxu0 0.0
    %1929 = vmatprep.subr.mxu0 0.0
    %1930 = vmatpush1.xpose.msra.mxu0 0.0
    %1931 = vmatprep.subr.mxu0 0.0
    %1932 = vmatpush1.xpose.msra.mxu0 0.0
    %1933 = vmatprep.subr.mxu0 0.0
    %1934 = vmatpush1.xpose.msra.mxu0 0.0
    %1935 = vmatprep.subr.mxu0 0.0
    %1936 = vmatpush1.xpose.msra.mxu0 0.0
    %1937 = vmatprep.subr.mxu0 0.0
    %1938 = vmatpush1.xpose.msra.mxu0 0.0
    %1939 = vmatprep.subr.mxu0 0.0
    %1940 = vmatpush1.xpose.msra.mxu0 0.0
    %1941 = vmatprep.subr.mxu0 0.0
    %1942 = vmatpush1.xpose.msra.mxu0 0.0
    %1943 = vmatprep.subr.mxu0 0.0
    %1944 = vmatpush1.xpose.msra.mxu0 0.0
    %1945 = vmatprep.subr.mxu0 0.0
    %1946 = vmatpush1.xpose.msra.mxu0 0.0
    %1947 = vmatprep.subr.mxu0 0.0
    %1948 = vmatpush1.xpose.msra.mxu0 0.0
    %1949 = vmatprep.subr.mxu0 0.0
    %1950 = vmatpush1.xpose.msra.mxu0 0.0
    %1951 = vmatprep.subr.mxu0 0.0
    %1952 = vmatpush1.xpose.msra.mxu0 0.0
    %1953 = vmatprep.subr.mxu0 0.0
    %1954 = vmatpush1.xpose.msra.mxu0 0.0
    %1955 = vmatprep.subr.mxu0 0.0
    %1956 = vmatpush1.xpose.msra.mxu0 0.0
    %1957 = vmatprep.subr.mxu0 0.0
    %1958 = vmatpush1.xpose.msra.mxu0 0.0
    %1959 = vmatprep.subr.mxu0 0.0
    %1960 = vmatpush1.xpose.msra.mxu0 0.0
    %1961 = vmatprep.subr.mxu0 0.0
    %1962 = vmatpush1.xpose.msra.mxu0 0.0
    %1963 = vmatprep.subr.mxu0 0.0
    %1964 = vmatpush1.xpose.msra.mxu0 0.0
    %1965 = vmatprep.subr.mxu0 0.0
    %1966 = vmatpush1.xpose.msra.mxu0 0.0
    %1967 = vmatprep.subr.mxu0 0.0
    %1968 = vmatpush1.xpose.msra.mxu0 0.0
    %1969 = vmatprep.subr.mxu0 0.0
    %1970 = vmatpush1.xpose.msra.mxu0 0.0
    %1971 = vmatprep.subr.mxu0 0.0
    %1972 = vmatpush1.xpose.msra.mxu0 0.0
    %1973 = vmatprep.subr.mxu0 0.0
    %1974 = vmatpush1.xpose.msra.mxu0 0.0
    %1975 = vmatprep.mubr.f32.mxu0 0.0
    %v1976 = vand.u32 %v1556, 4294901760
    %1977 = vmatmul.mubr.f32.gmra.mrb[0].mxu0 %v1976
    %v1978 = vpop.f32.mrb[0].mxu0
    %v1979 = vadd.f32 %v1894, %v1978
    %v1980 = vpop.f32.mrb[0].mxu0
    %1981 = vmatprep.mubr.f32.mxu0 0.0
    %v1982 = vand.u32 %v1559, 4294901760
    %1983 = vmatmul.mubr.f32.gmra.mrb[0].mxu0 %v1982
    %v1984 = vpop.f32.mrb[0].mxu0
    %v1985 = vadd.f32 %v1902, %v1984
    %v1986 = vpop.f32.mrb[0].mxu0
    %1987 = vdwg.mxu0
    %1988 = vmatprep.subr.mxu0 0.0
    %v1989 = vand.u32 %v1561, 4294901760
    %1990 = vmatpush1.xpose.msra.mxu0 %v1989
    %1991 = vmatprep.subr.mxu0 0.0
    %v1992 = vand.u32 %v1563, 4294901760
    %1993 = vmatpush1.xpose.msra.mxu0 %v1992
    %1994 = vmatprep.subr.mxu0 0.0
    %1995 = vmatpush1.xpose.msra.mxu0 0.0
    %1996 = vmatprep.subr.mxu0 0.0
    %1997 = vmatpush1.xpose.msra.mxu0 0.0
    %1998 = vmatprep.subr.mxu0 0.0
    %1999 = vmatpush1.xpose.msra.mxu0 0.0
    %2000 = vmatprep.subr.mxu0 0.0
    %2001 = vmatpush1.xpose.msra.mxu0 0.0
    %2002 = vmatprep.subr.mxu0 0.0
    %2003 = vmatpush1.xpose.msra.mxu0 0.0
    %2004 = vmatprep.subr.mxu0 0.0
    %2005 = vmatpush1.xpose.msra.mxu0 0.0
    %2006 = vmatprep.subr.mxu0 0.0
    %2007 = vmatpush1.xpose.msra.mxu0 0.0
    %2008 = vmatprep.subr.mxu0 0.0
    %2009 = vmatpush1.xpose.msra.mxu0 0.0
    %2010 = vmatprep.subr.mxu0 0.0
    %2011 = vmatpush1.xpose.msra.mxu0 0.0
    %2012 = vmatprep.subr.mxu0 0.0
    %2013 = vmatpush1.xpose.msra.mxu0 0.0
    %2014 = vmatprep.subr.mxu0 0.0
    %2015 = vmatpush1.xpose.msra.mxu0 0.0
    %2016 = vmatprep.subr.mxu0 0.0
    %2017 = vmatpush1.xpose.msra.mxu0 0.0
    %2018 = vmatprep.subr.mxu0 0.0
    %2019 = vmatpush1.xpose.msra.mxu0 0.0
    %2020 = vmatprep.subr.mxu0 0.0
    %2021 = vmatpush1.xpose.msra.mxu0 0.0
    %2022 = vmatprep.subr.mxu0 0.0
    %2023 = vmatpush1.xpose.msra.mxu0 0.0
    %2024 = vmatprep.subr.mxu0 0.0
    %2025 = vmatpush1.xpose.msra.mxu0 0.0
    %2026 = vmatprep.subr.mxu0 0.0
    %2027 = vmatpush1.xpose.msra.mxu0 0.0
    %2028 = vmatprep.subr.mxu0 0.0
    %2029 = vmatpush1.xpose.msra.mxu0 0.0
    %2030 = vmatprep.subr.mxu0 0.0
    %2031 = vmatpush1.xpose.msra.mxu0 0.0
    %2032 = vmatprep.subr.mxu0 0.0
    %2033 = vmatpush1.xpose.msra.mxu0 0.0
    %2034 = vmatprep.subr.mxu0 0.0
    %2035 = vmatpush1.xpose.msra.mxu0 0.0
    %2036 = vmatprep.subr.mxu0 0.0
    %2037 = vmatpush1.xpose.msra.mxu0 0.0
    %2038 = vmatprep.subr.mxu0 0.0
    %2039 = vmatpush1.xpose.msra.mxu0 0.0
    %2040 = vmatprep.subr.mxu0 0.0
    %2041 = vmatpush1.xpose.msra.mxu0 0.0
    %2042 = vmatprep.subr.mxu0 0.0
    %2043 = vmatpush1.xpose.msra.mxu0 0.0
    %2044 = vmatprep.subr.mxu0 0.0
    %2045 = vmatpush1.xpose.msra.mxu0 0.0
    %2046 = vmatprep.subr.mxu0 0.0
    %2047 = vmatpush1.xpose.msra.mxu0 0.0
    %2048 = vmatprep.subr.mxu0 0.0
    %2049 = vmatpush1.xpose.msra.mxu0 0.0
    %2050 = vmatprep.subr.mxu0 0.0
    %2051 = vmatpush1.xpose.msra.mxu0 0.0
    %2052 = vmatprep.subr.mxu0 0.0
    %2053 = vmatpush1.xpose.msra.mxu0 0.0
    %2054 = vmatprep.mubr.f32.mxu0 0.0
    %v2055 = vand.u32 %v1556, 4294901760
    %2056 = vmatmul.mubr.f32.gmra.mrb[0].mxu0 %v2055
    %v2057 = vpop.f32.mrb[0].mxu0
    %v2058 = vadd.f32 %v1979, %v2057
    %v2059 = vpop.f32.mrb[0].mxu0
    %2060 = vmatprep.mubr.f32.mxu0 0.0
    %v2061 = vand.u32 %v1559, 4294901760
    %2062 = vmatmul.mubr.f32.gmra.mrb[0].mxu0 %v2061
    %v2063 = vpop.f32.mrb[0].mxu0
    %v2064 = vadd.f32 %v1985, %v2063
    %v2065 = vpop.f32.mrb[0].mxu0
    %2066 = vdwg.mxu0
    %2069 = vrot.lane.b32.xlu0 %v2058, 1
    %v2070 = vpop.permute.xlu0 %2069
    %2071 = vrot.lane.b32.xlu0 %v2064, 1
    %v2072 = vpop.permute.xlu0 %2071
    %s2075 = scalar_lea.vmem [#allocation2], 72
    %vm2076 = vcmask 138248
    %2077 = vst.msk [vmem:[%s2075 + $0x1] sm:$0xff] %vm2076, %v2070
    %2078 = vst.msk [vmem:[%s2075 + $0x9] sm:$0xff] %vm2076, %v2072
    %2079 = vrot.lane.b32.xlu0 %v1502, 109
    %v2080 = vpop.permute.xlu0 %2079
    %2081 = vrot.lane.b32.xlu0 %v1503, 109
    %v2082 = vpop.permute.xlu0 %2081
    %v2083 = vsel %vm1554, %v2080, 0
    %v2085 = vsel %vm1554, %v2082, 0
    %2087 = vmatprep.subr.mxu0 0.0
    %v2088 = vand.u32 %v2083, 4294901760
    %2089 = vmatpush1.xpose.msra.mxu0 %v2088
    %2090 = vmatprep.subr.mxu0 0.0
    %v2091 = vand.u32 %v2085, 4294901760
    %2092 = vmatpush1.xpose.msra.mxu0 %v2091
    %2093 = vmatprep.subr.mxu0 0.0
    %2094 = vmatpush1.xpose.msra.mxu0 0.0
    %2095 = vmatprep.subr.mxu0 0.0
    %2096 = vmatpush1.xpose.msra.mxu0 0.0
    %2097 = vmatprep.subr.mxu0 0.0
    %2098 = vmatpush1.xpose.msra.mxu0 0.0
    %2099 = vmatprep.subr.mxu0 0.0
    %2100 = vmatpush1.xpose.msra.mxu0 0.0
    %2101 = vmatprep.subr.mxu0 0.0
    %2102 = vmatpush1.xpose.msra.mxu0 0.0
    %2103 = vmatprep.subr.mxu0 0.0
    %2104 = vmatpush1.xpose.msra.mxu0 0.0
    %2105 = vmatprep.subr.mxu0 0.0
    %2106 = vmatpush1.xpose.msra.mxu0 0.0
    %2107 = vmatprep.subr.mxu0 0.0
    %2108 = vmatpush1.xpose.msra.mxu0 0.0
    %2109 = vmatprep.subr.mxu0 0.0
    %2110 = vmatpush1.xpose.msra.mxu0 0.0
    %2111 = vmatprep.subr.mxu0 0.0
    %2112 = vmatpush1.xpose.msra.mxu0 0.0
    %2113 = vmatprep.subr.mxu0 0.0
    %2114 = vmatpush1.xpose.msra.mxu0 0.0
    %2115 = vmatprep.subr.mxu0 0.0
    %2116 = vmatpush1.xpose.msra.mxu0 0.0
    %2117 = vmatprep.subr.mxu0 0.0
    %2118 = vmatpush1.xpose.msra.mxu0 0.0
    %2119 = vmatprep.subr.mxu0 0.0
    %2120 = vmatpush1.xpose.msra.mxu0 0.0
    %2121 = vmatprep.subr.mxu0 0.0
    %2122 = vmatpush1.xpose.msra.mxu0 0.0
    %2123 = vmatprep.subr.mxu0 0.0
    %2124 = vmatpush1.xpose.msra.mxu0 0.0
    %2125 = vmatprep.subr.mxu0 0.0
    %2126 = vmatpush1.xpose.msra.mxu0 0.0
    %2127 = vmatprep.subr.mxu0 0.0
    %2128 = vmatpush1.xpose.msra.mxu0 0.0
    %2129 = vmatprep.subr.mxu0 0.0
    %2130 = vmatpush1.xpose.msra.mxu0 0.0
    %2131 = vmatprep.subr.mxu0 0.0
    %2132 = vmatpush1.xpose.msra.mxu0 0.0
    %2133 = vmatprep.subr.mxu0 0.0
    %2134 = vmatpush1.xpose.msra.mxu0 0.0
    %2135 = vmatprep.subr.mxu0 0.0
    %2136 = vmatpush1.xpose.msra.mxu0 0.0
    %2137 = vmatprep.subr.mxu0 0.0
    %2138 = vmatpush1.xpose.msra.mxu0 0.0
    %2139 = vmatprep.subr.mxu0 0.0
    %2140 = vmatpush1.xpose.msra.mxu0 0.0
    %2141 = vmatprep.subr.mxu0 0.0
    %2142 = vmatpush1.xpose.msra.mxu0 0.0
    %2143 = vmatprep.subr.mxu0 0.0
    %2144 = vmatpush1.xpose.msra.mxu0 0.0
    %2145 = vmatprep.subr.mxu0 0.0
    %2146 = vmatpush1.xpose.msra.mxu0 0.0
    %2147 = vmatprep.subr.mxu0 0.0
    %2148 = vmatpush1.xpose.msra.mxu0 0.0
    %2149 = vmatprep.subr.mxu0 0.0
    %2150 = vmatpush1.xpose.msra.mxu0 0.0
    %2151 = vmatprep.subr.mxu0 0.0
    %2152 = vmatpush1.xpose.msra.mxu0 0.0
    %2153 = vmatprep.mubr.f32.mxu0 0.0
    %v2154 = vand.u32 %v1556, 4294901760
    %v2155 = vsub.f32 %v1556, %v2154
    %v2156 = vand.u32 %v2155, 4294901760
    %v2157 = vsub.f32 %v2155, %v2156
    %v2158 = vand.u32 %v2157, 4294901760
    %2159 = vmatmul.mubr.f32.gmra.mrb[0].mxu0 %v2158
    %v2160 = vpop.f32.mrb[0].mxu0
    %v2161 = vadd.f32 0.0, %v2160
    %v2162 = vpop.f32.mrb[0].mxu0
    %2163 = vmatprep.mubr.f32.mxu0 0.0
    %v2164 = vand.u32 %v1559, 4294901760
    %v2165 = vsub.f32 %v1559, %v2164
    %v2166 = vand.u32 %v2165, 4294901760
    %v2167 = vsub.f32 %v2165, %v2166
    %v2168 = vand.u32 %v2167, 4294901760
    %2169 = vmatmul.mubr.f32.gmra.mrb[0].mxu0 %v2168
    %v2170 = vpop.f32.mrb[0].mxu0
    %v2171 = vadd.f32 0.0, %v2170
    %v2172 = vpop.f32.mrb[0].mxu0
    %2173 = vdwg.mxu0
    %2174 = vmatprep.subr.mxu0 0.0
    %v2175 = vand.u32 %v2083, 4294901760
    %v2176 = vsub.f32 %v2083, %v2175
    %v2177 = vand.u32 %v2176, 4294901760
    %v2178 = vsub.f32 %v2176, %v2177
    %v2179 = vand.u32 %v2178, 4294901760
    %2180 = vmatpush1.xpose.msra.mxu0 %v2179
    %2181 = vmatprep.subr.mxu0 0.0
    %v2182 = vand.u32 %v2085, 4294901760
    %v2183 = vsub.f32 %v2085, %v2182
    %v2184 = vand.u32 %v2183, 4294901760
    %v2185 = vsub.f32 %v2183, %v2184
    %v2186 = vand.u32 %v2185, 4294901760
    %2187 = vmatpush1.xpose.msra.mxu0 %v2186
    %2188 = vmatprep.subr.mxu0 0.0
    %2189 = vmatpush1.xpose.msra.mxu0 0.0
    %2190 = vmatprep.subr.mxu0 0.0
    %2191 = vmatpush1.xpose.msra.mxu0 0.0
    %2192 = vmatprep.subr.mxu0 0.0
    %2193 = vmatpush1.xpose.msra.mxu0 0.0
    %2194 = vmatprep.subr.mxu0 0.0
    %2195 = vmatpush1.xpose.msra.mxu0 0.0
    %2196 = vmatprep.subr.mxu0 0.0
    %2197 = vmatpush1.xpose.msra.mxu0 0.0
    %2198 = vmatprep.subr.mxu0 0.0
    %2199 = vmatpush1.xpose.msra.mxu0 0.0
    %2200 = vmatprep.subr.mxu0 0.0
    %2201 = vmatpush1.xpose.msra.mxu0 0.0
    %2202 = vmatprep.subr.mxu0 0.0
    %2203 = vmatpush1.xpose.msra.mxu0 0.0
    %2204 = vmatprep.subr.mxu0 0.0
    %2205 = vmatpush1.xpose.msra.mxu0 0.0
    %2206 = vmatprep.subr.mxu0 0.0
    %2207 = vmatpush1.xpose.msra.mxu0 0.0
    %2208 = vmatprep.subr.mxu0 0.0
    %2209 = vmatpush1.xpose.msra.mxu0 0.0
    %2210 = vmatprep.subr.mxu0 0.0
    %2211 = vmatpush1.xpose.msra.mxu0 0.0
    %2212 = vmatprep.subr.mxu0 0.0
    %2213 = vmatpush1.xpose.msra.mxu0 0.0
    %2214 = vmatprep.subr.mxu0 0.0
    %2215 = vmatpush1.xpose.msra.mxu0 0.0
    %2216 = vmatprep.subr.mxu0 0.0
    %2217 = vmatpush1.xpose.msra.mxu0 0.0
    %2218 = vmatprep.subr.mxu0 0.0
    %2219 = vmatpush1.xpose.msra.mxu0 0.0
    %2220 = vmatprep.subr.mxu0 0.0
    %2221 = vmatpush1.xpose.msra.mxu0 0.0
    %2222 = vmatprep.subr.mxu0 0.0
    %2223 = vmatpush1.xpose.msra.mxu0 0.0
    %2224 = vmatprep.subr.mxu0 0.0
    %2225 = vmatpush1.xpose.msra.mxu0 0.0
    %2226 = vmatprep.subr.mxu0 0.0
    %2227 = vmatpush1.xpose.msra.mxu0 0.0
    %2228 = vmatprep.subr.mxu0 0.0
    %2229 = vmatpush1.xpose.msra.mxu0 0.0
    %2230 = vmatprep.subr.mxu0 0.0
    %2231 = vmatpush1.xpose.msra.mxu0 0.0
    %2232 = vmatprep.subr.mxu0 0.0
    %2233 = vmatpush1.xpose.msra.mxu0 0.0
    %2234 = vmatprep.subr.mxu0 0.0
    %2235 = vmatpush1.xpose.msra.mxu0 0.0
    %2236 = vmatprep.subr.mxu0 0.0
    %2237 = vmatpush1.xpose.msra.mxu0 0.0
    %2238 = vmatprep.subr.mxu0 0.0
    %2239 = vmatpush1.xpose.msra.mxu0 0.0
    %2240 = vmatprep.subr.mxu0 0.0
    %2241 = vmatpush1.xpose.msra.mxu0 0.0
    %2242 = vmatprep.subr.mxu0 0.0
    %2243 = vmatpush1.xpose.msra.mxu0 0.0
    %2244 = vmatprep.subr.mxu0 0.0
    %2245 = vmatpush1.xpose.msra.mxu0 0.0
    %2246 = vmatprep.subr.mxu0 0.0
    %2247 = vmatpush1.xpose.msra.mxu0 0.0
    %2248 = vmatprep.mubr.f32.mxu0 0.0
    %v2249 = vand.u32 %v1556, 4294901760
    %2250 = vmatmul.mubr.f32.gmra.mrb[0].mxu0 %v2249
    %v2251 = vpop.f32.mrb[0].mxu0
    %v2252 = vadd.f32 %v2161, %v2251
    %v2253 = vpop.f32.mrb[0].mxu0
    %2254 = vmatprep.mubr.f32.mxu0 0.0
    %v2255 = vand.u32 %v1559, 4294901760
    %2256 = vmatmul.mubr.f32.gmra.mrb[0].mxu0 %v2255
    %v2257 = vpop.f32.mrb[0].mxu0
    %v2258 = vadd.f32 %v2171, %v2257
    %v2259 = vpop.f32.mrb[0].mxu0
    %2260 = vdwg.mxu0
    %2261 = vmatprep.subr.mxu0 0.0
    %v2262 = vand.u32 %v2083, 4294901760
    %v2263 = vsub.f32 %v2083, %v2262
    %2264 = vmatpush1.xpose.msra.mxu0 %v2263
    %2265 = vmatprep.subr.mxu0 0.0
    %v2266 = vand.u32 %v2085, 4294901760
    %v2267 = vsub.f32 %v2085, %v2266
    %2268 = vmatpush1.xpose.msra.mxu0 %v2267
    %2269 = vmatprep.subr.mxu0 0.0
    %2270 = vmatpush1.xpose.msra.mxu0 0.0
    %2271 = vmatprep.subr.mxu0 0.0
    %2272 = vmatpush1.xpose.msra.mxu0 0.0
    %2273 = vmatprep.subr.mxu0 0.0
    %2274 = vmatpush1.xpose.msra.mxu0 0.0
    %2275 = vmatprep.subr.mxu0 0.0
    %2276 = vmatpush1.xpose.msra.mxu0 0.0
    %2277 = vmatprep.subr.mxu0 0.0
    %2278 = vmatpush1.xpose.msra.mxu0 0.0
    %2279 = vmatprep.subr.mxu0 0.0
    %2280 = vmatpush1.xpose.msra.mxu0 0.0
    %2281 = vmatprep.subr.mxu0 0.0
    %2282 = vmatpush1.xpose.msra.mxu0 0.0
    %2283 = vmatprep.subr.mxu0 0.0
    %2284 = vmatpush1.xpose.msra.mxu0 0.0
    %2285 = vmatprep.subr.mxu0 0.0
    %2286 = vmatpush1.xpose.msra.mxu0 0.0
    %2287 = vmatprep.subr.mxu0 0.0
    %2288 = vmatpush1.xpose.msra.mxu0 0.0
    %2289 = vmatprep.subr.mxu0 0.0
    %2290 = vmatpush1.xpose.msra.mxu0 0.0
    %2291 = vmatprep.subr.mxu0 0.0
    %2292 = vmatpush1.xpose.msra.mxu0 0.0
    %2293 = vmatprep.subr.mxu0 0.0
    %2294 = vmatpush1.xpose.msra.mxu0 0.0
    %2295 = vmatprep.subr.mxu0 0.0
    %2296 = vmatpush1.xpose.msra.mxu0 0.0
    %2297 = vmatprep.subr.mxu0 0.0
    %2298 = vmatpush1.xpose.msra.mxu0 0.0
    %2299 = vmatprep.subr.mxu0 0.0
    %2300 = vmatpush1.xpose.msra.mxu0 0.0
    %2301 = vmatprep.subr.mxu0 0.0
    %2302 = vmatpush1.xpose.msra.mxu0 0.0
    %2303 = vmatprep.subr.mxu0 0.0
    %2304 = vmatpush1.xpose.msra.mxu0 0.0
    %2305 = vmatprep.subr.mxu0 0.0
    %2306 = vmatpush1.xpose.msra.mxu0 0.0
    %2307 = vmatprep.subr.mxu0 0.0
    %2308 = vmatpush1.xpose.msra.mxu0 0.0
    %2309 = vmatprep.subr.mxu0 0.0
    %2310 = vmatpush1.xpose.msra.mxu0 0.0
    %2311 = vmatprep.subr.mxu0 0.0
    %2312 = vmatpush1.xpose.msra.mxu0 0.0
    %2313 = vmatprep.subr.mxu0 0.0
    %2314 = vmatpush1.xpose.msra.mxu0 0.0
    %2315 = vmatprep.subr.mxu0 0.0
    %2316 = vmatpush1.xpose.msra.mxu0 0.0
    %2317 = vmatprep.subr.mxu0 0.0
    %2318 = vmatpush1.xpose.msra.mxu0 0.0
    %2319 = vmatprep.subr.mxu0 0.0
    %2320 = vmatpush1.xpose.msra.mxu0 0.0
    %2321 = vmatprep.subr.mxu0 0.0
    %2322 = vmatpush1.xpose.msra.mxu0 0.0
    %2323 = vmatprep.subr.mxu0 0.0
    %2324 = vmatpush1.xpose.msra.mxu0 0.0
    %2325 = vmatprep.subr.mxu0 0.0
    %2326 = vmatpush1.xpose.msra.mxu0 0.0
    %2327 = vmatprep.subr.mxu0 0.0
    %2328 = vmatpush1.xpose.msra.mxu0 0.0
    %2329 = vmatprep.mubr.f32.mxu0 0.0
    %v2330 = vand.u32 %v1556, 4294901760
    %v2331 = vsub.f32 %v1556, %v2330
    %2332 = vmatmul.mubr.f32.gmra.mrb[0].mxu0 %v2331
    %v2333 = vpop.f32.mrb[0].mxu0
    %v2334 = vadd.f32 %v2252, %v2333
    %v2335 = vpop.f32.mrb[0].mxu0
    %2336 = vmatprep.mubr.f32.mxu0 0.0
    %v2337 = vand.u32 %v1559, 4294901760
    %v2338 = vsub.f32 %v1559, %v2337
    %2339 = vmatmul.mubr.f32.gmra.mrb[0].mxu0 %v2338
    %v2340 = vpop.f32.mrb[0].mxu0
    %v2341 = vadd.f32 %v2258, %v2340
    %v2342 = vpop.f32.mrb[0].mxu0
    %2343 = vdwg.mxu0
    %2344 = vmatprep.subr.mxu0 0.0
    %v2345 = vand.u32 %v2083, 4294901760
    %2346 = vmatpush1.xpose.msra.mxu0 %v2345
    %2347 = vmatprep.subr.mxu0 0.0
    %v2348 = vand.u32 %v2085, 4294901760
    %2349 = vmatpush1.xpose.msra.mxu0 %v2348
    %2350 = vmatprep.subr.mxu0 0.0
    %2351 = vmatpush1.xpose.msra.mxu0 0.0
    %2352 = vmatprep.subr.mxu0 0.0
    %2353 = vmatpush1.xpose.msra.mxu0 0.0
    %2354 = vmatprep.subr.mxu0 0.0
    %2355 = vmatpush1.xpose.msra.mxu0 0.0
    %2356 = vmatprep.subr.mxu0 0.0
    %2357 = vmatpush1.xpose.msra.mxu0 0.0
    %2358 = vmatprep.subr.mxu0 0.0
    %2359 = vmatpush1.xpose.msra.mxu0 0.0
    %2360 = vmatprep.subr.mxu0 0.0
    %2361 = vmatpush1.xpose.msra.mxu0 0.0
    %2362 = vmatprep.subr.mxu0 0.0
    %2363 = vmatpush1.xpose.msra.mxu0 0.0
    %2364 = vmatprep.subr.mxu0 0.0
    %2365 = vmatpush1.xpose.msra.mxu0 0.0
    %2366 = vmatprep.subr.mxu0 0.0
    %2367 = vmatpush1.xpose.msra.mxu0 0.0
    %2368 = vmatprep.subr.mxu0 0.0
    %2369 = vmatpush1.xpose.msra.mxu0 0.0
    %2370 = vmatprep.subr.mxu0 0.0
    %2371 = vmatpush1.xpose.msra.mxu0 0.0
    %2372 = vmatprep.subr.mxu0 0.0
    %2373 = vmatpush1.xpose.msra.mxu0 0.0
    %2374 = vmatprep.subr.mxu0 0.0
    %2375 = vmatpush1.xpose.msra.mxu0 0.0
    %2376 = vmatprep.subr.mxu0 0.0
    %2377 = vmatpush1.xpose.msra.mxu0 0.0
    %2378 = vmatprep.subr.mxu0 0.0
    %2379 = vmatpush1.xpose.msra.mxu0 0.0
    %2380 = vmatprep.subr.mxu0 0.0
    %2381 = vmatpush1.xpose.msra.mxu0 0.0
    %2382 = vmatprep.subr.mxu0 0.0
    %2383 = vmatpush1.xpose.msra.mxu0 0.0
    %2384 = vmatprep.subr.mxu0 0.0
    %2385 = vmatpush1.xpose.msra.mxu0 0.0
    %2386 = vmatprep.subr.mxu0 0.0
    %2387 = vmatpush1.xpose.msra.mxu0 0.0
    %2388 = vmatprep.subr.mxu0 0.0
    %2389 = vmatpush1.xpose.msra.mxu0 0.0
    %2390 = vmatprep.subr.mxu0 0.0
    %2391 = vmatpush1.xpose.msra.mxu0 0.0
    %2392 = vmatprep.subr.mxu0 0.0
    %2393 = vmatpush1.xpose.msra.mxu0 0.0
    %2394 = vmatprep.subr.mxu0 0.0
    %2395 = vmatpush1.xpose.msra.mxu0 0.0
    %2396 = vmatprep.subr.mxu0 0.0
    %2397 = vmatpush1.xpose.msra.mxu0 0.0
    %2398 = vmatprep.subr.mxu0 0.0
    %2399 = vmatpush1.xpose.msra.mxu0 0.0
    %2400 = vmatprep.subr.mxu0 0.0
    %2401 = vmatpush1.xpose.msra.mxu0 0.0
    %2402 = vmatprep.subr.mxu0 0.0
    %2403 = vmatpush1.xpose.msra.mxu0 0.0
    %2404 = vmatprep.subr.mxu0 0.0
    %2405 = vmatpush1.xpose.msra.mxu0 0.0
    %2406 = vmatprep.subr.mxu0 0.0
    %2407 = vmatpush1.xpose.msra.mxu0 0.0
    %2408 = vmatprep.subr.mxu0 0.0
    %2409 = vmatpush1.xpose.msra.mxu0 0.0
    %2410 = vmatprep.mubr.f32.mxu0 0.0
    %v2411 = vand.u32 %v1556, 4294901760
    %v2412 = vsub.f32 %v1556, %v2411
    %v2413 = vand.u32 %v2412, 4294901760
    %2414 = vmatmul.mubr.f32.gmra.mrb[0].mxu0 %v2413
    %v2415 = vpop.f32.mrb[0].mxu0
    %v2416 = vadd.f32 %v2334, %v2415
    %v2417 = vpop.f32.mrb[0].mxu0
    %2418 = vmatprep.mubr.f32.mxu0 0.0
    %v2419 = vand.u32 %v1559, 4294901760
    %v2420 = vsub.f32 %v1559, %v2419
    %v2421 = vand.u32 %v2420, 4294901760
    %2422 = vmatmul.mubr.f32.gmra.mrb[0].mxu0 %v2421
    %v2423 = vpop.f32.mrb[0].mxu0
    %v2424 = vadd.f32 %v2341, %v2423
    %v2425 = vpop.f32.mrb[0].mxu0
    %2426 = vdwg.mxu0
    %2427 = vmatprep.subr.mxu0 0.0
    %v2428 = vand.u32 %v2083, 4294901760
    %v2429 = vsub.f32 %v2083, %v2428
    %v2430 = vand.u32 %v2429, 4294901760
    %2431 = vmatpush1.xpose.msra.mxu0 %v2430
    %2432 = vmatprep.subr.mxu0 0.0
    %v2433 = vand.u32 %v2085, 4294901760
    %v2434 = vsub.f32 %v2085, %v2433
    %v2435 = vand.u32 %v2434, 4294901760
    %2436 = vmatpush1.xpose.msra.mxu0 %v2435
    %2437 = vmatprep.subr.mxu0 0.0
    %2438 = vmatpush1.xpose.msra.mxu0 0.0
    %2439 = vmatprep.subr.mxu0 0.0
    %2440 = vmatpush1.xpose.msra.mxu0 0.0
    %2441 = vmatprep.subr.mxu0 0.0
    %2442 = vmatpush1.xpose.msra.mxu0 0.0
    %2443 = vmatprep.subr.mxu0 0.0
    %2444 = vmatpush1.xpose.msra.mxu0 0.0
    %2445 = vmatprep.subr.mxu0 0.0
    %2446 = vmatpush1.xpose.msra.mxu0 0.0
    %2447 = vmatprep.subr.mxu0 0.0
    %2448 = vmatpush1.xpose.msra.mxu0 0.0
    %2449 = vmatprep.subr.mxu0 0.0
    %2450 = vmatpush1.xpose.msra.mxu0 0.0
    %2451 = vmatprep.subr.mxu0 0.0
    %2452 = vmatpush1.xpose.msra.mxu0 0.0
    %2453 = vmatprep.subr.mxu0 0.0
    %2454 = vmatpush1.xpose.msra.mxu0 0.0
    %2455 = vmatprep.subr.mxu0 0.0
    %2456 = vmatpush1.xpose.msra.mxu0 0.0
    %2457 = vmatprep.subr.mxu0 0.0
    %2458 = vmatpush1.xpose.msra.mxu0 0.0
    %2459 = vmatprep.subr.mxu0 0.0
    %2460 = vmatpush1.xpose.msra.mxu0 0.0
    %2461 = vmatprep.subr.mxu0 0.0
    %2462 = vmatpush1.xpose.msra.mxu0 0.0
    %2463 = vmatprep.subr.mxu0 0.0
    %2464 = vmatpush1.xpose.msra.mxu0 0.0
    %2465 = vmatprep.subr.mxu0 0.0
    %2466 = vmatpush1.xpose.msra.mxu0 0.0
    %2467 = vmatprep.subr.mxu0 0.0
    %2468 = vmatpush1.xpose.msra.mxu0 0.0
    %2469 = vmatprep.subr.mxu0 0.0
    %2470 = vmatpush1.xpose.msra.mxu0 0.0
    %2471 = vmatprep.subr.mxu0 0.0
    %2472 = vmatpush1.xpose.msra.mxu0 0.0
    %2473 = vmatprep.subr.mxu0 0.0
    %2474 = vmatpush1.xpose.msra.mxu0 0.0
    %2475 = vmatprep.subr.mxu0 0.0
    %2476 = vmatpush1.xpose.msra.mxu0 0.0
    %2477 = vmatprep.subr.mxu0 0.0
    %2478 = vmatpush1.xpose.msra.mxu0 0.0
    %2479 = vmatprep.subr.mxu0 0.0
    %2480 = vmatpush1.xpose.msra.mxu0 0.0
    %2481 = vmatprep.subr.mxu0 0.0
    %2482 = vmatpush1.xpose.msra.mxu0 0.0
    %2483 = vmatprep.subr.mxu0 0.0
    %2484 = vmatpush1.xpose.msra.mxu0 0.0
    %2485 = vmatprep.subr.mxu0 0.0
    %2486 = vmatpush1.xpose.msra.mxu0 0.0
    %2487 = vmatprep.subr.mxu0 0.0
    %2488 = vmatpush1.xpose.msra.mxu0 0.0
    %2489 = vmatprep.subr.mxu0 0.0
    %2490 = vmatpush1.xpose.msra.mxu0 0.0
    %2491 = vmatprep.subr.mxu0 0.0
    %2492 = vmatpush1.xpose.msra.mxu0 0.0
    %2493 = vmatprep.subr.mxu0 0.0
    %2494 = vmatpush1.xpose.msra.mxu0 0.0
    %2495 = vmatprep.subr.mxu0 0.0
    %2496 = vmatpush1.xpose.msra.mxu0 0.0
    %2497 = vmatprep.mubr.f32.mxu0 0.0
    %v2498 = vand.u32 %v1556, 4294901760
    %2499 = vmatmul.mubr.f32.gmra.mrb[0].mxu0 %v2498
    %v2500 = vpop.f32.mrb[0].mxu0
    %v2501 = vadd.f32 %v2416, %v2500
    %v2502 = vpop.f32.mrb[0].mxu0
    %2503 = vmatprep.mubr.f32.mxu0 0.0
    %v2504 = vand.u32 %v1559, 4294901760
    %2505 = vmatmul.mubr.f32.gmra.mrb[0].mxu0 %v2504
    %v2506 = vpop.f32.mrb[0].mxu0
    %v2507 = vadd.f32 %v2424, %v2506
    %v2508 = vpop.f32.mrb[0].mxu0
    %2509 = vdwg.mxu0
    %2510 = vmatprep.subr.mxu0 0.0
    %v2511 = vand.u32 %v2083, 4294901760
    %2512 = vmatpush1.xpose.msra.mxu0 %v2511
    %2513 = vmatprep.subr.mxu0 0.0
    %v2514 = vand.u32 %v2085, 4294901760
    %2515 = vmatpush1.xpose.msra.mxu0 %v2514
    %2516 = vmatprep.subr.mxu0 0.0
    %2517 = vmatpush1.xpose.msra.mxu0 0.0
    %2518 = vmatprep.subr.mxu0 0.0
    %2519 = vmatpush1.xpose.msra.mxu0 0.0
    %2520 = vmatprep.subr.mxu0 0.0
    %2521 = vmatpush1.xpose.msra.mxu0 0.0
    %2522 = vmatprep.subr.mxu0 0.0
    %2523 = vmatpush1.xpose.msra.mxu0 0.0
    %2524 = vmatprep.subr.mxu0 0.0
    %2525 = vmatpush1.xpose.msra.mxu0 0.0
    %2526 = vmatprep.subr.mxu0 0.0
    %2527 = vmatpush1.xpose.msra.mxu0 0.0
    %2528 = vmatprep.subr.mxu0 0.0
    %2529 = vmatpush1.xpose.msra.mxu0 0.0
    %2530 = vmatprep.subr.mxu0 0.0
    %2531 = vmatpush1.xpose.msra.mxu0 0.0
    %2532 = vmatprep.subr.mxu0 0.0
    %2533 = vmatpush1.xpose.msra.mxu0 0.0
    %2534 = vmatprep.subr.mxu0 0.0
    %2535 = vmatpush1.xpose.msra.mxu0 0.0
    %2536 = vmatprep.subr.mxu0 0.0
    %2537 = vmatpush1.xpose.msra.mxu0 0.0
    %2538 = vmatprep.subr.mxu0 0.0
    %2539 = vmatpush1.xpose.msra.mxu0 0.0
    %2540 = vmatprep.subr.mxu0 0.0
    %2541 = vmatpush1.xpose.msra.mxu0 0.0
    %2542 = vmatprep.subr.mxu0 0.0
    %2543 = vmatpush1.xpose.msra.mxu0 0.0
    %2544 = vmatprep.subr.mxu0 0.0
    %2545 = vmatpush1.xpose.msra.mxu0 0.0
    %2546 = vmatprep.subr.mxu0 0.0
    %2547 = vmatpush1.xpose.msra.mxu0 0.0
    %2548 = vmatprep.subr.mxu0 0.0
    %2549 = vmatpush1.xpose.msra.mxu0 0.0
    %2550 = vmatprep.subr.mxu0 0.0
    %2551 = vmatpush1.xpose.msra.mxu0 0.0
    %2552 = vmatprep.subr.mxu0 0.0
    %2553 = vmatpush1.xpose.msra.mxu0 0.0
    %2554 = vmatprep.subr.mxu0 0.0
    %2555 = vmatpush1.xpose.msra.mxu0 0.0
    %2556 = vmatprep.subr.mxu0 0.0
    %2557 = vmatpush1.xpose.msra.mxu0 0.0
    %2558 = vmatprep.subr.mxu0 0.0
    %2559 = vmatpush1.xpose.msra.mxu0 0.0
    %2560 = vmatprep.subr.mxu0 0.0
    %2561 = vmatpush1.xpose.msra.mxu0 0.0
    %2562 = vmatprep.subr.mxu0 0.0
    %2563 = vmatpush1.xpose.msra.mxu0 0.0
    %2564 = vmatprep.subr.mxu0 0.0
    %2565 = vmatpush1.xpose.msra.mxu0 0.0
    %2566 = vmatprep.subr.mxu0 0.0
    %2567 = vmatpush1.xpose.msra.mxu0 0.0
    %2568 = vmatprep.subr.mxu0 0.0
    %2569 = vmatpush1.xpose.msra.mxu0 0.0
    %2570 = vmatprep.subr.mxu0 0.0
    %2571 = vmatpush1.xpose.msra.mxu0 0.0
    %2572 = vmatprep.subr.mxu0 0.0
    %2573 = vmatpush1.xpose.msra.mxu0 0.0
    %2574 = vmatprep.subr.mxu0 0.0
    %2575 = vmatpush1.xpose.msra.mxu0 0.0
    %2576 = vmatprep.mubr.f32.mxu0 0.0
    %v2577 = vand.u32 %v1556, 4294901760
    %2578 = vmatmul.mubr.f32.gmra.mrb[0].mxu0 %v2577
    %v2579 = vpop.f32.mrb[0].mxu0
    %v2580 = vadd.f32 %v2501, %v2579
    %v2581 = vpop.f32.mrb[0].mxu0
    %2582 = vmatprep.mubr.f32.mxu0 0.0
    %v2583 = vand.u32 %v1559, 4294901760
    %2584 = vmatmul.mubr.f32.gmra.mrb[0].mxu0 %v2583
    %v2585 = vpop.f32.mrb[0].mxu0
    %v2586 = vadd.f32 %v2507, %v2585
    %v2587 = vpop.f32.mrb[0].mxu0
    %2588 = vdwg.mxu0
    %2591 = vrot.lane.b32.xlu0 %v2580, 19
    %v2592 = vpop.permute.xlu0 %2591
    %2593 = vrot.lane.b32.xlu0 %v2586, 19
    %v2594 = vpop.permute.xlu0 %2593
    %vm2597 = vcmask 285848
    %2598 = vst.msk [vmem:[%s2075 + $0x1] sm:$0xff] %vm2597, %v2592
    %2599 = vst.msk [vmem:[%s2075 + $0x9] sm:$0xff] %vm2597, %v2594
    %vm2600 = vcmask 286720
    %2601 = vst.msk [vmem:[#allocation2] sm:$0x1] %vm2600, 0.0
    %2602 = vst.msk [vmem:[#allocation2 + $0x11] sm:$0x1] %vm2600, 0.0
    %vm2603 = vcmask 7168
    %2604 = vst.msk [vmem:[#allocation2 + $0x1] sm:$0xff] %vm2603, 0.0
    %2605 = vst.msk [vmem:[#allocation2 + $0x9] sm:$0xff] %vm2603, 0.0
    %vm2606 = vcmask 294168
    %2607 = vst.msk [vmem:[#allocation2 + $0x1] sm:$0xff] %vm2606, 0.0
    %2608 = vst.msk [vmem:[#allocation2 + $0x9] sm:$0xff] %vm2606, 0.0
    %vm2609 = vcmask 154760
    %2610 = vst.msk [vmem:[#allocation2 + $0x1] sm:$0xff] %vm2609, 0.0
    %2611 = vst.msk [vmem:[#allocation2 + $0x9] sm:$0xff] %vm2609, 0.0
    %2612 = vst.msk [vmem:[%s1523] sm:$0x1] %vm2600, 0.0
    %2613 = vst.msk [vmem:[%s1523 + $0x11] sm:$0x1] %vm2600, 0.0
    %2614 = vst.msk [vmem:[%s1523 + $0x1] sm:$0xff] %vm2603, 0.0
    %2615 = vst.msk [vmem:[%s1523 + $0x9] sm:$0xff] %vm2603, 0.0
    %2616 = vst.msk [vmem:[%s1523 + $0x1] sm:$0xff] %vm2606, 0.0
    %2617 = vst.msk [vmem:[%s1523 + $0x9] sm:$0xff] %vm2606, 0.0
    %2618 = vst.msk [vmem:[%s1523 + $0x1] sm:$0xff] %vm2609, 0.0
    %2619 = vst.msk [vmem:[%s1523 + $0x9] sm:$0xff] %vm2609, 0.0
    %2620 = vst.msk [vmem:[%s1534] sm:$0x1] %vm2600, 0.0
    %2621 = vst.msk [vmem:[%s1534 + $0x11] sm:$0x1] %vm2600, 0.0
    %2622 = vst.msk [vmem:[%s1534 + $0x1] sm:$0xff] %vm2603, 0.0
    %2623 = vst.msk [vmem:[%s1534 + $0x9] sm:$0xff] %vm2603, 0.0
    %2624 = vst.msk [vmem:[%s1534 + $0x1] sm:$0xff] %vm2606, 0.0
    %2625 = vst.msk [vmem:[%s1534 + $0x9] sm:$0xff] %vm2606, 0.0
    %2626 = vst.msk [vmem:[%s1534 + $0x1] sm:$0xff] %vm2609, 0.0
    %2627 = vst.msk [vmem:[%s1534 + $0x9] sm:$0xff] %vm2609, 0.0
    %2628 = vst.msk [vmem:[%s2075] sm:$0x1] %vm2600, 0.0
    %2629 = vst.msk [vmem:[%s2075 + $0x11] sm:$0x1] %vm2600, 0.0
    %2630 = vst.msk [vmem:[%s2075 + $0x1] sm:$0xff] %vm2603, 0.0
    %2631 = vst.msk [vmem:[%s2075 + $0x9] sm:$0xff] %vm2603, 0.0
    %2632 = vst.msk [vmem:[%s2075 + $0x1] sm:$0xff] %vm2606, 0.0
    %2633 = vst.msk [vmem:[%s2075 + $0x9] sm:$0xff] %vm2606, 0.0
    %2634 = vst.msk [vmem:[%s2075 + $0x1] sm:$0xff] %vm2609, 0.0
    %2635 = vst.msk [vmem:[%s2075 + $0x9] sm:$0xff] %vm2609, 0.0
    %s2636 = sld [smem:[#allocation9]]
    %v2637 = vstv %s2636
    %v2638 = vadd.f32 %v2637, 0.0
    %s2639 = sld [smem:[#allocation9 + $0x1]]
    %v2640 = vstv %s2639
    %v2641 = vadd.f32 %v2640, 0.0
    %s2642 = sld [smem:[#allocation9 + $0x2]]
    %v2643 = vstv %s2642
    %v2644 = vadd.f32 %v2643, 0.0
    %v2645 = vld [vmem:[#allocation2] sm:$0xff]
    %v2646 = vld [vmem:[#allocation2 + $0x8] sm:$0xff]
    %v2647 = vld [vmem:[#allocation2 + $0x10] sm:$0x3]
    %s2648 = sld [smem:[#allocation8]]
    %v2649 = vstv %s2648
    %v2650 = vmul.f32 %v2649, %v2645
    %v2651 = vmul.f32 %v2649, %v2646
    %v2652 = vadd.f32 %v2638, %v2650
    %v2653 = vadd.f32 %v2638, %v2651
    %s2654 = sld [smem:[#allocation8 + $0x24]]
    %v2655 = vstv %s2654
    %v2656 = vmul.f32 %v2655, %v2645
    %v2657 = vmul.f32 %v2655, %v2646
    %v2658 = vadd.f32 %v2641, %v2656
    %v2659 = vadd.f32 %v2641, %v2657
    %s2660 = sld [smem:[#allocation8 + $0x48]]
    %v2661 = vstv %s2660
    %v2662 = vmul.f32 %v2661, %v2645
    %v2663 = vmul.f32 %v2661, %v2646
    %v2664 = vadd.f32 %v2644, %v2662
    %v2665 = vadd.f32 %v2644, %v2663
    %s2666 = sld [smem:[#allocation8 + $0x3]]
    %v2667 = vstv %s2666
    %v2668 = vmul.f32 %v2667, %v2645
    %v2669 = vmul.f32 %v2667, %v2646
    %v2670 = vmul.f32 %v2667, %v2647
    %v2674 = vrot.slane %v2668, 1
    %v2675 = vrot.slane %v2669, 1
    %v2676 = vsel %vm110, %v2674, %v2675
    %v2677 = vrot.slane %v2670, 1
    %v2678 = vsel %vm110, %v2675, %v2677
    %v2681 = vadd.f32 %v2652, %v2676
    %v2682 = vadd.f32 %v2653, %v2678
    %s2683 = sld [smem:[#allocation8 + $0x27]]
    %v2684 = vstv %s2683
    %v2685 = vmul.f32 %v2684, %v2645
    %v2686 = vmul.f32 %v2684, %v2646
    %v2687 = vmul.f32 %v2684, %v2647
    %v2691 = vrot.slane %v2685, 1
    %v2692 = vrot.slane %v2686, 1
    %v2693 = vsel %vm110, %v2691, %v2692
    %v2694 = vrot.slane %v2687, 1
    %v2695 = vsel %vm110, %v2692, %v2694
    %v2698 = vadd.f32 %v2658, %v2693
    %v2699 = vadd.f32 %v2659, %v2695
    %s2700 = sld [smem:[#allocation8 + $0x4b]]
    %v2701 = vstv %s2700
    %v2702 = vmul.f32 %v2701, %v2645
    %v2703 = vmul.f32 %v2701, %v2646
    %v2704 = vmul.f32 %v2701, %v2647
    %v2708 = vrot.slane %v2702, 1
    %v2709 = vrot.slane %v2703, 1
    %v2710 = vsel %vm110, %v2708, %v2709
    %v2711 = vrot.slane %v2704, 1
    %v2712 = vsel %vm110, %v2709, %v2711
    %v2715 = vadd.f32 %v2664, %v2710
    %v2716 = vadd.f32 %v2665, %v2712
    %s2717 = sld [smem:[#allocation8 + $0x6]]
    %v2718 = vstv %s2717
    %v2719 = vmul.f32 %v2718, %v2645
    %v2720 = vmul.f32 %v2718, %v2646
    %v2721 = vmul.f32 %v2718, %v2647
    %v2725 = vrot.slane %v2719, 2
    %v2726 = vrot.slane %v2720, 2
    %v2727 = vsel %vm162, %v2725, %v2726
    %v2728 = vrot.slane %v2721, 2
    %v2729 = vsel %vm162, %v2726, %v2728
    %v2732 = vadd.f32 %v2681, %v2727
    %v2733 = vadd.f32 %v2682, %v2729
    %s2734 = sld [smem:[#allocation8 + $0x2a]]
    %v2735 = vstv %s2734
    %v2736 = vmul.f32 %v2735, %v2645
    %v2737 = vmul.f32 %v2735, %v2646
    %v2738 = vmul.f32 %v2735, %v2647
    %v2742 = vrot.slane %v2736, 2
    %v2743 = vrot.slane %v2737, 2
    %v2744 = vsel %vm162, %v2742, %v2743
    %v2745 = vrot.slane %v2738, 2
    %v2746 = vsel %vm162, %v2743, %v2745
    %v2749 = vadd.f32 %v2698, %v2744
    %v2750 = vadd.f32 %v2699, %v2746
    %s2751 = sld [smem:[#allocation8 + $0x4e]]
    %v2752 = vstv %s2751
    %v2753 = vmul.f32 %v2752, %v2645
    %v2754 = vmul.f32 %v2752, %v2646
    %v2755 = vmul.f32 %v2752, %v2647
    %v2759 = vrot.slane %v2753, 2
    %v2760 = vrot.slane %v2754, 2
    %v2761 = vsel %vm162, %v2759, %v2760
    %v2762 = vrot.slane %v2755, 2
    %v2763 = vsel %vm162, %v2760, %v2762
    %v2766 = vadd.f32 %v2715, %v2761
    %v2767 = vadd.f32 %v2716, %v2763
    %s2768 = sld [smem:[#allocation8 + $0x1]]
    %v2769 = vstv %s2768
    %v2770 = vmul.f32 %v2769, %v2645
    %v2771 = vmul.f32 %v2769, %v2646
    %2774 = vrot.lane.b32.xlu0 %v2770, 127
    %v2775 = vpop.permute.xlu0 %2774
    %2776 = vrot.lane.b32.xlu0 %v2771, 127
    %v2777 = vpop.permute.xlu0 %2776
    %v2780 = vadd.f32 %v2732, %v2775
    %v2781 = vadd.f32 %v2733, %v2777
    %s2782 = sld [smem:[#allocation8 + $0x25]]
    %v2783 = vstv %s2782
    %v2784 = vmul.f32 %v2783, %v2645
    %v2785 = vmul.f32 %v2783, %v2646
    %2788 = vrot.lane.b32.xlu0 %v2784, 127
    %v2789 = vpop.permute.xlu0 %2788
    %2790 = vrot.lane.b32.xlu0 %v2785, 127
    %v2791 = vpop.permute.xlu0 %2790
    %v2794 = vadd.f32 %v2749, %v2789
    %v2795 = vadd.f32 %v2750, %v2791
    %s2796 = sld [smem:[#allocation8 + $0x49]]
    %v2797 = vstv %s2796
    %v2798 = vmul.f32 %v2797, %v2645
    %v2799 = vmul.f32 %v2797, %v2646
    %2802 = vrot.lane.b32.xlu0 %v2798, 127
    %v2803 = vpop.permute.xlu0 %2802
    %2804 = vrot.lane.b32.xlu0 %v2799, 127
    %v2805 = vpop.permute.xlu0 %2804
    %v2808 = vadd.f32 %v2766, %v2803
    %v2809 = vadd.f32 %v2767, %v2805
    %s2810 = sld [smem:[#allocation8 + $0x4]]
    %v2811 = vstv %s2810
    %v2812 = vmul.f32 %v2811, %v2645
    %v2813 = vmul.f32 %v2811, %v2646
    %v2814 = vmul.f32 %v2811, %v2647
    %v2818 = vrot.slane %v2812, 1
    %v2819 = vrot.slane %v2813, 1
    %v2820 = vsel %vm110, %v2818, %v2819
    %v2821 = vrot.slane %v2814, 1
    %v2822 = vsel %vm110, %v2819, %v2821
    %2823 = vrot.lane.b32.xlu0 %v2820, 127
    %v2824 = vpop.permute.xlu0 %2823
    %2825 = vrot.lane.b32.xlu0 %v2822, 127
    %v2826 = vpop.permute.xlu0 %2825
    %v2829 = vadd.f32 %v2780, %v2824
    %v2830 = vadd.f32 %v2781, %v2826
    %s2831 = sld [smem:[#allocation8 + $0x28]]
    %v2832 = vstv %s2831
    %v2833 = vmul.f32 %v2832, %v2645
    %v2834 = vmul.f32 %v2832, %v2646
    %v2835 = vmul.f32 %v2832, %v2647
    %v2839 = vrot.slane %v2833, 1
    %v2840 = vrot.slane %v2834, 1
    %v2841 = vsel %vm110, %v2839, %v2840
    %v2842 = vrot.slane %v2835, 1
    %v2843 = vsel %vm110, %v2840, %v2842
    %2844 = vrot.lane.b32.xlu0 %v2841, 127
    %v2845 = vpop.permute.xlu0 %2844
    %2846 = vrot.lane.b32.xlu0 %v2843, 127
    %v2847 = vpop.permute.xlu0 %2846
    %v2850 = vadd.f32 %v2794, %v2845
    %v2851 = vadd.f32 %v2795, %v2847
    %s2852 = sld [smem:[#allocation8 + $0x4c]]
    %v2853 = vstv %s2852
    %v2854 = vmul.f32 %v2853, %v2645
    %v2855 = vmul.f32 %v2853, %v2646
    %v2856 = vmul.f32 %v2853, %v2647
    %v2860 = vrot.slane %v2854, 1
    %v2861 = vrot.slane %v2855, 1
    %v2862 = vsel %vm110, %v2860, %v2861
    %v2863 = vrot.slane %v2856, 1
    %v2864 = vsel %vm110, %v2861, %v2863
    %2865 = vrot.lane.b32.xlu0 %v2862, 127
    %v2866 = vpop.permute.xlu0 %2865
    %2867 = vrot.lane.b32.xlu0 %v2864, 127
    %v2868 = vpop.permute.xlu0 %2867
    %v2871 = vadd.f32 %v2808, %v2866
    %v2872 = vadd.f32 %v2809, %v2868
    %s2873 = sld [smem:[#allocation8 + $0x7]]
    %v2874 = vstv %s2873
    %v2875 = vmul.f32 %v2874, %v2645
    %v2876 = vmul.f32 %v2874, %v2646
    %v2877 = vmul.f32 %v2874, %v2647
    %v2881 = vrot.slane %v2875, 2
    %v2882 = vrot.slane %v2876, 2
    %v2883 = vsel %vm162, %v2881, %v2882
    %v2884 = vrot.slane %v2877, 2
    %v2885 = vsel %vm162, %v2882, %v2884
    %2886 = vrot.lane.b32.xlu0 %v2883, 127
    %v2887 = vpop.permute.xlu0 %2886
    %2888 = vrot.lane.b32.xlu0 %v2885, 127
    %v2889 = vpop.permute.xlu0 %2888
    %v2892 = vadd.f32 %v2829, %v2887
    %v2893 = vadd.f32 %v2830, %v2889
    %s2894 = sld [smem:[#allocation8 + $0x2b]]
    %v2895 = vstv %s2894
    %v2896 = vmul.f32 %v2895, %v2645
    %v2897 = vmul.f32 %v2895, %v2646
    %v2898 = vmul.f32 %v2895, %v2647
    %v2902 = vrot.slane %v2896, 2
    %v2903 = vrot.slane %v2897, 2
    %v2904 = vsel %vm162, %v2902, %v2903
    %v2905 = vrot.slane %v2898, 2
    %v2906 = vsel %vm162, %v2903, %v2905
    %2907 = vrot.lane.b32.xlu0 %v2904, 127
    %v2908 = vpop.permute.xlu0 %2907
    %2909 = vrot.lane.b32.xlu0 %v2906, 127
    %v2910 = vpop.permute.xlu0 %2909
    %v2913 = vadd.f32 %v2850, %v2908
    %v2914 = vadd.f32 %v2851, %v2910
    %s2915 = sld [smem:[#allocation8 + $0x4f]]
    %v2916 = vstv %s2915
    %v2917 = vmul.f32 %v2916, %v2645
    %v2918 = vmul.f32 %v2916, %v2646
    %v2919 = vmul.f32 %v2916, %v2647
    %v2923 = vrot.slane %v2917, 2
    %v2924 = vrot.slane %v2918, 2
    %v2925 = vsel %vm162, %v2923, %v2924
    %v2926 = vrot.slane %v2919, 2
    %v2927 = vsel %vm162, %v2924, %v2926
    %2928 = vrot.lane.b32.xlu0 %v2925, 127
    %v2929 = vpop.permute.xlu0 %2928
    %2930 = vrot.lane.b32.xlu0 %v2927, 127
    %v2931 = vpop.permute.xlu0 %2930
    %v2934 = vadd.f32 %v2871, %v2929
    %v2935 = vadd.f32 %v2872, %v2931
    %s2936 = sld [smem:[#allocation8 + $0x2]]
    %v2937 = vstv %s2936
    %v2938 = vmul.f32 %v2937, %v2645
    %v2939 = vmul.f32 %v2937, %v2646
    %2942 = vrot.lane.b32.xlu0 %v2938, 126
    %v2943 = vpop.permute.xlu0 %2942
    %2944 = vrot.lane.b32.xlu0 %v2939, 126
    %v2945 = vpop.permute.xlu0 %2944
    %v2948 = vadd.f32 %v2892, %v2943
    %v2949 = vadd.f32 %v2893, %v2945
    %s2950 = sld [smem:[#allocation8 + $0x26]]
    %v2951 = vstv %s2950
    %v2952 = vmul.f32 %v2951, %v2645
    %v2953 = vmul.f32 %v2951, %v2646
    %2956 = vrot.lane.b32.xlu0 %v2952, 126
    %v2957 = vpop.permute.xlu0 %2956
    %2958 = vrot.lane.b32.xlu0 %v2953, 126
    %v2959 = vpop.permute.xlu0 %2958
    %v2962 = vadd.f32 %v2913, %v2957
    %v2963 = vadd.f32 %v2914, %v2959
    %s2964 = sld [smem:[#allocation8 + $0x4a]]
    %v2965 = vstv %s2964
    %v2966 = vmul.f32 %v2965, %v2645
    %v2967 = vmul.f32 %v2965, %v2646
    %2970 = vrot.lane.b32.xlu0 %v2966, 126
    %v2971 = vpop.permute.xlu0 %2970
    %2972 = vrot.lane.b32.xlu0 %v2967, 126
    %v2973 = vpop.permute.xlu0 %2972
    %v2976 = vadd.f32 %v2934, %v2971
    %v2977 = vadd.f32 %v2935, %v2973
    %s2978 = sld [smem:[#allocation8 + $0x5]]
    %v2979 = vstv %s2978
    %v2980 = vmul.f32 %v2979, %v2645
    %v2981 = vmul.f32 %v2979, %v2646
    %v2982 = vmul.f32 %v2979, %v2647
    %v2986 = vrot.slane %v2980, 1
    %v2987 = vrot.slane %v2981, 1
    %v2988 = vsel %vm110, %v2986, %v2987
    %v2989 = vrot.slane %v2982, 1
    %v2990 = vsel %vm110, %v2987, %v2989
    %2991 = vrot.lane.b32.xlu0 %v2988, 126
    %v2992 = vpop.permute.xlu0 %2991
    %2993 = vrot.lane.b32.xlu0 %v2990, 126
    %v2994 = vpop.permute.xlu0 %2993
    %v2997 = vadd.f32 %v2948, %v2992
    %v2998 = vadd.f32 %v2949, %v2994
    %s2999 = sld [smem:[#allocation8 + $0x29]]
    %v3000 = vstv %s2999
    %v3001 = vmul.f32 %v3000, %v2645
    %v3002 = vmul.f32 %v3000, %v2646
    %v3003 = vmul.f32 %v3000, %v2647
    %v3007 = vrot.slane %v3001, 1
    %v3008 = vrot.slane %v3002, 1
    %v3009 = vsel %vm110, %v3007, %v3008
    %v3010 = vrot.slane %v3003, 1
    %v3011 = vsel %vm110, %v3008, %v3010
    %3012 = vrot.lane.b32.xlu0 %v3009, 126
    %v3013 = vpop.permute.xlu0 %3012
    %3014 = vrot.lane.b32.xlu0 %v3011, 126
    %v3015 = vpop.permute.xlu0 %3014
    %v3018 = vadd.f32 %v2962, %v3013
    %v3019 = vadd.f32 %v2963, %v3015
    %s3020 = sld [smem:[#allocation8 + $0x4d]]
    %v3021 = vstv %s3020
    %v3022 = vmul.f32 %v3021, %v2645
    %v3023 = vmul.f32 %v3021, %v2646
    %v3024 = vmul.f32 %v3021, %v2647
    %v3028 = vrot.slane %v3022, 1
    %v3029 = vrot.slane %v3023, 1
    %v3030 = vsel %vm110, %v3028, %v3029
    %v3031 = vrot.slane %v3024, 1
    %v3032 = vsel %vm110, %v3029, %v3031
    %3033 = vrot.lane.b32.xlu0 %v3030, 126
    %v3034 = vpop.permute.xlu0 %3033
    %3035 = vrot.lane.b32.xlu0 %v3032, 126
    %v3036 = vpop.permute.xlu0 %3035
    %v3039 = vadd.f32 %v2976, %v3034
    %v3040 = vadd.f32 %v2977, %v3036
    %s3041 = sld [smem:[#allocation8 + $0x8]]
    %v3042 = vstv %s3041
    %v3043 = vmul.f32 %v3042, %v2645
    %v3044 = vmul.f32 %v3042, %v2646
    %v3045 = vmul.f32 %v3042, %v2647
    %v3049 = vrot.slane %v3043, 2
    %v3050 = vrot.slane %v3044, 2
    %v3051 = vsel %vm162, %v3049, %v3050
    %v3052 = vrot.slane %v3045, 2
    %v3053 = vsel %vm162, %v3050, %v3052
    %3054 = vrot.lane.b32.xlu0 %v3051, 126
    %v3055 = vpop.permute.xlu0 %3054
    %3056 = vrot.lane.b32.xlu0 %v3053, 126
    %v3057 = vpop.permute.xlu0 %3056
    %v3060 = vadd.f32 %v2997, %v3055
    %v3061 = vadd.f32 %v2998, %v3057
    %s3062 = sld [smem:[#allocation8 + $0x2c]]
    %v3063 = vstv %s3062
    %v3064 = vmul.f32 %v3063, %v2645
    %v3065 = vmul.f32 %v3063, %v2646
    %v3066 = vmul.f32 %v3063, %v2647
    %v3070 = vrot.slane %v3064, 2
    %v3071 = vrot.slane %v3065, 2
    %v3072 = vsel %vm162, %v3070, %v3071
    %v3073 = vrot.slane %v3066, 2
    %v3074 = vsel %vm162, %v3071, %v3073
    %3075 = vrot.lane.b32.xlu0 %v3072, 126
    %v3076 = vpop.permute.xlu0 %3075
    %3077 = vrot.lane.b32.xlu0 %v3074, 126
    %v3078 = vpop.permute.xlu0 %3077
    %v3081 = vadd.f32 %v3018, %v3076
    %v3082 = vadd.f32 %v3019, %v3078
    %s3083 = sld [smem:[#allocation8 + $0x50]]
    %v3084 = vstv %s3083
    %v3085 = vmul.f32 %v3084, %v2645
    %v3086 = vmul.f32 %v3084, %v2646
    %v3087 = vmul.f32 %v3084, %v2647
    %v3091 = vrot.slane %v3085, 2
    %v3092 = vrot.slane %v3086, 2
    %v3093 = vsel %vm162, %v3091, %v3092
    %v3094 = vrot.slane %v3087, 2
    %v3095 = vsel %vm162, %v3092, %v3094
    %3096 = vrot.lane.b32.xlu0 %v3093, 126
    %v3097 = vpop.permute.xlu0 %3096
    %3098 = vrot.lane.b32.xlu0 %v3095, 126
    %v3099 = vpop.permute.xlu0 %3098
    %v3102 = vadd.f32 %v3039, %v3097
    %v3103 = vadd.f32 %v3040, %v3099
    %v3104 = vld [vmem:[%s1523] sm:$0xff]
    %v3105 = vld [vmem:[%s1523 + $0x8] sm:$0xff]
    %v3106 = vld [vmem:[%s1523 + $0x10] sm:$0x3]
    %s3107 = sld [smem:[#allocation8 + $0x9]]
    %v3108 = vstv %s3107
    %v3109 = vmul.f32 %v3108, %v3104
    %v3110 = vmul.f32 %v3108, %v3105
    %v3111 = vadd.f32 %v3060, %v3109
    %v3112 = vadd.f32 %v3061, %v3110
    %s3113 = sld [smem:[#allocation8 + $0x2d]]
    %v3114 = vstv %s3113
    %v3115 = vmul.f32 %v3114, %v3104
    %v3116 = vmul.f32 %v3114, %v3105
    %v3117 = vadd.f32 %v3081, %v3115
    %v3118 = vadd.f32 %v3082, %v3116
    %s3119 = sld [smem:[#allocation8 + $0x51]]
    %v3120 = vstv %s3119
    %v3121 = vmul.f32 %v3120, %v3104
    %v3122 = vmul.f32 %v3120, %v3105
    %v3123 = vadd.f32 %v3102, %v3121
    %v3124 = vadd.f32 %v3103, %v3122
    %s3125 = sld [smem:[#allocation8 + $0xc]]
    %v3126 = vstv %s3125
    %v3127 = vmul.f32 %v3126, %v3104
    %v3128 = vmul.f32 %v3126, %v3105
    %v3129 = vmul.f32 %v3126, %v3106
    %v3133 = vrot.slane %v3127, 1
    %v3134 = vrot.slane %v3128, 1
    %v3135 = vsel %vm110, %v3133, %v3134
    %v3136 = vrot.slane %v3129, 1
    %v3137 = vsel %vm110, %v3134, %v3136
    %v3140 = vadd.f32 %v3111, %v3135
    %v3141 = vadd.f32 %v3112, %v3137
    %s3142 = sld [smem:[#allocation8 + $0x30]]
    %v3143 = vstv %s3142
    %v3144 = vmul.f32 %v3143, %v3104
    %v3145 = vmul.f32 %v3143, %v3105
    %v3146 = vmul.f32 %v3143, %v3106
    %v3150 = vrot.slane %v3144, 1
    %v3151 = vrot.slane %v3145, 1
    %v3152 = vsel %vm110, %v3150, %v3151
    %v3153 = vrot.slane %v3146, 1
    %v3154 = vsel %vm110, %v3151, %v3153
    %v3157 = vadd.f32 %v3117, %v3152
    %v3158 = vadd.f32 %v3118, %v3154
    %s3159 = sld [smem:[#allocation8 + $0x54]]
    %v3160 = vstv %s3159
    %v3161 = vmul.f32 %v3160, %v3104
    %v3162 = vmul.f32 %v3160, %v3105
    %v3163 = vmul.f32 %v3160, %v3106
    %v3167 = vrot.slane %v3161, 1
    %v3168 = vrot.slane %v3162, 1
    %v3169 = vsel %vm110, %v3167, %v3168
    %v3170 = vrot.slane %v3163, 1
    %v3171 = vsel %vm110, %v3168, %v3170
    %v3174 = vadd.f32 %v3123, %v3169
    %v3175 = vadd.f32 %v3124, %v3171
    %s3176 = sld [smem:[#allocation8 + $0xf]]
    %v3177 = vstv %s3176
    %v3178 = vmul.f32 %v3177, %v3104
    %v3179 = vmul.f32 %v3177, %v3105
    %v3180 = vmul.f32 %v3177, %v3106
    %v3184 = vrot.slane %v3178, 2
    %v3185 = vrot.slane %v3179, 2
    %v3186 = vsel %vm162, %v3184, %v3185
    %v3187 = vrot.slane %v3180, 2
    %v3188 = vsel %vm162, %v3185, %v3187
    %v3191 = vadd.f32 %v3140, %v3186
    %v3192 = vadd.f32 %v3141, %v3188
    %s3193 = sld [smem:[#allocation8 + $0x33]]
    %v3194 = vstv %s3193
    %v3195 = vmul.f32 %v3194, %v3104
    %v3196 = vmul.f32 %v3194, %v3105
    %v3197 = vmul.f32 %v3194, %v3106
    %v3201 = vrot.slane %v3195, 2
    %v3202 = vrot.slane %v3196, 2
    %v3203 = vsel %vm162, %v3201, %v3202
    %v3204 = vrot.slane %v3197, 2
    %v3205 = vsel %vm162, %v3202, %v3204
    %v3208 = vadd.f32 %v3157, %v3203
    %v3209 = vadd.f32 %v3158, %v3205
    %s3210 = sld [smem:[#allocation8 + $0x57]]
    %v3211 = vstv %s3210
    %v3212 = vmul.f32 %v3211, %v3104
    %v3213 = vmul.f32 %v3211, %v3105
    %v3214 = vmul.f32 %v3211, %v3106
    %v3218 = vrot.slane %v3212, 2
    %v3219 = vrot.slane %v3213, 2
    %v3220 = vsel %vm162, %v3218, %v3219
    %v3221 = vrot.slane %v3214, 2
    %v3222 = vsel %vm162, %v3219, %v3221
    %v3225 = vadd.f32 %v3174, %v3220
    %v3226 = vadd.f32 %v3175, %v3222
    %s3227 = sld [smem:[#allocation8 + $0xa]]
    %v3228 = vstv %s3227
    %v3229 = vmul.f32 %v3228, %v3104
    %v3230 = vmul.f32 %v3228, %v3105
    %3233 = vrot.lane.b32.xlu0 %v3229, 127
    %v3234 = vpop.permute.xlu0 %3233
    %3235 = vrot.lane.b32.xlu0 %v3230, 127
    %v3236 = vpop.permute.xlu0 %3235
    %v3239 = vadd.f32 %v3191, %v3234
    %v3240 = vadd.f32 %v3192, %v3236
    %s3241 = sld [smem:[#allocation8 + $0x2e]]
    %v3242 = vstv %s3241
    %v3243 = vmul.f32 %v3242, %v3104
    %v3244 = vmul.f32 %v3242, %v3105
    %3247 = vrot.lane.b32.xlu0 %v3243, 127
    %v3248 = vpop.permute.xlu0 %3247
    %3249 = vrot.lane.b32.xlu0 %v3244, 127
    %v3250 = vpop.permute.xlu0 %3249
    %v3253 = vadd.f32 %v3208, %v3248
    %v3254 = vadd.f32 %v3209, %v3250
    %s3255 = sld [smem:[#allocation8 + $0x52]]
    %v3256 = vstv %s3255
    %v3257 = vmul.f32 %v3256, %v3104
    %v3258 = vmul.f32 %v3256, %v3105
    %3261 = vrot.lane.b32.xlu0 %v3257, 127
    %v3262 = vpop.permute.xlu0 %3261
    %3263 = vrot.lane.b32.xlu0 %v3258, 127
    %v3264 = vpop.permute.xlu0 %3263
    %v3267 = vadd.f32 %v3225, %v3262
    %v3268 = vadd.f32 %v3226, %v3264
    %s3269 = sld [smem:[#allocation8 + $0xd]]
    %v3270 = vstv %s3269
    %v3271 = vmul.f32 %v3270, %v3104
    %v3272 = vmul.f32 %v3270, %v3105
    %v3273 = vmul.f32 %v3270, %v3106
    %v3277 = vrot.slane %v3271, 1
    %v3278 = vrot.slane %v3272, 1
    %v3279 = vsel %vm110, %v3277, %v3278
    %v3280 = vrot.slane %v3273, 1
    %v3281 = vsel %vm110, %v3278, %v3280
    %3282 = vrot.lane.b32.xlu0 %v3279, 127
    %v3283 = vpop.permute.xlu0 %3282
    %3284 = vrot.lane.b32.xlu0 %v3281, 127
    %v3285 = vpop.permute.xlu0 %3284
    %v3288 = vadd.f32 %v3239, %v3283
    %v3289 = vadd.f32 %v3240, %v3285
    %s3290 = sld [smem:[#allocation8 + $0x31]]
    %v3291 = vstv %s3290
    %v3292 = vmul.f32 %v3291, %v3104
    %v3293 = vmul.f32 %v3291, %v3105
    %v3294 = vmul.f32 %v3291, %v3106
    %v3298 = vrot.slane %v3292, 1
    %v3299 = vrot.slane %v3293, 1
    %v3300 = vsel %vm110, %v3298, %v3299
    %v3301 = vrot.slane %v3294, 1
    %v3302 = vsel %vm110, %v3299, %v3301
    %3303 = vrot.lane.b32.xlu0 %v3300, 127
    %v3304 = vpop.permute.xlu0 %3303
    %3305 = vrot.lane.b32.xlu0 %v3302, 127
    %v3306 = vpop.permute.xlu0 %3305
    %v3309 = vadd.f32 %v3253, %v3304
    %v3310 = vadd.f32 %v3254, %v3306
    %s3311 = sld [smem:[#allocation8 + $0x55]]
    %v3312 = vstv %s3311
    %v3313 = vmul.f32 %v3312, %v3104
    %v3314 = vmul.f32 %v3312, %v3105
    %v3315 = vmul.f32 %v3312, %v3106
    %v3319 = vrot.slane %v3313, 1
    %v3320 = vrot.slane %v3314, 1
    %v3321 = vsel %vm110, %v3319, %v3320
    %v3322 = vrot.slane %v3315, 1
    %v3323 = vsel %vm110, %v3320, %v3322
    %3324 = vrot.lane.b32.xlu0 %v3321, 127
    %v3325 = vpop.permute.xlu0 %3324
    %3326 = vrot.lane.b32.xlu0 %v3323, 127
    %v3327 = vpop.permute.xlu0 %3326
    %v3330 = vadd.f32 %v3267, %v3325
    %v3331 = vadd.f32 %v3268, %v3327
    %s3332 = sld [smem:[#allocation8 + $0x10]]
    %v3333 = vstv %s3332
    %v3334 = vmul.f32 %v3333, %v3104
    %v3335 = vmul.f32 %v3333, %v3105
    %v3336 = vmul.f32 %v3333, %v3106
    %v3340 = vrot.slane %v3334, 2
    %v3341 = vrot.slane %v3335, 2
    %v3342 = vsel %vm162, %v3340, %v3341
    %v3343 = vrot.slane %v3336, 2
    %v3344 = vsel %vm162, %v3341, %v3343
    %3345 = vrot.lane.b32.xlu0 %v3342, 127
    %v3346 = vpop.permute.xlu0 %3345
    %3347 = vrot.lane.b32.xlu0 %v3344, 127
    %v3348 = vpop.permute.xlu0 %3347
    %v3351 = vadd.f32 %v3288, %v3346
    %v3352 = vadd.f32 %v3289, %v3348
    %s3353 = sld [smem:[#allocation8 + $0x34]]
    %v3354 = vstv %s3353
    %v3355 = vmul.f32 %v3354, %v3104
    %v3356 = vmul.f32 %v3354, %v3105
    %v3357 = vmul.f32 %v3354, %v3106
    %v3361 = vrot.slane %v3355, 2
    %v3362 = vrot.slane %v3356, 2
    %v3363 = vsel %vm162, %v3361, %v3362
    %v3364 = vrot.slane %v3357, 2
    %v3365 = vsel %vm162, %v3362, %v3364
    %3366 = vrot.lane.b32.xlu0 %v3363, 127
    %v3367 = vpop.permute.xlu0 %3366
    %3368 = vrot.lane.b32.xlu0 %v3365, 127
    %v3369 = vpop.permute.xlu0 %3368
    %v3372 = vadd.f32 %v3309, %v3367
    %v3373 = vadd.f32 %v3310, %v3369
    %s3374 = sld [smem:[#allocation8 + $0x58]]
    %v3375 = vstv %s3374
    %v3376 = vmul.f32 %v3375, %v3104
    %v3377 = vmul.f32 %v3375, %v3105
    %v3378 = vmul.f32 %v3375, %v3106
    %v3382 = vrot.slane %v3376, 2
    %v3383 = vrot.slane %v3377, 2
    %v3384 = vsel %vm162, %v3382, %v3383
    %v3385 = vrot.slane %v3378, 2
    %v3386 = vsel %vm162, %v3383, %v3385
    %3387 = vrot.lane.b32.xlu0 %v3384, 127
    %v3388 = vpop.permute.xlu0 %3387
    %3389 = vrot.lane.b32.xlu0 %v3386, 127
    %v3390 = vpop.permute.xlu0 %3389
    %v3393 = vadd.f32 %v3330, %v3388
    %v3394 = vadd.f32 %v3331, %v3390
    %s3395 = sld [smem:[#allocation8 + $0xb]]
    %v3396 = vstv %s3395
    %v3397 = vmul.f32 %v3396, %v3104
    %v3398 = vmul.f32 %v3396, %v3105
    %3401 = vrot.lane.b32.xlu0 %v3397, 126
    %v3402 = vpop.permute.xlu0 %3401
    %3403 = vrot.lane.b32.xlu0 %v3398, 126
    %v3404 = vpop.permute.xlu0 %3403
    %v3407 = vadd.f32 %v3351, %v3402
    %v3408 = vadd.f32 %v3352, %v3404
    %s3409 = sld [smem:[#allocation8 + $0x2f]]
    %v3410 = vstv %s3409
    %v3411 = vmul.f32 %v3410, %v3104
    %v3412 = vmul.f32 %v3410, %v3105
    %3415 = vrot.lane.b32.xlu0 %v3411, 126
    %v3416 = vpop.permute.xlu0 %3415
    %3417 = vrot.lane.b32.xlu0 %v3412, 126
    %v3418 = vpop.permute.xlu0 %3417
    %v3421 = vadd.f32 %v3372, %v3416
    %v3422 = vadd.f32 %v3373, %v3418
    %s3423 = sld [smem:[#allocation8 + $0x53]]
    %v3424 = vstv %s3423
    %v3425 = vmul.f32 %v3424, %v3104
    %v3426 = vmul.f32 %v3424, %v3105
    %3429 = vrot.lane.b32.xlu0 %v3425, 126
    %v3430 = vpop.permute.xlu0 %3429
    %3431 = vrot.lane.b32.xlu0 %v3426, 126
    %v3432 = vpop.permute.xlu0 %3431
    %v3435 = vadd.f32 %v3393, %v3430
    %v3436 = vadd.f32 %v3394, %v3432
    %s3437 = sld [smem:[#allocation8 + $0xe]]
    %v3438 = vstv %s3437
    %v3439 = vmul.f32 %v3438, %v3104
    %v3440 = vmul.f32 %v3438, %v3105
    %v3441 = vmul.f32 %v3438, %v3106
    %v3445 = vrot.slane %v3439, 1
    %v3446 = vrot.slane %v3440, 1
    %v3447 = vsel %vm110, %v3445, %v3446
    %v3448 = vrot.slane %v3441, 1
    %v3449 = vsel %vm110, %v3446, %v3448
    %3450 = vrot.lane.b32.xlu0 %v3447, 126
    %v3451 = vpop.permute.xlu0 %3450
    %3452 = vrot.lane.b32.xlu0 %v3449, 126
    %v3453 = vpop.permute.xlu0 %3452
    %v3456 = vadd.f32 %v3407, %v3451
    %v3457 = vadd.f32 %v3408, %v3453
    %s3458 = sld [smem:[#allocation8 + $0x32]]
    %v3459 = vstv %s3458
    %v3460 = vmul.f32 %v3459, %v3104
    %v3461 = vmul.f32 %v3459, %v3105
    %v3462 = vmul.f32 %v3459, %v3106
    %v3466 = vrot.slane %v3460, 1
    %v3467 = vrot.slane %v3461, 1
    %v3468 = vsel %vm110, %v3466, %v3467
    %v3469 = vrot.slane %v3462, 1
    %v3470 = vsel %vm110, %v3467, %v3469
    %3471 = vrot.lane.b32.xlu0 %v3468, 126
    %v3472 = vpop.permute.xlu0 %3471
    %3473 = vrot.lane.b32.xlu0 %v3470, 126
    %v3474 = vpop.permute.xlu0 %3473
    %v3477 = vadd.f32 %v3421, %v3472
    %v3478 = vadd.f32 %v3422, %v3474
    %s3479 = sld [smem:[#allocation8 + $0x56]]
    %v3480 = vstv %s3479
    %v3481 = vmul.f32 %v3480, %v3104
    %v3482 = vmul.f32 %v3480, %v3105
    %v3483 = vmul.f32 %v3480, %v3106
    %v3487 = vrot.slane %v3481, 1
    %v3488 = vrot.slane %v3482, 1
    %v3489 = vsel %vm110, %v3487, %v3488
    %v3490 = vrot.slane %v3483, 1
    %v3491 = vsel %vm110, %v3488, %v3490
    %3492 = vrot.lane.b32.xlu0 %v3489, 126
    %v3493 = vpop.permute.xlu0 %3492
    %3494 = vrot.lane.b32.xlu0 %v3491, 126
    %v3495 = vpop.permute.xlu0 %3494
    %v3498 = vadd.f32 %v3435, %v3493
    %v3499 = vadd.f32 %v3436, %v3495
    %s3500 = sld [smem:[#allocation8 + $0x11]]
    %v3501 = vstv %s3500
    %v3502 = vmul.f32 %v3501, %v3104
    %v3503 = vmul.f32 %v3501, %v3105
    %v3504 = vmul.f32 %v3501, %v3106
    %v3508 = vrot.slane %v3502, 2
    %v3509 = vrot.slane %v3503, 2
    %v3510 = vsel %vm162, %v3508, %v3509
    %v3511 = vrot.slane %v3504, 2
    %v3512 = vsel %vm162, %v3509, %v3511
    %3513 = vrot.lane.b32.xlu0 %v3510, 126
    %v3514 = vpop.permute.xlu0 %3513
    %3515 = vrot.lane.b32.xlu0 %v3512, 126
    %v3516 = vpop.permute.xlu0 %3515
    %v3519 = vadd.f32 %v3456, %v3514
    %v3520 = vadd.f32 %v3457, %v3516
    %s3521 = sld [smem:[#allocation8 + $0x35]]
    %v3522 = vstv %s3521
    %v3523 = vmul.f32 %v3522, %v3104
    %v3524 = vmul.f32 %v3522, %v3105
    %v3525 = vmul.f32 %v3522, %v3106
    %v3529 = vrot.slane %v3523, 2
    %v3530 = vrot.slane %v3524, 2
    %v3531 = vsel %vm162, %v3529, %v3530
    %v3532 = vrot.slane %v3525, 2
    %v3533 = vsel %vm162, %v3530, %v3532
    %3534 = vrot.lane.b32.xlu0 %v3531, 126
    %v3535 = vpop.permute.xlu0 %3534
    %3536 = vrot.lane.b32.xlu0 %v3533, 126
    %v3537 = vpop.permute.xlu0 %3536
    %v3540 = vadd.f32 %v3477, %v3535
    %v3541 = vadd.f32 %v3478, %v3537
    %s3542 = sld [smem:[#allocation8 + $0x59]]
    %v3543 = vstv %s3542
    %v3544 = vmul.f32 %v3543, %v3104
    %v3545 = vmul.f32 %v3543, %v3105
    %v3546 = vmul.f32 %v3543, %v3106
    %v3550 = vrot.slane %v3544, 2
    %v3551 = vrot.slane %v3545, 2
    %v3552 = vsel %vm162, %v3550, %v3551
    %v3553 = vrot.slane %v3546, 2
    %v3554 = vsel %vm162, %v3551, %v3553
    %3555 = vrot.lane.b32.xlu0 %v3552, 126
    %v3556 = vpop.permute.xlu0 %3555
    %3557 = vrot.lane.b32.xlu0 %v3554, 126
    %v3558 = vpop.permute.xlu0 %3557
    %v3561 = vadd.f32 %v3498, %v3556
    %v3562 = vadd.f32 %v3499, %v3558
    %v3563 = vld [vmem:[%s1534] sm:$0xff]
    %v3564 = vld [vmem:[%s1534 + $0x8] sm:$0xff]
    %v3565 = vld [vmem:[%s1534 + $0x10] sm:$0x3]
    %s3566 = sld [smem:[#allocation8 + $0x12]]
    %v3567 = vstv %s3566
    %v3568 = vmul.f32 %v3567, %v3563
    %v3569 = vmul.f32 %v3567, %v3564
    %v3570 = vadd.f32 %v3519, %v3568
    %v3571 = vadd.f32 %v3520, %v3569
    %s3572 = sld [smem:[#allocation8 + $0x36]]
    %v3573 = vstv %s3572
    %v3574 = vmul.f32 %v3573, %v3563
    %v3575 = vmul.f32 %v3573, %v3564
    %v3576 = vadd.f32 %v3540, %v3574
    %v3577 = vadd.f32 %v3541, %v3575
    %s3578 = sld [smem:[#allocation8 + $0x5a]]
    %v3579 = vstv %s3578
    %v3580 = vmul.f32 %v3579, %v3563
    %v3581 = vmul.f32 %v3579, %v3564
    %v3582 = vadd.f32 %v3561, %v3580
    %v3583 = vadd.f32 %v3562, %v3581
    %s3584 = sld [smem:[#allocation8 + $0x15]]
    %v3585 = vstv %s3584
    %v3586 = vmul.f32 %v3585, %v3563
    %v3587 = vmul.f32 %v3585, %v3564
    %v3588 = vmul.f32 %v3585, %v3565
    %v3592 = vrot.slane %v3586, 1
    %v3593 = vrot.slane %v3587, 1
    %v3594 = vsel %vm110, %v3592, %v3593
    %v3595 = vrot.slane %v3588, 1
    %v3596 = vsel %vm110, %v3593, %v3595
    %v3599 = vadd.f32 %v3570, %v3594
    %v3600 = vadd.f32 %v3571, %v3596
    %s3601 = sld [smem:[#allocation8 + $0x39]]
    %v3602 = vstv %s3601
    %v3603 = vmul.f32 %v3602, %v3563
    %v3604 = vmul.f32 %v3602, %v3564
    %v3605 = vmul.f32 %v3602, %v3565
    %v3609 = vrot.slane %v3603, 1
    %v3610 = vrot.slane %v3604, 1
    %v3611 = vsel %vm110, %v3609, %v3610
    %v3612 = vrot.slane %v3605, 1
    %v3613 = vsel %vm110, %v3610, %v3612
    %v3616 = vadd.f32 %v3576, %v3611
    %v3617 = vadd.f32 %v3577, %v3613
    %s3618 = sld [smem:[#allocation8 + $0x5d]]
    %v3619 = vstv %s3618
    %v3620 = vmul.f32 %v3619, %v3563
    %v3621 = vmul.f32 %v3619, %v3564
    %v3622 = vmul.f32 %v3619, %v3565
    %v3626 = vrot.slane %v3620, 1
    %v3627 = vrot.slane %v3621, 1
    %v3628 = vsel %vm110, %v3626, %v3627
    %v3629 = vrot.slane %v3622, 1
    %v3630 = vsel %vm110, %v3627, %v3629
    %v3633 = vadd.f32 %v3582, %v3628
    %v3634 = vadd.f32 %v3583, %v3630
    %s3635 = sld [smem:[#allocation8 + $0x18]]
    %v3636 = vstv %s3635
    %v3637 = vmul.f32 %v3636, %v3563
    %v3638 = vmul.f32 %v3636, %v3564
    %v3639 = vmul.f32 %v3636, %v3565
    %v3643 = vrot.slane %v3637, 2
    %v3644 = vrot.slane %v3638, 2
    %v3645 = vsel %vm162, %v3643, %v3644
    %v3646 = vrot.slane %v3639, 2
    %v3647 = vsel %vm162, %v3644, %v3646
    %v3650 = vadd.f32 %v3599, %v3645
    %v3651 = vadd.f32 %v3600, %v3647
    %s3652 = sld [smem:[#allocation8 + $0x3c]]
    %v3653 = vstv %s3652
    %v3654 = vmul.f32 %v3653, %v3563
    %v3655 = vmul.f32 %v3653, %v3564
    %v3656 = vmul.f32 %v3653, %v3565
    %v3660 = vrot.slane %v3654, 2
    %v3661 = vrot.slane %v3655, 2
    %v3662 = vsel %vm162, %v3660, %v3661
    %v3663 = vrot.slane %v3656, 2
    %v3664 = vsel %vm162, %v3661, %v3663
    %v3667 = vadd.f32 %v3616, %v3662
    %v3668 = vadd.f32 %v3617, %v3664
    %s3669 = sld [smem:[#allocation8 + $0x60]]
    %v3670 = vstv %s3669
    %v3671 = vmul.f32 %v3670, %v3563
    %v3672 = vmul.f32 %v3670, %v3564
    %v3673 = vmul.f32 %v3670, %v3565
    %v3677 = vrot.slane %v3671, 2
    %v3678 = vrot.slane %v3672, 2
    %v3679 = vsel %vm162, %v3677, %v3678
    %v3680 = vrot.slane %v3673, 2
    %v3681 = vsel %vm162, %v3678, %v3680
    %v3684 = vadd.f32 %v3633, %v3679
    %v3685 = vadd.f32 %v3634, %v3681
    %s3686 = sld [smem:[#allocation8 + $0x13]]
    %v3687 = vstv %s3686
    %v3688 = vmul.f32 %v3687, %v3563
    %v3689 = vmul.f32 %v3687, %v3564
    %3692 = vrot.lane.b32.xlu0 %v3688, 127
    %v3693 = vpop.permute.xlu0 %3692
    %3694 = vrot.lane.b32.xlu0 %v3689, 127
    %v3695 = vpop.permute.xlu0 %3694
    %v3698 = vadd.f32 %v3650, %v3693
    %v3699 = vadd.f32 %v3651, %v3695
    %s3700 = sld [smem:[#allocation8 + $0x37]]
    %v3701 = vstv %s3700
    %v3702 = vmul.f32 %v3701, %v3563
    %v3703 = vmul.f32 %v3701, %v3564
    %3706 = vrot.lane.b32.xlu0 %v3702, 127
    %v3707 = vpop.permute.xlu0 %3706
    %3708 = vrot.lane.b32.xlu0 %v3703, 127
    %v3709 = vpop.permute.xlu0 %3708
    %v3712 = vadd.f32 %v3667, %v3707
    %v3713 = vadd.f32 %v3668, %v3709
    %s3714 = sld [smem:[#allocation8 + $0x5b]]
    %v3715 = vstv %s3714
    %v3716 = vmul.f32 %v3715, %v3563
    %v3717 = vmul.f32 %v3715, %v3564
    %3720 = vrot.lane.b32.xlu0 %v3716, 127
    %v3721 = vpop.permute.xlu0 %3720
    %3722 = vrot.lane.b32.xlu0 %v3717, 127
    %v3723 = vpop.permute.xlu0 %3722
    %v3726 = vadd.f32 %v3684, %v3721
    %v3727 = vadd.f32 %v3685, %v3723
    %s3728 = sld [smem:[#allocation8 + $0x16]]
    %v3729 = vstv %s3728
    %v3730 = vmul.f32 %v3729, %v3563
    %v3731 = vmul.f32 %v3729, %v3564
    %v3732 = vmul.f32 %v3729, %v3565
    %v3736 = vrot.slane %v3730, 1
    %v3737 = vrot.slane %v3731, 1
    %v3738 = vsel %vm110, %v3736, %v3737
    %v3739 = vrot.slane %v3732, 1
    %v3740 = vsel %vm110, %v3737, %v3739
    %3741 = vrot.lane.b32.xlu0 %v3738, 127
    %v3742 = vpop.permute.xlu0 %3741
    %3743 = vrot.lane.b32.xlu0 %v3740, 127
    %v3744 = vpop.permute.xlu0 %3743
    %v3747 = vadd.f32 %v3698, %v3742
    %v3748 = vadd.f32 %v3699, %v3744
    %s3749 = sld [smem:[#allocation8 + $0x3a]]
    %v3750 = vstv %s3749
    %v3751 = vmul.f32 %v3750, %v3563
    %v3752 = vmul.f32 %v3750, %v3564
    %v3753 = vmul.f32 %v3750, %v3565
    %v3757 = vrot.slane %v3751, 1
    %v3758 = vrot.slane %v3752, 1
    %v3759 = vsel %vm110, %v3757, %v3758
    %v3760 = vrot.slane %v3753, 1
    %v3761 = vsel %vm110, %v3758, %v3760
    %3762 = vrot.lane.b32.xlu0 %v3759, 127
    %v3763 = vpop.permute.xlu0 %3762
    %3764 = vrot.lane.b32.xlu0 %v3761, 127
    %v3765 = vpop.permute.xlu0 %3764
    %v3768 = vadd.f32 %v3712, %v3763
    %v3769 = vadd.f32 %v3713, %v3765
    %s3770 = sld [smem:[#allocation8 + $0x5e]]
    %v3771 = vstv %s3770
    %v3772 = vmul.f32 %v3771, %v3563
    %v3773 = vmul.f32 %v3771, %v3564
    %v3774 = vmul.f32 %v3771, %v3565
    %v3778 = vrot.slane %v3772, 1
    %v3779 = vrot.slane %v3773, 1
    %v3780 = vsel %vm110, %v3778, %v3779
    %v3781 = vrot.slane %v3774, 1
    %v3782 = vsel %vm110, %v3779, %v3781
    %3783 = vrot.lane.b32.xlu0 %v3780, 127
    %v3784 = vpop.permute.xlu0 %3783
    %3785 = vrot.lane.b32.xlu0 %v3782, 127
    %v3786 = vpop.permute.xlu0 %3785
    %v3789 = vadd.f32 %v3726, %v3784
    %v3790 = vadd.f32 %v3727, %v3786
    %s3791 = sld [smem:[#allocation8 + $0x19]]
    %v3792 = vstv %s3791
    %v3793 = vmul.f32 %v3792, %v3563
    %v3794 = vmul.f32 %v3792, %v3564
    %v3795 = vmul.f32 %v3792, %v3565
    %v3799 = vrot.slane %v3793, 2
    %v3800 = vrot.slane %v3794, 2
    %v3801 = vsel %vm162, %v3799, %v3800
    %v3802 = vrot.slane %v3795, 2
    %v3803 = vsel %vm162, %v3800, %v3802
    %3804 = vrot.lane.b32.xlu0 %v3801, 127
    %v3805 = vpop.permute.xlu0 %3804
    %3806 = vrot.lane.b32.xlu0 %v3803, 127
    %v3807 = vpop.permute.xlu0 %3806
    %v3810 = vadd.f32 %v3747, %v3805
    %v3811 = vadd.f32 %v3748, %v3807
    %s3812 = sld [smem:[#allocation8 + $0x3d]]
    %v3813 = vstv %s3812
    %v3814 = vmul.f32 %v3813, %v3563
    %v3815 = vmul.f32 %v3813, %v3564
    %v3816 = vmul.f32 %v3813, %v3565
    %v3820 = vrot.slane %v3814, 2
    %v3821 = vrot.slane %v3815, 2
    %v3822 = vsel %vm162, %v3820, %v3821
    %v3823 = vrot.slane %v3816, 2
    %v3824 = vsel %vm162, %v3821, %v3823
    %3825 = vrot.lane.b32.xlu0 %v3822, 127
    %v3826 = vpop.permute.xlu0 %3825
    %3827 = vrot.lane.b32.xlu0 %v3824, 127
    %v3828 = vpop.permute.xlu0 %3827
    %v3831 = vadd.f32 %v3768, %v3826
    %v3832 = vadd.f32 %v3769, %v3828
    %s3833 = sld [smem:[#allocation8 + $0x61]]
    %v3834 = vstv %s3833
    %v3835 = vmul.f32 %v3834, %v3563
    %v3836 = vmul.f32 %v3834, %v3564
    %v3837 = vmul.f32 %v3834, %v3565
    %v3841 = vrot.slane %v3835, 2
    %v3842 = vrot.slane %v3836, 2
    %v3843 = vsel %vm162, %v3841, %v3842
    %v3844 = vrot.slane %v3837, 2
    %v3845 = vsel %vm162, %v3842, %v3844
    %3846 = vrot.lane.b32.xlu0 %v3843, 127
    %v3847 = vpop.permute.xlu0 %3846
    %3848 = vrot.lane.b32.xlu0 %v3845, 127
    %v3849 = vpop.permute.xlu0 %3848
    %v3852 = vadd.f32 %v3789, %v3847
    %v3853 = vadd.f32 %v3790, %v3849
    %s3854 = sld [smem:[#allocation8 + $0x14]]
    %v3855 = vstv %s3854
    %v3856 = vmul.f32 %v3855, %v3563
    %v3857 = vmul.f32 %v3855, %v3564
    %3860 = vrot.lane.b32.xlu0 %v3856, 126
    %v3861 = vpop.permute.xlu0 %3860
    %3862 = vrot.lane.b32.xlu0 %v3857, 126
    %v3863 = vpop.permute.xlu0 %3862
    %v3866 = vadd.f32 %v3810, %v3861
    %v3867 = vadd.f32 %v3811, %v3863
    %s3868 = sld [smem:[#allocation8 + $0x38]]
    %v3869 = vstv %s3868
    %v3870 = vmul.f32 %v3869, %v3563
    %v3871 = vmul.f32 %v3869, %v3564
    %3874 = vrot.lane.b32.xlu0 %v3870, 126
    %v3875 = vpop.permute.xlu0 %3874
    %3876 = vrot.lane.b32.xlu0 %v3871, 126
    %v3877 = vpop.permute.xlu0 %3876
    %v3880 = vadd.f32 %v3831, %v3875
    %v3881 = vadd.f32 %v3832, %v3877
    %s3882 = sld [smem:[#allocation8 + $0x5c]]
    %v3883 = vstv %s3882
    %v3884 = vmul.f32 %v3883, %v3563
    %v3885 = vmul.f32 %v3883, %v3564
    %3888 = vrot.lane.b32.xlu0 %v3884, 126
    %v3889 = vpop.permute.xlu0 %3888
    %3890 = vrot.lane.b32.xlu0 %v3885, 126
    %v3891 = vpop.permute.xlu0 %3890
    %v3894 = vadd.f32 %v3852, %v3889
    %v3895 = vadd.f32 %v3853, %v3891
    %s3896 = sld [smem:[#allocation8 + $0x17]]
    %v3897 = vstv %s3896
    %v3898 = vmul.f32 %v3897, %v3563
    %v3899 = vmul.f32 %v3897, %v3564
    %v3900 = vmul.f32 %v3897, %v3565
    %v3904 = vrot.slane %v3898, 1
    %v3905 = vrot.slane %v3899, 1
    %v3906 = vsel %vm110, %v3904, %v3905
    %v3907 = vrot.slane %v3900, 1
    %v3908 = vsel %vm110, %v3905, %v3907
    %3909 = vrot.lane.b32.xlu0 %v3906, 126
    %v3910 = vpop.permute.xlu0 %3909
    %3911 = vrot.lane.b32.xlu0 %v3908, 126
    %v3912 = vpop.permute.xlu0 %3911
    %v3915 = vadd.f32 %v3866, %v3910
    %v3916 = vadd.f32 %v3867, %v3912
    %s3917 = sld [smem:[#allocation8 + $0x3b]]
    %v3918 = vstv %s3917
    %v3919 = vmul.f32 %v3918, %v3563
    %v3920 = vmul.f32 %v3918, %v3564
    %v3921 = vmul.f32 %v3918, %v3565
    %v3925 = vrot.slane %v3919, 1
    %v3926 = vrot.slane %v3920, 1
    %v3927 = vsel %vm110, %v3925, %v3926
    %v3928 = vrot.slane %v3921, 1
    %v3929 = vsel %vm110, %v3926, %v3928
    %3930 = vrot.lane.b32.xlu0 %v3927, 126
    %v3931 = vpop.permute.xlu0 %3930
    %3932 = vrot.lane.b32.xlu0 %v3929, 126
    %v3933 = vpop.permute.xlu0 %3932
    %v3936 = vadd.f32 %v3880, %v3931
    %v3937 = vadd.f32 %v3881, %v3933
    %s3938 = sld [smem:[#allocation8 + $0x5f]]
    %v3939 = vstv %s3938
    %v3940 = vmul.f32 %v3939, %v3563
    %v3941 = vmul.f32 %v3939, %v3564
    %v3942 = vmul.f32 %v3939, %v3565
    %v3946 = vrot.slane %v3940, 1
    %v3947 = vrot.slane %v3941, 1
    %v3948 = vsel %vm110, %v3946, %v3947
    %v3949 = vrot.slane %v3942, 1
    %v3950 = vsel %vm110, %v3947, %v3949
    %3951 = vrot.lane.b32.xlu0 %v3948, 126
    %v3952 = vpop.permute.xlu0 %3951
    %3953 = vrot.lane.b32.xlu0 %v3950, 126
    %v3954 = vpop.permute.xlu0 %3953
    %v3957 = vadd.f32 %v3894, %v3952
    %v3958 = vadd.f32 %v3895, %v3954
    %s3959 = sld [smem:[#allocation8 + $0x1a]]
    %v3960 = vstv %s3959
    %v3961 = vmul.f32 %v3960, %v3563
    %v3962 = vmul.f32 %v3960, %v3564
    %v3963 = vmul.f32 %v3960, %v3565
    %v3967 = vrot.slane %v3961, 2
    %v3968 = vrot.slane %v3962, 2
    %v3969 = vsel %vm162, %v3967, %v3968
    %v3970 = vrot.slane %v3963, 2
    %v3971 = vsel %vm162, %v3968, %v3970
    %3972 = vrot.lane.b32.xlu0 %v3969, 126
    %v3973 = vpop.permute.xlu0 %3972
    %3974 = vrot.lane.b32.xlu0 %v3971, 126
    %v3975 = vpop.permute.xlu0 %3974
    %v3978 = vadd.f32 %v3915, %v3973
    %v3979 = vadd.f32 %v3916, %v3975
    %s3980 = sld [smem:[#allocation8 + $0x3e]]
    %v3981 = vstv %s3980
    %v3982 = vmul.f32 %v3981, %v3563
    %v3983 = vmul.f32 %v3981, %v3564
    %v3984 = vmul.f32 %v3981, %v3565
    %v3988 = vrot.slane %v3982, 2
    %v3989 = vrot.slane %v3983, 2
    %v3990 = vsel %vm162, %v3988, %v3989
    %v3991 = vrot.slane %v3984, 2
    %v3992 = vsel %vm162, %v3989, %v3991
    %3993 = vrot.lane.b32.xlu0 %v3990, 126
    %v3994 = vpop.permute.xlu0 %3993
    %3995 = vrot.lane.b32.xlu0 %v3992, 126
    %v3996 = vpop.permute.xlu0 %3995
    %v3999 = vadd.f32 %v3936, %v3994
    %v4000 = vadd.f32 %v3937, %v3996
    %s4001 = sld [smem:[#allocation8 + $0x62]]
    %v4002 = vstv %s4001
    %v4003 = vmul.f32 %v4002, %v3563
    %v4004 = vmul.f32 %v4002, %v3564
    %v4005 = vmul.f32 %v4002, %v3565
    %v4009 = vrot.slane %v4003, 2
    %v4010 = vrot.slane %v4004, 2
    %v4011 = vsel %vm162, %v4009, %v4010
    %v4012 = vrot.slane %v4005, 2
    %v4013 = vsel %vm162, %v4010, %v4012
    %4014 = vrot.lane.b32.xlu0 %v4011, 126
    %v4015 = vpop.permute.xlu0 %4014
    %4016 = vrot.lane.b32.xlu0 %v4013, 126
    %v4017 = vpop.permute.xlu0 %4016
    %v4020 = vadd.f32 %v3957, %v4015
    %v4021 = vadd.f32 %v3958, %v4017
    %v4022 = vld [vmem:[%s2075] sm:$0xff]
    %v4023 = vld [vmem:[%s2075 + $0x8] sm:$0xff]
    %v4024 = vld [vmem:[%s2075 + $0x10] sm:$0x3]
    %s4025 = sld [smem:[#allocation8 + $0x1b]]
    %v4026 = vstv %s4025
    %v4027 = vmul.f32 %v4026, %v4022
    %v4028 = vmul.f32 %v4026, %v4023
    %v4029 = vadd.f32 %v3978, %v4027
    %v4030 = vadd.f32 %v3979, %v4028
    %s4031 = sld [smem:[#allocation8 + $0x3f]]
    %v4032 = vstv %s4031
    %v4033 = vmul.f32 %v4032, %v4022
    %v4034 = vmul.f32 %v4032, %v4023
    %v4035 = vadd.f32 %v3999, %v4033
    %v4036 = vadd.f32 %v4000, %v4034
    %s4037 = sld [smem:[#allocation8 + $0x63]]
    %v4038 = vstv %s4037
    %v4039 = vmul.f32 %v4038, %v4022
    %v4040 = vmul.f32 %v4038, %v4023
    %v4041 = vadd.f32 %v4020, %v4039
    %v4042 = vadd.f32 %v4021, %v4040
    %s4043 = sld [smem:[#allocation8 + $0x1e]]
    %v4044 = vstv %s4043
    %v4045 = vmul.f32 %v4044, %v4022
    %v4046 = vmul.f32 %v4044, %v4023
    %v4047 = vmul.f32 %v4044, %v4024
    %v4051 = vrot.slane %v4045, 1
    %v4052 = vrot.slane %v4046, 1
    %v4053 = vsel %vm110, %v4051, %v4052
    %v4054 = vrot.slane %v4047, 1
    %v4055 = vsel %vm110, %v4052, %v4054
    %v4058 = vadd.f32 %v4029, %v4053
    %v4059 = vadd.f32 %v4030, %v4055
    %s4060 = sld [smem:[#allocation8 + $0x42]]
    %v4061 = vstv %s4060
    %v4062 = vmul.f32 %v4061, %v4022
    %v4063 = vmul.f32 %v4061, %v4023
    %v4064 = vmul.f32 %v4061, %v4024
    %v4068 = vrot.slane %v4062, 1
    %v4069 = vrot.slane %v4063, 1
    %v4070 = vsel %vm110, %v4068, %v4069
    %v4071 = vrot.slane %v4064, 1
    %v4072 = vsel %vm110, %v4069, %v4071
    %v4075 = vadd.f32 %v4035, %v4070
    %v4076 = vadd.f32 %v4036, %v4072
    %s4077 = sld [smem:[#allocation8 + $0x66]]
    %v4078 = vstv %s4077
    %v4079 = vmul.f32 %v4078, %v4022
    %v4080 = vmul.f32 %v4078, %v4023
    %v4081 = vmul.f32 %v4078, %v4024
    %v4085 = vrot.slane %v4079, 1
    %v4086 = vrot.slane %v4080, 1
    %v4087 = vsel %vm110, %v4085, %v4086
    %v4088 = vrot.slane %v4081, 1
    %v4089 = vsel %vm110, %v4086, %v4088
    %v4092 = vadd.f32 %v4041, %v4087
    %v4093 = vadd.f32 %v4042, %v4089
    %s4094 = sld [smem:[#allocation8 + $0x21]]
    %v4095 = vstv %s4094
    %v4096 = vmul.f32 %v4095, %v4022
    %v4097 = vmul.f32 %v4095, %v4023
    %v4098 = vmul.f32 %v4095, %v4024
    %v4102 = vrot.slane %v4096, 2
    %v4103 = vrot.slane %v4097, 2
    %v4104 = vsel %vm162, %v4102, %v4103
    %v4105 = vrot.slane %v4098, 2
    %v4106 = vsel %vm162, %v4103, %v4105
    %v4109 = vadd.f32 %v4058, %v4104
    %v4110 = vadd.f32 %v4059, %v4106
    %s4111 = sld [smem:[#allocation8 + $0x45]]
    %v4112 = vstv %s4111
    %v4113 = vmul.f32 %v4112, %v4022
    %v4114 = vmul.f32 %v4112, %v4023
    %v4115 = vmul.f32 %v4112, %v4024
    %v4119 = vrot.slane %v4113, 2
    %v4120 = vrot.slane %v4114, 2
    %v4121 = vsel %vm162, %v4119, %v4120
    %v4122 = vrot.slane %v4115, 2
    %v4123 = vsel %vm162, %v4120, %v4122
    %v4126 = vadd.f32 %v4075, %v4121
    %v4127 = vadd.f32 %v4076, %v4123
    %s4128 = sld [smem:[#allocation8 + $0x69]]
    %v4129 = vstv %s4128
    %v4130 = vmul.f32 %v4129, %v4022
    %v4131 = vmul.f32 %v4129, %v4023
    %v4132 = vmul.f32 %v4129, %v4024
    %v4136 = vrot.slane %v4130, 2
    %v4137 = vrot.slane %v4131, 2
    %v4138 = vsel %vm162, %v4136, %v4137
    %v4139 = vrot.slane %v4132, 2
    %v4140 = vsel %vm162, %v4137, %v4139
    %v4143 = vadd.f32 %v4092, %v4138
    %v4144 = vadd.f32 %v4093, %v4140
    %s4145 = sld [smem:[#allocation8 + $0x1c]]
    %v4146 = vstv %s4145
    %v4147 = vmul.f32 %v4146, %v4022
    %v4148 = vmul.f32 %v4146, %v4023
    %4151 = vrot.lane.b32.xlu0 %v4147, 127
    %v4152 = vpop.permute.xlu0 %4151
    %4153 = vrot.lane.b32.xlu0 %v4148, 127
    %v4154 = vpop.permute.xlu0 %4153
    %v4157 = vadd.f32 %v4109, %v4152
    %v4158 = vadd.f32 %v4110, %v4154
    %s4159 = sld [smem:[#allocation8 + $0x40]]
    %v4160 = vstv %s4159
    %v4161 = vmul.f32 %v4160, %v4022
    %v4162 = vmul.f32 %v4160, %v4023
    %4165 = vrot.lane.b32.xlu0 %v4161, 127
    %v4166 = vpop.permute.xlu0 %4165
    %4167 = vrot.lane.b32.xlu0 %v4162, 127
    %v4168 = vpop.permute.xlu0 %4167
    %v4171 = vadd.f32 %v4126, %v4166
    %v4172 = vadd.f32 %v4127, %v4168
    %s4173 = sld [smem:[#allocation8 + $0x64]]
    %v4174 = vstv %s4173
    %v4175 = vmul.f32 %v4174, %v4022
    %v4176 = vmul.f32 %v4174, %v4023
    %4179 = vrot.lane.b32.xlu0 %v4175, 127
    %v4180 = vpop.permute.xlu0 %4179
    %4181 = vrot.lane.b32.xlu0 %v4176, 127
    %v4182 = vpop.permute.xlu0 %4181
    %v4185 = vadd.f32 %v4143, %v4180
    %v4186 = vadd.f32 %v4144, %v4182
    %s4187 = sld [smem:[#allocation8 + $0x1f]]
    %v4188 = vstv %s4187
    %v4189 = vmul.f32 %v4188, %v4022
    %v4190 = vmul.f32 %v4188, %v4023
    %v4191 = vmul.f32 %v4188, %v4024
    %v4195 = vrot.slane %v4189, 1
    %v4196 = vrot.slane %v4190, 1
    %v4197 = vsel %vm110, %v4195, %v4196
    %v4198 = vrot.slane %v4191, 1
    %v4199 = vsel %vm110, %v4196, %v4198
    %4200 = vrot.lane.b32.xlu0 %v4197, 127
    %v4201 = vpop.permute.xlu0 %4200
    %4202 = vrot.lane.b32.xlu0 %v4199, 127
    %v4203 = vpop.permute.xlu0 %4202
    %v4206 = vadd.f32 %v4157, %v4201
    %v4207 = vadd.f32 %v4158, %v4203
    %s4208 = sld [smem:[#allocation8 + $0x43]]
    %v4209 = vstv %s4208
    %v4210 = vmul.f32 %v4209, %v4022
    %v4211 = vmul.f32 %v4209, %v4023
    %v4212 = vmul.f32 %v4209, %v4024
    %v4216 = vrot.slane %v4210, 1
    %v4217 = vrot.slane %v4211, 1
    %v4218 = vsel %vm110, %v4216, %v4217
    %v4219 = vrot.slane %v4212, 1
    %v4220 = vsel %vm110, %v4217, %v4219
    %4221 = vrot.lane.b32.xlu0 %v4218, 127
    %v4222 = vpop.permute.xlu0 %4221
    %4223 = vrot.lane.b32.xlu0 %v4220, 127
    %v4224 = vpop.permute.xlu0 %4223
    %v4227 = vadd.f32 %v4171, %v4222
    %v4228 = vadd.f32 %v4172, %v4224
    %s4229 = sld [smem:[#allocation8 + $0x67]]
    %v4230 = vstv %s4229
    %v4231 = vmul.f32 %v4230, %v4022
    %v4232 = vmul.f32 %v4230, %v4023
    %v4233 = vmul.f32 %v4230, %v4024
    %v4237 = vrot.slane %v4231, 1
    %v4238 = vrot.slane %v4232, 1
    %v4239 = vsel %vm110, %v4237, %v4238
    %v4240 = vrot.slane %v4233, 1
    %v4241 = vsel %vm110, %v4238, %v4240
    %4242 = vrot.lane.b32.xlu0 %v4239, 127
    %v4243 = vpop.permute.xlu0 %4242
    %4244 = vrot.lane.b32.xlu0 %v4241, 127
    %v4245 = vpop.permute.xlu0 %4244
    %v4248 = vadd.f32 %v4185, %v4243
    %v4249 = vadd.f32 %v4186, %v4245
    %s4250 = sld [smem:[#allocation8 + $0x22]]
    %v4251 = vstv %s4250
    %v4252 = vmul.f32 %v4251, %v4022
    %v4253 = vmul.f32 %v4251, %v4023
    %v4254 = vmul.f32 %v4251, %v4024
    %v4258 = vrot.slane %v4252, 2
    %v4259 = vrot.slane %v4253, 2
    %v4260 = vsel %vm162, %v4258, %v4259
    %v4261 = vrot.slane %v4254, 2
    %v4262 = vsel %vm162, %v4259, %v4261
    %4263 = vrot.lane.b32.xlu0 %v4260, 127
    %v4264 = vpop.permute.xlu0 %4263
    %4265 = vrot.lane.b32.xlu0 %v4262, 127
    %v4266 = vpop.permute.xlu0 %4265
    %v4269 = vadd.f32 %v4206, %v4264
    %v4270 = vadd.f32 %v4207, %v4266
    %s4271 = sld [smem:[#allocation8 + $0x46]]
    %v4272 = vstv %s4271
    %v4273 = vmul.f32 %v4272, %v4022
    %v4274 = vmul.f32 %v4272, %v4023
    %v4275 = vmul.f32 %v4272, %v4024
    %v4279 = vrot.slane %v4273, 2
    %v4280 = vrot.slane %v4274, 2
    %v4281 = vsel %vm162, %v4279, %v4280
    %v4282 = vrot.slane %v4275, 2
    %v4283 = vsel %vm162, %v4280, %v4282
    %4284 = vrot.lane.b32.xlu0 %v4281, 127
    %v4285 = vpop.permute.xlu0 %4284
    %4286 = vrot.lane.b32.xlu0 %v4283, 127
    %v4287 = vpop.permute.xlu0 %4286
    %v4290 = vadd.f32 %v4227, %v4285
    %v4291 = vadd.f32 %v4228, %v4287
    %s4292 = sld [smem:[#allocation8 + $0x6a]]
    %v4293 = vstv %s4292
    %v4294 = vmul.f32 %v4293, %v4022
    %v4295 = vmul.f32 %v4293, %v4023
    %v4296 = vmul.f32 %v4293, %v4024
    %v4300 = vrot.slane %v4294, 2
    %v4301 = vrot.slane %v4295, 2
    %v4302 = vsel %vm162, %v4300, %v4301
    %v4303 = vrot.slane %v4296, 2
    %v4304 = vsel %vm162, %v4301, %v4303
    %4305 = vrot.lane.b32.xlu0 %v4302, 127
    %v4306 = vpop.permute.xlu0 %4305
    %4307 = vrot.lane.b32.xlu0 %v4304, 127
    %v4308 = vpop.permute.xlu0 %4307
    %v4311 = vadd.f32 %v4248, %v4306
    %v4312 = vadd.f32 %v4249, %v4308
    %s4313 = sld [smem:[#allocation8 + $0x1d]]
    %v4314 = vstv %s4313
    %v4315 = vmul.f32 %v4314, %v4022
    %v4316 = vmul.f32 %v4314, %v4023
    %4319 = vrot.lane.b32.xlu0 %v4315, 126
    %v4320 = vpop.permute.xlu0 %4319
    %4321 = vrot.lane.b32.xlu0 %v4316, 126
    %v4322 = vpop.permute.xlu0 %4321
    %v4325 = vadd.f32 %v4269, %v4320
    %v4326 = vadd.f32 %v4270, %v4322
    %s4327 = sld [smem:[#allocation8 + $0x41]]
    %v4328 = vstv %s4327
    %v4329 = vmul.f32 %v4328, %v4022
    %v4330 = vmul.f32 %v4328, %v4023
    %4333 = vrot.lane.b32.xlu0 %v4329, 126
    %v4334 = vpop.permute.xlu0 %4333
    %4335 = vrot.lane.b32.xlu0 %v4330, 126
    %v4336 = vpop.permute.xlu0 %4335
    %v4339 = vadd.f32 %v4290, %v4334
    %v4340 = vadd.f32 %v4291, %v4336
    %s4341 = sld [smem:[#allocation8 + $0x65]]
    %v4342 = vstv %s4341
    %v4343 = vmul.f32 %v4342, %v4022
    %v4344 = vmul.f32 %v4342, %v4023
    %4347 = vrot.lane.b32.xlu0 %v4343, 126
    %v4348 = vpop.permute.xlu0 %4347
    %4349 = vrot.lane.b32.xlu0 %v4344, 126
    %v4350 = vpop.permute.xlu0 %4349
    %v4353 = vadd.f32 %v4311, %v4348
    %v4354 = vadd.f32 %v4312, %v4350
    %s4355 = sld [smem:[#allocation8 + $0x20]]
    %v4356 = vstv %s4355
    %v4357 = vmul.f32 %v4356, %v4022
    %v4358 = vmul.f32 %v4356, %v4023
    %v4359 = vmul.f32 %v4356, %v4024
    %v4363 = vrot.slane %v4357, 1
    %v4364 = vrot.slane %v4358, 1
    %v4365 = vsel %vm110, %v4363, %v4364
    %v4366 = vrot.slane %v4359, 1
    %v4367 = vsel %vm110, %v4364, %v4366
    %4368 = vrot.lane.b32.xlu0 %v4365, 126
    %v4369 = vpop.permute.xlu0 %4368
    %4370 = vrot.lane.b32.xlu0 %v4367, 126
    %v4371 = vpop.permute.xlu0 %4370
    %v4374 = vadd.f32 %v4325, %v4369
    %v4375 = vadd.f32 %v4326, %v4371
    %s4376 = sld [smem:[#allocation8 + $0x44]]
    %v4377 = vstv %s4376
    %v4378 = vmul.f32 %v4377, %v4022
    %v4379 = vmul.f32 %v4377, %v4023
    %v4380 = vmul.f32 %v4377, %v4024
    %v4384 = vrot.slane %v4378, 1
    %v4385 = vrot.slane %v4379, 1
    %v4386 = vsel %vm110, %v4384, %v4385
    %v4387 = vrot.slane %v4380, 1
    %v4388 = vsel %vm110, %v4385, %v4387
    %4389 = vrot.lane.b32.xlu0 %v4386, 126
    %v4390 = vpop.permute.xlu0 %4389
    %4391 = vrot.lane.b32.xlu0 %v4388, 126
    %v4392 = vpop.permute.xlu0 %4391
    %v4395 = vadd.f32 %v4339, %v4390
    %v4396 = vadd.f32 %v4340, %v4392
    %s4397 = sld [smem:[#allocation8 + $0x68]]
    %v4398 = vstv %s4397
    %v4399 = vmul.f32 %v4398, %v4022
    %v4400 = vmul.f32 %v4398, %v4023
    %v4401 = vmul.f32 %v4398, %v4024
    %v4405 = vrot.slane %v4399, 1
    %v4406 = vrot.slane %v4400, 1
    %v4407 = vsel %vm110, %v4405, %v4406
    %v4408 = vrot.slane %v4401, 1
    %v4409 = vsel %vm110, %v4406, %v4408
    %4410 = vrot.lane.b32.xlu0 %v4407, 126
    %v4411 = vpop.permute.xlu0 %4410
    %4412 = vrot.lane.b32.xlu0 %v4409, 126
    %v4413 = vpop.permute.xlu0 %4412
    %v4416 = vadd.f32 %v4353, %v4411
    %v4417 = vadd.f32 %v4354, %v4413
    %s4418 = sld [smem:[#allocation8 + $0x23]]
    %v4419 = vstv %s4418
    %v4420 = vmul.f32 %v4419, %v4022
    %v4421 = vmul.f32 %v4419, %v4023
    %v4422 = vmul.f32 %v4419, %v4024
    %v4426 = vrot.slane %v4420, 2
    %v4427 = vrot.slane %v4421, 2
    %v4428 = vsel %vm162, %v4426, %v4427
    %v4429 = vrot.slane %v4422, 2
    %v4430 = vsel %vm162, %v4427, %v4429
    %4431 = vrot.lane.b32.xlu0 %v4428, 126
    %v4432 = vpop.permute.xlu0 %4431
    %4433 = vrot.lane.b32.xlu0 %v4430, 126
    %v4434 = vpop.permute.xlu0 %4433
    %v4437 = vadd.f32 %v4374, %v4432
    %v4438 = vadd.f32 %v4375, %v4434
    %s4439 = sld [smem:[#allocation8 + $0x47]]
    %v4440 = vstv %s4439
    %v4441 = vmul.f32 %v4440, %v4022
    %v4442 = vmul.f32 %v4440, %v4023
    %v4443 = vmul.f32 %v4440, %v4024
    %v4447 = vrot.slane %v4441, 2
    %v4448 = vrot.slane %v4442, 2
    %v4449 = vsel %vm162, %v4447, %v4448
    %v4450 = vrot.slane %v4443, 2
    %v4451 = vsel %vm162, %v4448, %v4450
    %4452 = vrot.lane.b32.xlu0 %v4449, 126
    %v4453 = vpop.permute.xlu0 %4452
    %4454 = vrot.lane.b32.xlu0 %v4451, 126
    %v4455 = vpop.permute.xlu0 %4454
    %v4458 = vadd.f32 %v4395, %v4453
    %v4459 = vadd.f32 %v4396, %v4455
    %s4460 = sld [smem:[#allocation8 + $0x6b]]
    %v4461 = vstv %s4460
    %v4462 = vmul.f32 %v4461, %v4022
    %v4463 = vmul.f32 %v4461, %v4023
    %v4464 = vmul.f32 %v4461, %v4024
    %v4468 = vrot.slane %v4462, 2
    %v4469 = vrot.slane %v4463, 2
    %v4470 = vsel %vm162, %v4468, %v4469
    %v4471 = vrot.slane %v4464, 2
    %v4472 = vsel %vm162, %v4469, %v4471
    %4473 = vrot.lane.b32.xlu0 %v4470, 126
    %v4474 = vpop.permute.xlu0 %4473
    %4475 = vrot.lane.b32.xlu0 %v4472, 126
    %v4476 = vpop.permute.xlu0 %4475
    %v4479 = vadd.f32 %v4416, %v4474
    %v4480 = vadd.f32 %v4417, %v4476
    %v4481 = vtanh.pop %v4437
    %v4482 = vtanh.pop %v4438
    %4483 = vst.msk [vmem:[%s6] sm:$0xff] %vm1554, %v4481
    %4484 = vst.msk [vmem:[%s6 + $0x8] sm:$0xff] %vm1554, %v4482
    %4487 = vrot.lane.b32.xlu0 %v4481, 126
    %v4488 = vpop.permute.xlu0 %4487
    %4489 = vrot.lane.b32.xlu0 %v4482, 126
    %v4490 = vpop.permute.xlu0 %4489
    %vm4493 = vcmask 261248
    %4494 = vst.msk [vmem:[%s6] sm:$0xff] %vm4493, %v4488
    %4495 = vst.msk [vmem:[%s6 + $0x8] sm:$0xff] %vm4493, %v4490
    %v4496 = vtanh.pop %v4458
    %v4497 = vtanh.pop %v4459
    %s4498 = scalar_lea.vmem %s6, 16
    %4499 = vst.msk [vmem:[%s4498] sm:$0xff] %vm1554, %v4496
    %4500 = vst.msk [vmem:[%s4498 + $0x8] sm:$0xff] %vm1554, %v4497
    %4503 = vrot.lane.b32.xlu0 %v4496, 126
    %v4504 = vpop.permute.xlu0 %4503
    %4505 = vrot.lane.b32.xlu0 %v4497, 126
    %v4506 = vpop.permute.xlu0 %4505
    %4509 = vst.msk [vmem:[%s4498] sm:$0xff] %vm4493, %v4504
    %4510 = vst.msk [vmem:[%s4498 + $0x8] sm:$0xff] %vm4493, %v4506
    %v4511 = vtanh.pop %v4479
    %v4512 = vtanh.pop %v4480
    %s4513 = scalar_lea.vmem %s6, 32
    %4514 = vst.msk [vmem:[%s4513] sm:$0xff] %vm1554, %v4511
    %4515 = vst.msk [vmem:[%s4513 + $0x8] sm:$0xff] %vm1554, %v4512
    %4518 = vrot.lane.b32.xlu0 %v4511, 126
    %v4519 = vpop.permute.xlu0 %4518
    %4520 = vrot.lane.b32.xlu0 %v4512, 126
    %v4521 = vpop.permute.xlu0 %4520
    %4524 = vst.msk [vmem:[%s4513] sm:$0xff] %vm4493, %v4519
    %4525 = vst.msk [vmem:[%s4513 + $0x8] sm:$0xff] %vm4493, %v4521
    // Predicated region
    $region42: #{combined_model_forward.1} parent=1 // pred_check
      _
    $region43: #{combined_model_forward.1} parent=1 // pred_check_branch
      %4527 = sbr.rel (0) target = $region45
    $region44: #{combined_model_forward.1} parent=1 // pred_region
      _
    $region45: #{combined_model_forward.1} parent=1 // pred_fallthru
      _
    // Predicated region
    $region46: #{combined_model_forward.1} parent=1 // pred_check
      _
    $region47: #{combined_model_forward.1} parent=1 // pred_check_branch
      %4529 = sbr.rel (0) target = $region49
    $region48: #{combined_model_forward.1} parent=1 // pred_region
      _
    $region49: #{combined_model_forward.1} parent=1 // pred_fallthru
      _
    %4530 = vsyncpa [#allocation5], 1
    %4531 = vsyncpa [#allocation7], 1
    %4532 = vsyncpa [#allocation10], 1

</llo_original>
